<compile_context>
chip_gen: v6e
topology: v6e:2x2x1
jax: 0.10.0
libtpu: 0.0.40
codegen_flags: <defaults>
</compile_context>

<pallas_src>
import functools

import jax
import jax.numpy as jnp
from jax.experimental import pallas as pl
from jax.experimental.pallas import tpu as pltpu

NEURON = (25, 50, 100)
AXIS_NEURON = 4
FPAD = 128          # lane-padded feature width (per-type block stride, output lanes)


# ----------------------------------------------------------------------------
# Glue: local environment (pairwise differences, off-diagonal masking)
# ----------------------------------------------------------------------------
def _offdiag_cols(C):
    return jnp.stack(
        [jnp.concatenate([jnp.arange(i), jnp.arange(i + 1, C)]) for i in range(C)]
    )  # (C, C-1) int32


def local_environment(coords):
    # NOTE: dij includes the zero diagonal before masking; fine for forward.
    B, C, _ = coords.shape
    rij = coords[:, :, None, :] - coords[:, None, :, :]          # (B, C, C, 3)
    dij = jnp.sqrt(jnp.sum(rij * rij, axis=3))                   # (B, C, C)
    cols = _offdiag_cols(C)                                      # (C, C-1)
    rows = jnp.broadcast_to(jnp.arange(C)[:, None], (C, C - 1))
    rij_m = rij[:, rows, cols]                                   # (B, C, C-1, 3)
    dij_m = dij[:, rows, cols]                                   # (B, C, C-1)
    dij_inv = 1.0 / dij_m
    loc_env_r = dij_inv
    loc_env_a = rij_m * (dij_inv * dij_inv)[..., None]
    return loc_env_r, loc_env_a


# ----------------------------------------------------------------------------
# Pallas kernel: embedding MLP + axis contraction for Bt batch elements
# ----------------------------------------------------------------------------
def _feature_kernel(ra_ref, oh_ref, wbm_ref, w2s_ref, w3s_ref, out_ref,
                    *, n_atoms, Kp, T2):
    f32 = jnp.float32
    F1, F2, F3 = NEURON

    ra = ra_ref[...]                                   # (rows, 4): [1/r, ax, ay, az]
    oh = oh_ref[...]                                   # (rows, T2) one-hot pair type
    r = ra[:, 0:1]                                     # (rows, 1)

    # ---- per-row layer-1 weight and all biases via ONE one-hot matmul ------
    # wbm lanes: [0:F1)=w1 | [FPAD:FPAD+F1)=b1 | [2F:2F+F2)=b2 | [3F:3F+F3)=b3
    wb = jnp.dot(oh, wbm_ref[...], preferred_element_type=f32)    # (rows, 4*FPAD)
    w1 = wb[:, 0:F1]
    b1 = wb[:, FPAD:FPAD + F1]
    b2 = wb[:, 2 * FPAD:2 * FPAD + F2]
    b3 = wb[:, 3 * FPAD:3 * FPAD + F3]

    # ---- layer 1 (in_features == 1 -> elementwise), tanh -------------------
    h1 = jnp.tanh(r * w1 + b1)                                    # (rows, F1)

    # ---- layer 2: N-stacked matmul over all T2 types + one-hot select ------
    z2 = jnp.dot(h1, w2s_ref[...], preferred_element_type=f32)    # (rows, T2*FPAD)
    z2s = oh[:, 0:1] * z2[:, 0:F2]                    # blocks start 128-aligned
    for t in range(1, T2):
        z2s = z2s + oh[:, t:t + 1] * z2[:, t * FPAD:t * FPAD + F2]
    h2 = jnp.tanh(z2s + b2) + jnp.concatenate([h1, h1], axis=1)   # (rows, F2)

    # ---- layer 3 ------------------------------------------------------------
    z3 = jnp.dot(h2, w3s_ref[...], preferred_element_type=f32)    # (rows, T2*FPAD)
    z3s = oh[:, 0:1] * z3[:, 0:F3]
    for t in range(1, T2):
        z3s = z3s + oh[:, t:t + 1] * z3[:, t * FPAD:t * FPAD + F3]
    h3 = jnp.tanh(z3s + b3) + jnp.concatenate([h2, h2], axis=1)   # (rows, F3)

    # pad features to a full 128-lane slab so the output stores are unmasked
    h3p = jnp.concatenate(
        [h3, jnp.zeros((h3.shape[0], FPAD - F3), f32)], axis=1)   # (rows, FPAD)

    # ---- final per-atom contraction  G^T (R (R^T G[:, :4])) -----------------
    # P_d[n, f] = sum_k R[n, k, d] * G[n, k, f]  (padded k rows have R = 0).
    P = []
    for d in range(3):
        wd = ra[:, d + 1:d + 2] * h3p                              # (rows, FPAD)
        P.append(jnp.sum(wd.reshape(n_atoms, Kp, FPAD), axis=1))   # (n_atoms, FPAD)
    # out^T[n, p, f] = sum_d P_d[n, p] * P_d[n, f]; the 12 scalar-column
    # broadcasts below are each computed exactly once and are tiny vs. the
    # matmuls above.
    for p in range(AXIS_NEURON):
        acc = P[0][:, p:p + 1] * P[0]
        for d in range(1, 3):
            acc = acc + P[d][:, p:p + 1] * P[d]
        out_ref[p] = acc                                           # (n_atoms, FPAD)


# ----------------------------------------------------------------------------
# Wrapper
# ----------------------------------------------------------------------------
def feature_forward(coords, atom_types, params, n_types, Bt=None):
    B, C, _ = coords.shape
    K = C - 1
    Kp = 8 * pl.cdiv(K, 8)              # pad neighbor dim to sublane multiple
    T2 = n_types * n_types
    Mpad = C * Kp
    F1, F2, F3 = NEURON

    # ---- glue: local environment, neighbor padding, merged (r, a) input ----
    loc_env_r, loc_env_a = local_environment(coords)         # (B,C,K), (B,C,K,3)
    pad = Kp - K
    r_p = jnp.pad(loc_env_r, ((0, 0), (0, 0), (0, pad)))
    a_p = jnp.pad(loc_env_a, ((0, 0), (0, 0), (0, pad), (0, 0)))
    ra = jnp.concatenate([r_p[..., None], a_p], axis=-1)      # (B, C, Kp, 4)
    ra = ra.reshape(B * Mpad, 4).astype(jnp.float32)

    # ---- per-pair type one-hot (identical pattern for every batch element) -
    cols = _offdiag_cols(C)
    neighbor_types = atom_types[cols]                          # (C, K)
    idx = (atom_types * n_types)[:, None] + neighbor_types     # (C, K)
    idx_p = jnp.pad(idx, ((0, 0), (0, pad))).reshape(-1)       # (Mpad,) pad rows -> 0
    oh = jax.nn.one_hot(idx_p, T2, dtype=jnp.float32)          # (Mpad, T2)

    # ---- grid / row-block heuristic: >=4 steps (2 per TC on dual-core) and
    #      rows per step capped ~1024 (safe for v5e's 16 MiB scoped VMEM). ----
    if Bt is None:
        min_grid = 4 if B >= 4 else max(1, B)
        cap = max(1, 1024 // Mpad)
        Bt = max(1, min(B // min_grid, cap))
        while B % Bt:
            Bt -= 1
    assert B % Bt == 0
    grid = B // Bt
    rows = Bt * Mpad
    n_atoms = Bt * C

    oh_t = jnp.tile(oh, (Bt, 1))                               # (rows, T2) grid-constant

    # ---- constants: layer-1 weight + all biases packed into one row matrix -
    wbm = jnp.zeros((T2, 4 * FPAD), jnp.float32)
    wbm = wbm.at[:, 0:F1].set(params["w1"][:, :, 0])
    wbm = wbm.at[:, FPAD:FPAD + F1].set(params["b1"])
    wbm = wbm.at[:, 2 * FPAD:2 * FPAD + F2].set(params["b2"])
    wbm = wbm.at[:, 3 * FPAD:3 * FPAD + F3].set(params["b3"])

    # N-stacked, zero-padded weights: block t occupies lanes [t*FPAD, t*FPAD+out)
    def stack_n(w):                       # (T2, out, in) -> (in, T2*FPAD)
        T2_, fout, fin = w.shape
        wt = jnp.transpose(w, (2, 0, 1))                       # (in, T2, out)
        wt = jnp.pad(wt, ((0, 0), (0, 0), (0, FPAD - fout)))   # (in, T2, FPAD)
        return wt.reshape(fin, T2_ * FPAD)

    w2s = stack_n(params["w2"])            # (25, T2*128)
    w3s = stack_n(params["w3"])            # (50, T2*128)

    def const_spec(shape):
        # Grid-constant operand: same block every step; single-buffer if the
        # installed JAX supports pipeline_mode (saves VMEM, no DMA anyway).
        try:
            return pl.BlockSpec(shape, lambda b: (0, 0),
                                pipeline_mode=pl.Buffered(1))
        except Exception:
            return pl.BlockSpec(shape, lambda b: (0, 0))

    kernel = functools.partial(_feature_kernel, n_atoms=n_atoms, Kp=Kp, T2=T2)

    out = pl.pallas_call(
        kernel,
        out_shape=jax.ShapeDtypeStruct((AXIS_NEURON, B * C, FPAD), jnp.float32),
        grid_spec=pltpu.PrefetchScalarGridSpec(
            num_scalar_prefetch=0,
            grid=(grid,),
            in_specs=[
                pl.BlockSpec((rows, 4), lambda b: (b, 0)),      # streamed per step
                const_spec((rows, T2)),                         # one-hot (constant)
                const_spec((T2, 4 * FPAD)),                     # w1|b1|b2|b3
                const_spec((F1, T2 * FPAD)),                    # W2 stacked-N
                const_spec((F2, T2 * FPAD)),                    # W3 stacked-N
            ],
            out_specs=pl.BlockSpec((AXIS_NEURON, n_atoms, FPAD),
                                   lambda b: (0, b, 0)),
        ),
        compiler_params=pltpu.CompilerParams(dimension_semantics=("parallel",)),
    )(ra, oh_t, wbm, w2s, w3s)

    # (4, B*C, 128) -> (B*C, 100, 4) -> (B, C, 400); matches reference ordering
    out = jnp.transpose(out, (1, 2, 0))[:, :F3, :]
    return out.reshape(B, C, F3 * AXIS_NEURON)


# ----------------------------------------------------------------------------
# Deterministic parameter init (mirrors torch kaiming_uniform(a=sqrt(5)))
# ----------------------------------------------------------------------------
def init_params(key, n_types, neuron=NEURON):
    T2 = n_types * n_types
    sizes = [(1, neuron[0]), (neuron[0], neuron[1]), (neuron[1], neuron[2])]
    params = {}
    for li, (fin, fout) in enumerate(sizes, start=1):
        key, kw, kb = jax.random.split(key, 3)
        bound = 1.0 / (fin ** 0.5)
        params[f"w{li}"] = jax.random.uniform(kw, (T2, fout, fin), jnp.float32,
                                              -bound, bound)
        params[f"b{li}"] = jax.random.uniform(kb, (T2, fout), jnp.float32,
                                              -bound, bound)
    return params


# ----------------------------------------------------------------------------
# Pure-JAX reference (mirrors the PyTorch module semantics)
# ----------------------------------------------------------------------------
def reference_forward(coords, atom_types, params, n_types):
    B, C, _ = coords.shape
    M = C * (C - 1)
    loc_env_r, loc_env_a = local_environment(coords)
    cols = _offdiag_cols(C)
    neighbor_types = atom_types[cols]
    indices = ((atom_types * n_types)[:, None] + neighbor_types).reshape(-1)

    h = loc_env_r.reshape(B, M, 1)
    for wname, bname, residual in (("w1", "b1", False),
                                   ("w2", "b2", True),
                                   ("w3", "b3", True)):
        W = params[wname][indices]                           # (M, out, in)
        bb = params[bname][indices]                          # (M, out)
        out = jnp.einsum("bmi,moi->bmo", h, W, precision="highest") + bb
        out = jnp.tanh(out)
        if residual:
            out = out + jnp.concatenate([h, h], axis=2)
        h = out
    G = h.reshape(B, C, C - 1, NEURON[2])
    R = loc_env_a
    inner = jnp.einsum("bckd,bckp->bcdp", R, G[..., :AXIS_NEURON],
                       precision="highest")
    mid = jnp.einsum("bckd,bcdp->bckp", R, inner, precision="highest")
    out = jnp.einsum("bckf,bckp->bcfp", G, mid, precision="highest")
    return out.reshape(B, C, -1)


# ----------------------------------------------------------------------------
if __name__ == "__main__":
    key = jax.random.PRNGKey(0)
    n_types = 2
    B, C = 8, 8

    k1, k2 = jax.random.split(key)
    # atoms near cube corners (well-separated) + small noise -> well-conditioned 1/r
    base = jnp.array([[x, y, z] for x in (0.0, 1.5) for y in (0.0, 1.5)
                      for z in (0.0, 1.5)], dtype=jnp.float32)           # (8, 3)
    coords = base[None, :, :] + 0.1 * jax.random.normal(k1, (B, C, 3), jnp.float32)
    atom_types = jnp.array([0, 1, 0, 1, 0, 1, 0, 1], dtype=jnp.int32)

    params = init_params(k2, n_types)

    out = feature_forward(coords, atom_types, params, n_types)
    out = jax.block_until_ready(out)

    ref = reference_forward(coords, atom_types, params, n_types)
    assert out.shape == (B, C, NEURON[2] * AXIS_NEURON)
    assert jnp.allclose(out, ref, rtol=1e-2, atol=1e-2), float(
        jnp.max(jnp.abs(out - ref)))

    print("KERNEL_OK")
</pallas_src>

<mosaic_0001>
module attributes {stable_mosaic.version = 11 : i64} {
  func.func @_feature_kernel(%arg0: i32, %arg1: memref<128x4xf32, #tpu.memory_space<vmem>>, %arg2: memref<128x4xf32, #tpu.memory_space<vmem>>, %arg3: memref<4x512xf32, #tpu.memory_space<vmem>>, %arg4: memref<25x512xf32, #tpu.memory_space<vmem>>, %arg5: memref<50x512xf32, #tpu.memory_space<vmem>>, %arg6: memref<4x16x128xf32, #tpu.memory_space<vmem>>) attributes {dimension_semantics = [#tpu.dimension_semantics<parallel>], iteration_bounds = array<i64: 4>, scalar_prefetch = 0 : i64, scratch_operands = 0 : i64, tpu.core_type = #tpu.core_type<tc>, window_params = [{transform_indices = @transform_0, window_bounds = array<i64: 128, 4>}, {pipeline_mode = #tpu.pipeline_mode<synchronous>, transform_indices = @transform_1, window_bounds = array<i64: 128, 4>}, {pipeline_mode = #tpu.pipeline_mode<synchronous>, transform_indices = @transform_2, window_bounds = array<i64: 4, 512>}, {pipeline_mode = #tpu.pipeline_mode<synchronous>, transform_indices = @transform_3, window_bounds = array<i64: 25, 512>}, {pipeline_mode = #tpu.pipeline_mode<synchronous>, transform_indices = @transform_4, window_bounds = array<i64: 50, 512>}, {transform_indices = @transform_5, window_bounds = array<i64: 4, 16, 128>}]} {
    %c0 = arith.constant 0 : index
    %c0_0 = arith.constant 0 : index
    %0 = vector.load %arg1[%c0, %c0_0] : memref<128x4xf32, #tpu.memory_space<vmem>>, vector<128x4xf32>
    %c0_1 = arith.constant 0 : index
    %c0_2 = arith.constant 0 : index
    %1 = vector.load %arg2[%c0_1, %c0_2] : memref<128x4xf32, #tpu.memory_space<vmem>>, vector<128x4xf32>
    %2 = vector.extract_strided_slice %0 {offsets = [0, 0], sizes = [128, 1], strides = [1, 1]} : vector<128x4xf32> to vector<128x1xf32>
    %c0_3 = arith.constant 0 : index
    %c0_4 = arith.constant 0 : index
    %3 = vector.load %arg3[%c0_3, %c0_4] : memref<4x512xf32, #tpu.memory_space<vmem>>, vector<4x512xf32>
    %cst = arith.constant dense<0.000000e+00> : vector<128x512xf32>
    %4 = tpu.matmul %1, %3, %cst {dimension_numbers = #tpu.dot_dimension_numbers<[1], [0], [0], [1], [0, 0, 1, 1], [], []>} : vector<128x4xf32>, vector<4x512xf32>, vector<128x512xf32> -> vector<128x512xf32>
    %5 = vector.extract_strided_slice %4 {offsets = [0, 0], sizes = [128, 25], strides = [1, 1]} : vector<128x512xf32> to vector<128x25xf32>
    %6 = vector.extract_strided_slice %4 {offsets = [0, 128], sizes = [128, 25], strides = [1, 1]} : vector<128x512xf32> to vector<128x25xf32>
    %7 = vector.extract_strided_slice %4 {offsets = [0, 256], sizes = [128, 50], strides = [1, 1]} : vector<128x512xf32> to vector<128x50xf32>
    %8 = vector.extract_strided_slice %4 {offsets = [0, 384], sizes = [128, 100], strides = [1, 1]} : vector<128x512xf32> to vector<128x100xf32>
    %9 = vector.broadcast %2 : vector<128x1xf32> to vector<128x25xf32>
    %10 = arith.mulf %9, %5 : vector<128x25xf32>
    %11 = arith.addf %10, %6 : vector<128x25xf32>
    %12 = math.tanh %11 : vector<128x25xf32>
    %c0_5 = arith.constant 0 : index
    %c0_6 = arith.constant 0 : index
    %13 = vector.load %arg4[%c0_5, %c0_6] : memref<25x512xf32, #tpu.memory_space<vmem>>, vector<25x512xf32>
    %cst_7 = arith.constant dense<0.000000e+00> : vector<128x512xf32>
    %14 = tpu.matmul %12, %13, %cst_7 {dimension_numbers = #tpu.dot_dimension_numbers<[1], [0], [0], [1], [0, 0, 1, 1], [], []>} : vector<128x25xf32>, vector<25x512xf32>, vector<128x512xf32> -> vector<128x512xf32>
    %15 = vector.extract_strided_slice %1 {offsets = [0, 0], sizes = [128, 1], strides = [1, 1]} : vector<128x4xf32> to vector<128x1xf32>
    %16 = vector.extract_strided_slice %14 {offsets = [0, 0], sizes = [128, 50], strides = [1, 1]} : vector<128x512xf32> to vector<128x50xf32>
    %17 = vector.broadcast %15 : vector<128x1xf32> to vector<128x50xf32>
    %18 = arith.mulf %17, %16 : vector<128x50xf32>
    %19 = vector.extract_strided_slice %1 {offsets = [0, 1], sizes = [128, 1], strides = [1, 1]} : vector<128x4xf32> to vector<128x1xf32>
    %20 = vector.extract_strided_slice %14 {offsets = [0, 128], sizes = [128, 50], strides = [1, 1]} : vector<128x512xf32> to vector<128x50xf32>
    %21 = vector.broadcast %19 : vector<128x1xf32> to vector<128x50xf32>
    %22 = arith.mulf %21, %20 : vector<128x50xf32>
    %23 = arith.addf %18, %22 : vector<128x50xf32>
    %24 = vector.extract_strided_slice %1 {offsets = [0, 2], sizes = [128, 1], strides = [1, 1]} : vector<128x4xf32> to vector<128x1xf32>
    %25 = vector.extract_strided_slice %14 {offsets = [0, 256], sizes = [128, 50], strides = [1, 1]} : vector<128x512xf32> to vector<128x50xf32>
    %26 = vector.broadcast %24 : vector<128x1xf32> to vector<128x50xf32>
    %27 = arith.mulf %26, %25 : vector<128x50xf32>
    %28 = arith.addf %23, %27 : vector<128x50xf32>
    %29 = vector.extract_strided_slice %1 {offsets = [0, 3], sizes = [128, 1], strides = [1, 1]} : vector<128x4xf32> to vector<128x1xf32>
    %30 = vector.extract_strided_slice %14 {offsets = [0, 384], sizes = [128, 50], strides = [1, 1]} : vector<128x512xf32> to vector<128x50xf32>
    %31 = vector.broadcast %29 : vector<128x1xf32> to vector<128x50xf32>
    %32 = arith.mulf %31, %30 : vector<128x50xf32>
    %33 = arith.addf %28, %32 : vector<128x50xf32>
    %34 = arith.addf %33, %7 : vector<128x50xf32>
    %35 = math.tanh %34 : vector<128x50xf32>
    %36 = tpu.concatenate %12, %12 in 1 : vector<128x25xf32>, vector<128x25xf32> -> vector<128x50xf32>
    %37 = arith.addf %35, %36 : vector<128x50xf32>
    %c0_8 = arith.constant 0 : index
    %c0_9 = arith.constant 0 : index
    %38 = vector.load %arg5[%c0_8, %c0_9] : memref<50x512xf32, #tpu.memory_space<vmem>>, vector<50x512xf32>
    %cst_10 = arith.constant dense<0.000000e+00> : vector<128x512xf32>
    %39 = tpu.matmul %37, %38, %cst_10 {dimension_numbers = #tpu.dot_dimension_numbers<[1], [0], [0], [1], [0, 0, 1, 1], [], []>} : vector<128x50xf32>, vector<50x512xf32>, vector<128x512xf32> -> vector<128x512xf32>
    %40 = vector.extract_strided_slice %1 {offsets = [0, 0], sizes = [128, 1], strides = [1, 1]} : vector<128x4xf32> to vector<128x1xf32>
    %41 = vector.extract_strided_slice %39 {offsets = [0, 0], sizes = [128, 100], strides = [1, 1]} : vector<128x512xf32> to vector<128x100xf32>
    %42 = vector.broadcast %40 : vector<128x1xf32> to vector<128x100xf32>
    %43 = arith.mulf %42, %41 : vector<128x100xf32>
    %44 = vector.extract_strided_slice %1 {offsets = [0, 1], sizes = [128, 1], strides = [1, 1]} : vector<128x4xf32> to vector<128x1xf32>
    %45 = vector.extract_strided_slice %39 {offsets = [0, 128], sizes = [128, 100], strides = [1, 1]} : vector<128x512xf32> to vector<128x100xf32>
    %46 = vector.broadcast %44 : vector<128x1xf32> to vector<128x100xf32>
    %47 = arith.mulf %46, %45 : vector<128x100xf32>
    %48 = arith.addf %43, %47 : vector<128x100xf32>
    %49 = vector.extract_strided_slice %1 {offsets = [0, 2], sizes = [128, 1], strides = [1, 1]} : vector<128x4xf32> to vector<128x1xf32>
    %50 = vector.extract_strided_slice %39 {offsets = [0, 256], sizes = [128, 100], strides = [1, 1]} : vector<128x512xf32> to vector<128x100xf32>
    %51 = vector.broadcast %49 : vector<128x1xf32> to vector<128x100xf32>
    %52 = arith.mulf %51, %50 : vector<128x100xf32>
    %53 = arith.addf %48, %52 : vector<128x100xf32>
    %54 = vector.extract_strided_slice %1 {offsets = [0, 3], sizes = [128, 1], strides = [1, 1]} : vector<128x4xf32> to vector<128x1xf32>
    %55 = vector.extract_strided_slice %39 {offsets = [0, 384], sizes = [128, 100], strides = [1, 1]} : vector<128x512xf32> to vector<128x100xf32>
    %56 = vector.broadcast %54 : vector<128x1xf32> to vector<128x100xf32>
    %57 = arith.mulf %56, %55 : vector<128x100xf32>
    %58 = arith.addf %53, %57 : vector<128x100xf32>
    %59 = arith.addf %58, %8 : vector<128x100xf32>
    %60 = math.tanh %59 : vector<128x100xf32>
    %61 = tpu.concatenate %37, %37 in 1 : vector<128x50xf32>, vector<128x50xf32> -> vector<128x100xf32>
    %62 = arith.addf %60, %61 : vector<128x100xf32>
    %cst_11 = arith.constant 0.000000e+00 : f32
    %63 = vector.broadcast %cst_11 : f32 to vector<128x28xf32>
    %64 = tpu.concatenate %62, %63 in 1 : vector<128x100xf32>, vector<128x28xf32> -> vector<128x128xf32>
    %65 = vector.extract_strided_slice %0 {offsets = [0, 1], sizes = [128, 1], strides = [1, 1]} : vector<128x4xf32> to vector<128x1xf32>
    %66 = vector.broadcast %65 : vector<128x1xf32> to vector<128x128xf32>
    %67 = arith.mulf %66, %64 : vector<128x128xf32>
    %68 = vector.shape_cast %67 : vector<128x128xf32> to vector<16x8x128xf32>
    %cst_12 = arith.constant dense<0.000000e+00> : vector<16x128xf32>
    %69 = vector.multi_reduction <add>, %68, %cst_12 [1] : vector<16x8x128xf32> to vector<16x128xf32>
    %70 = vector.extract_strided_slice %0 {offsets = [0, 2], sizes = [128, 1], strides = [1, 1]} : vector<128x4xf32> to vector<128x1xf32>
    %71 = vector.broadcast %70 : vector<128x1xf32> to vector<128x128xf32>
    %72 = arith.mulf %71, %64 : vector<128x128xf32>
    %73 = vector.shape_cast %72 : vector<128x128xf32> to vector<16x8x128xf32>
    %cst_13 = arith.constant dense<0.000000e+00> : vector<16x128xf32>
    %74 = vector.multi_reduction <add>, %73, %cst_13 [1] : vector<16x8x128xf32> to vector<16x128xf32>
    %75 = vector.extract_strided_slice %0 {offsets = [0, 3], sizes = [128, 1], strides = [1, 1]} : vector<128x4xf32> to vector<128x1xf32>
    %76 = vector.broadcast %75 : vector<128x1xf32> to vector<128x128xf32>
    %77 = arith.mulf %76, %64 : vector<128x128xf32>
    %78 = vector.shape_cast %77 : vector<128x128xf32> to vector<16x8x128xf32>
    %cst_14 = arith.constant dense<0.000000e+00> : vector<16x128xf32>
    %79 = vector.multi_reduction <add>, %78, %cst_14 [1] : vector<16x8x128xf32> to vector<16x128xf32>
    %80 = vector.extract_strided_slice %69 {offsets = [0, 0], sizes = [16, 1], strides = [1, 1]} : vector<16x128xf32> to vector<16x1xf32>
    %81 = vector.broadcast %80 : vector<16x1xf32> to vector<16x128xf32>
    %82 = arith.mulf %81, %69 : vector<16x128xf32>
    %83 = vector.extract_strided_slice %74 {offsets = [0, 0], sizes = [16, 1], strides = [1, 1]} : vector<16x128xf32> to vector<16x1xf32>
    %84 = vector.broadcast %83 : vector<16x1xf32> to vector<16x128xf32>
    %85 = arith.mulf %84, %74 : vector<16x128xf32>
    %86 = arith.addf %82, %85 : vector<16x128xf32>
    %87 = vector.extract_strided_slice %79 {offsets = [0, 0], sizes = [16, 1], strides = [1, 1]} : vector<16x128xf32> to vector<16x1xf32>
    %88 = vector.broadcast %87 : vector<16x1xf32> to vector<16x128xf32>
    %89 = arith.mulf %88, %79 : vector<16x128xf32>
    %90 = arith.addf %86, %89 : vector<16x128xf32>
    %c0_15 = arith.constant 0 : index
    %c0_16 = arith.constant 0 : index
    %c0_17 = arith.constant 0 : index
    %91 = vector.load %arg6[%c0_15, %c0_16, %c0_17] : memref<4x16x128xf32, #tpu.memory_space<vmem>>, vector<1x16x128xf32>
    %92 = vector.shape_cast %91 : vector<1x16x128xf32> to vector<16x128xf32>
    %93 = vector.shape_cast %90 : vector<16x128xf32> to vector<1x16x128xf32>
    tpu.vector_store %arg6[%c0_15, %c0_16, %c0_17], %93 {strides = array<i32>} : memref<4x16x128xf32, #tpu.memory_space<vmem>>, vector<1x16x128xf32>,
    %94 = vector.extract_strided_slice %69 {offsets = [0, 1], sizes = [16, 1], strides = [1, 1]} : vector<16x128xf32> to vector<16x1xf32>
    %95 = vector.broadcast %94 : vector<16x1xf32> to vector<16x128xf32>
    %96 = arith.mulf %95, %69 : vector<16x128xf32>
    %97 = vector.extract_strided_slice %74 {offsets = [0, 1], sizes = [16, 1], strides = [1, 1]} : vector<16x128xf32> to vector<16x1xf32>
    %98 = vector.broadcast %97 : vector<16x1xf32> to vector<16x128xf32>
    %99 = arith.mulf %98, %74 : vector<16x128xf32>
    %100 = arith.addf %96, %99 : vector<16x128xf32>
    %101 = vector.extract_strided_slice %79 {offsets = [0, 1], sizes = [16, 1], strides = [1, 1]} : vector<16x128xf32> to vector<16x1xf32>
    %102 = vector.broadcast %101 : vector<16x1xf32> to vector<16x128xf32>
    %103 = arith.mulf %102, %79 : vector<16x128xf32>
    %104 = arith.addf %100, %103 : vector<16x128xf32>
    %c1 = arith.constant 1 : index
    %c0_18 = arith.constant 0 : index
    %c0_19 = arith.constant 0 : index
    %105 = vector.load %arg6[%c1, %c0_18, %c0_19] : memref<4x16x128xf32, #tpu.memory_space<vmem>>, vector<1x16x128xf32>
    %106 = vector.shape_cast %105 : vector<1x16x128xf32> to vector<16x128xf32>
    %107 = vector.shape_cast %104 : vector<16x128xf32> to vector<1x16x128xf32>
    tpu.vector_store %arg6[%c1, %c0_18, %c0_19], %107 {strides = array<i32>} : memref<4x16x128xf32, #tpu.memory_space<vmem>>, vector<1x16x128xf32>,
    %108 = vector.extract_strided_slice %69 {offsets = [0, 2], sizes = [16, 1], strides = [1, 1]} : vector<16x128xf32> to vector<16x1xf32>
    %109 = vector.broadcast %108 : vector<16x1xf32> to vector<16x128xf32>
    %110 = arith.mulf %109, %69 : vector<16x128xf32>
    %111 = vector.extract_strided_slice %74 {offsets = [0, 2], sizes = [16, 1], strides = [1, 1]} : vector<16x128xf32> to vector<16x1xf32>
    %112 = vector.broadcast %111 : vector<16x1xf32> to vector<16x128xf32>
    %113 = arith.mulf %112, %74 : vector<16x128xf32>
    %114 = arith.addf %110, %113 : vector<16x128xf32>
    %115 = vector.extract_strided_slice %79 {offsets = [0, 2], sizes = [16, 1], strides = [1, 1]} : vector<16x128xf32> to vector<16x1xf32>
    %116 = vector.broadcast %115 : vector<16x1xf32> to vector<16x128xf32>
    %117 = arith.mulf %116, %79 : vector<16x128xf32>
    %118 = arith.addf %114, %117 : vector<16x128xf32>
    %c2 = arith.constant 2 : index
    %c0_20 = arith.constant 0 : index
    %c0_21 = arith.constant 0 : index
    %119 = vector.load %arg6[%c2, %c0_20, %c0_21] : memref<4x16x128xf32, #tpu.memory_space<vmem>>, vector<1x16x128xf32>
    %120 = vector.shape_cast %119 : vector<1x16x128xf32> to vector<16x128xf32>
    %121 = vector.shape_cast %118 : vector<16x128xf32> to vector<1x16x128xf32>
    tpu.vector_store %arg6[%c2, %c0_20, %c0_21], %121 {strides = array<i32>} : memref<4x16x128xf32, #tpu.memory_space<vmem>>, vector<1x16x128xf32>,
    %122 = vector.extract_strided_slice %69 {offsets = [0, 3], sizes = [16, 1], strides = [1, 1]} : vector<16x128xf32> to vector<16x1xf32>
    %123 = vector.broadcast %122 : vector<16x1xf32> to vector<16x128xf32>
    %124 = arith.mulf %123, %69 : vector<16x128xf32>
    %125 = vector.extract_strided_slice %74 {offsets = [0, 3], sizes = [16, 1], strides = [1, 1]} : vector<16x128xf32> to vector<16x1xf32>
    %126 = vector.broadcast %125 : vector<16x1xf32> to vector<16x128xf32>
    %127 = arith.mulf %126, %74 : vector<16x128xf32>
    %128 = arith.addf %124, %127 : vector<16x128xf32>
    %129 = vector.extract_strided_slice %79 {offsets = [0, 3], sizes = [16, 1], strides = [1, 1]} : vector<16x128xf32> to vector<16x1xf32>
    %130 = vector.broadcast %129 : vector<16x1xf32> to vector<16x128xf32>
    %131 = arith.mulf %130, %79 : vector<16x128xf32>
    %132 = arith.addf %128, %131 : vector<16x128xf32>
    %c3 = arith.constant 3 : index
    %c0_22 = arith.constant 0 : index
    %c0_23 = arith.constant 0 : index
    %133 = vector.load %arg6[%c3, %c0_22, %c0_23] : memref<4x16x128xf32, #tpu.memory_space<vmem>>, vector<1x16x128xf32>
    %134 = vector.shape_cast %133 : vector<1x16x128xf32> to vector<16x128xf32>
    %135 = vector.shape_cast %132 : vector<16x128xf32> to vector<1x16x128xf32>
    tpu.vector_store %arg6[%c3, %c0_22, %c0_23], %135 {strides = array<i32>} : memref<4x16x128xf32, #tpu.memory_space<vmem>>, vector<1x16x128xf32>,
    return
  }
  func.func @transform_0(%arg0: i32) -> (i32, i32) {
    %c0_i32 = arith.constant 0 : i32
    %c0_i32_0 = arith.constant 0 : i32
    return %arg0, %c0_i32 : i32, i32
  }
  func.func @transform_1(%arg0: i32) -> (i32, i32) {
    %c0_i32 = arith.constant 0 : i32
    %c0_i32_0 = arith.constant 0 : i32
    %c0_i32_1 = arith.constant 0 : i32
    return %c0_i32, %c0_i32_0 : i32, i32
  }
  func.func @transform_2(%arg0: i32) -> (i32, i32) {
    %c0_i32 = arith.constant 0 : i32
    %c0_i32_0 = arith.constant 0 : i32
    %c0_i32_1 = arith.constant 0 : i32
    return %c0_i32, %c0_i32_0 : i32, i32
  }
  func.func @transform_3(%arg0: i32) -> (i32, i32) {
    %c0_i32 = arith.constant 0 : i32
    %c0_i32_0 = arith.constant 0 : i32
    %c0_i32_1 = arith.constant 0 : i32
    return %c0_i32, %c0_i32_0 : i32, i32
  }
  func.func @transform_4(%arg0: i32) -> (i32, i32) {
    %c0_i32 = arith.constant 0 : i32
    %c0_i32_0 = arith.constant 0 : i32
    %c0_i32_1 = arith.constant 0 : i32
    return %c0_i32, %c0_i32_0 : i32, i32
  }
  func.func @transform_5(%arg0: i32) -> (i32, i32, i32) {
    %c0_i32 = arith.constant 0 : i32
    %c0_i32_0 = arith.constant 0 : i32
    %c0_i32_1 = arith.constant 0 : i32
    return %c0_i32, %arg0, %c0_i32_0 : i32, i32, i32
  }
}

</mosaic_0001>

<llo_original>
// kernel: tpu_custom_call.1
$region0: #{tpu_custom_call.1}
  #allocation0 [shape = 'u32[]', space=smem, size = 0x4, offset = 0x4, fixed_abs, tag = 'smem constant byte address 0x4 - core index']
  #allocation1 [shape = 'u32[144,128]{1,0:T(1,128)}', space=vmem, size = 0x12000, scoped, tag = 'internal scratch']
  #allocation4 [shape = 's32[]', space=sflag, size = 0x4, offset = 0, fixed_abs, tag = 'sflag constant byte address 0x0 - dummy sync flag']
  %s0 = inlined_call_operand.vmem [shape: f32[512,4], index: 0, kind: input, shape index: {}]
  %s1 = inlined_call_operand.vmem [shape: f32[128,4], index: 1, kind: input, shape index: {}]
  %s2 = inlined_call_operand.vmem [shape: f32[4,512], index: 2, kind: input, shape index: {}]
  %s3 = inlined_call_operand.vmem [shape: f32[25,512], index: 3, kind: input, shape index: {}]
  %s4 = inlined_call_operand.vmem [shape: f32[50,512], index: 4, kind: input, shape index: {}]
  %s5 = inlined_call_operand.hbm [shape: f32[4,64,128], index: 5, kind: output, shape index: {}]
  %s6 = sld [smem:[#allocation0]]
  $region53: #{tpu_custom_call.1} parent=0
    _
  %s8 = ssub.s32 1, %s6
  %s9 = scalar_select 0, %s8, %s6
  $region1: #{tpu_custom_call.1} parent=0
    #allocation2 [shape = 'u8[65536]{0}', space=vmem, size = 0x10000, scoped, tag = 'output window, operand 0']
    #allocation3 [shape = 's32[2]{0}', space=sflag, size = 0x8, scoped, tag = 'scoped memory for tpu_custom_call.1']
    %10 = vsyncpa [#allocation3], 0
    %s11 = scalar_lea.sflag [#allocation3], 1
    %12 = vsyncpa %s11, 0
    loop: start=0, step=1, limit=6
    $region2: #{tpu_custom_call.1} parent=1 // loop_pre_header
      _
    $region3: #{tpu_custom_call.1} parent=1 // loop_header
      %s14 = sphi 0, %s18
      %p15 = scmp.ge.s32.totalorder %s14, 6
      %s24 = sphi 0, %s26
      %s27 = sphi 0, %s24
      %s28 = sphi 0, %s27
      %s44 = sphi 0, %s28
      %s48 = sphi 0, %s48
      %s50 = sphi 0, %s48
      %s51 = sphi 0, %s50
      %s65 = sphi 0, %s51
      %s69 = sphi 0, %s69
      %s71 = sphi 0, %s69
      %s72 = sphi 0, %s71
      %s86 = sphi 0, %s72
      %s90 = sphi 0, %s90
      %s92 = sphi 0, %s90
      %s93 = sphi 0, %s92
      %s107 = sphi 0, %s93
      %s111 = sphi 0, %s111
      %s113 = sphi 0, %s111
      %s114 = sphi 0, %s113
      %s128 = sphi 0, %s114
      %s134 = sphi 0, %s136
      %s137 = sphi 0, %s134
      %s138 = sphi 0, %s137
      %s154 = sphi 0, %s138
    $region4: #{tpu_custom_call.1} parent=1 // loop_header_branch
      %17 = sbr.rel (%p15) target = $region8
    $region5: #{tpu_custom_call.1} parent=1 // loop_body
      %s19 = ssub.s32 %s14, 1
      %s20 = ssub.s32 %s14, 2
      %s21 = sadd.s32 %s14, 1
      %s22 = ssub.s32 %s14, %s21
      %p23 = scmp.eq.s32.totalorder %s22, 0
      %s25 = sadd.s32 %s24, 1
      %s26 = scalar_select %p23, %s24, %s25
      %p29 = pneg %p23
      %p30 = scmp.eq.s32.totalorder %s14, 3
      %p31 = por %p29, %p30
      %p32 = scmp.ne.s32.totalorder %s24, %s27
      %p33 = scmp.eq.s32.totalorder %s14, 0
      %p34 = por %p32, %p33
      %p35 = scmp.ne.s32.totalorder %s24, %s27
      %p36 = scmp.eq.s32.totalorder %s19, 3
      %p37 = por %p35, %p36
      %p38 = scmp.ne.s32.totalorder %s27, %s28
      %p39 = scmp.eq.s32.totalorder %s19, 0
      %p40 = por %p38, %p39
      %p41 = scmp.ne.s32.totalorder %s27, %s28
      %p42 = scmp.eq.s32.totalorder %s20, 3
      %p43 = por %p41, %p42
      %p45 = scmp.ne.s32.totalorder %s28, %s44
      %p46 = scmp.eq.s32.totalorder %s20, 0
      %p47 = por %p45, %p46
      %s49 = sadd.s32 %s48, 1
      %p52 = scmp.eq.s32.totalorder %s14, 3
      %p53 = scmp.ne.s32.totalorder %s48, %s50
      %p54 = scmp.eq.s32.totalorder %s14, 0
      %p55 = por %p53, %p54
      %p56 = scmp.ne.s32.totalorder %s48, %s50
      %p57 = scmp.eq.s32.totalorder %s19, 3
      %p58 = por %p56, %p57
      %p59 = scmp.ne.s32.totalorder %s50, %s51
      %p60 = scmp.eq.s32.totalorder %s19, 0
      %p61 = por %p59, %p60
      %p62 = scmp.ne.s32.totalorder %s50, %s51
      %p63 = scmp.eq.s32.totalorder %s20, 3
      %p64 = por %p62, %p63
      %p66 = scmp.ne.s32.totalorder %s51, %s65
      %p67 = scmp.eq.s32.totalorder %s20, 0
      %p68 = por %p66, %p67
      %s70 = sadd.s32 %s69, 1
      %p73 = scmp.eq.s32.totalorder %s14, 3
      %p74 = scmp.ne.s32.totalorder %s69, %s71
      %p75 = scmp.eq.s32.totalorder %s14, 0
      %p76 = por %p74, %p75
      %p77 = scmp.ne.s32.totalorder %s69, %s71
      %p78 = scmp.eq.s32.totalorder %s19, 3
      %p79 = por %p77, %p78
      %p80 = scmp.ne.s32.totalorder %s71, %s72
      %p81 = scmp.eq.s32.totalorder %s19, 0
      %p82 = por %p80, %p81
      %p83 = scmp.ne.s32.totalorder %s71, %s72
      %p84 = scmp.eq.s32.totalorder %s20, 3
      %p85 = por %p83, %p84
      %p87 = scmp.ne.s32.totalorder %s72, %s86
      %p88 = scmp.eq.s32.totalorder %s20, 0
      %p89 = por %p87, %p88
      %s91 = sadd.s32 %s90, 1
      %p94 = scmp.eq.s32.totalorder %s14, 3
      %p95 = scmp.ne.s32.totalorder %s90, %s92
      %p96 = scmp.eq.s32.totalorder %s14, 0
      %p97 = por %p95, %p96
      %p98 = scmp.ne.s32.totalorder %s90, %s92
      %p99 = scmp.eq.s32.totalorder %s19, 3
      %p100 = por %p98, %p99
      %p101 = scmp.ne.s32.totalorder %s92, %s93
      %p102 = scmp.eq.s32.totalorder %s19, 0
      %p103 = por %p101, %p102
      %p104 = scmp.ne.s32.totalorder %s92, %s93
      %p105 = scmp.eq.s32.totalorder %s20, 3
      %p106 = por %p104, %p105
      %p108 = scmp.ne.s32.totalorder %s93, %s107
      %p109 = scmp.eq.s32.totalorder %s20, 0
      %p110 = por %p108, %p109
      %s112 = sadd.s32 %s111, 1
      %p115 = scmp.eq.s32.totalorder %s14, 3
      %p116 = scmp.ne.s32.totalorder %s111, %s113
      %p117 = scmp.eq.s32.totalorder %s14, 0
      %p118 = por %p116, %p117
      %p119 = scmp.ne.s32.totalorder %s111, %s113
      %p120 = scmp.eq.s32.totalorder %s19, 3
      %p121 = por %p119, %p120
      %p122 = scmp.ne.s32.totalorder %s113, %s114
      %p123 = scmp.eq.s32.totalorder %s19, 0
      %p124 = por %p122, %p123
      %p125 = scmp.ne.s32.totalorder %s113, %s114
      %p126 = scmp.eq.s32.totalorder %s20, 3
      %p127 = por %p125, %p126
      %p129 = scmp.ne.s32.totalorder %s114, %s128
      %p130 = scmp.eq.s32.totalorder %s20, 0
      %p131 = por %p129, %p130
      %s132 = ssub.s32 %s14, %s21
      %p133 = scmp.eq.s32.totalorder %s132, 0
      %s135 = sadd.s32 %s134, 1
      %s136 = scalar_select %p133, %s134, %s135
      %p139 = pneg %p133
      %p140 = scmp.eq.s32.totalorder %s14, 3
      %p141 = por %p139, %p140
      %p142 = scmp.ne.s32.totalorder %s134, %s137
      %p143 = scmp.eq.s32.totalorder %s14, 0
      %p144 = por %p142, %p143
      %p145 = scmp.ne.s32.totalorder %s134, %s137
      %p146 = scmp.eq.s32.totalorder %s19, 3
      %p147 = por %p145, %p146
      %p148 = scmp.ne.s32.totalorder %s137, %s138
      %p149 = scmp.eq.s32.totalorder %s19, 0
      %p150 = por %p148, %p149
      %p151 = scmp.ne.s32.totalorder %s137, %s138
      %p152 = scmp.eq.s32.totalorder %s20, 3
      %p153 = por %p151, %p152
      %p155 = scmp.ne.s32.totalorder %s138, %s154
      %p156 = scmp.eq.s32.totalorder %s20, 0
      %p157 = por %p155, %p156
      %p158 = scmp.le.s32.totalorder 1, %s14
      %p159 = scmp.lt.s32.totalorder %s14, 5
      %p160 = pnand %p158, %p159
      %p161 = pneg %p160
      // Predicated region
      $region9: #{tpu_custom_call.1} parent=5 // pred_check
        _
      $region10: #{tpu_custom_call.1} parent=5 // pred_check_branch
        %163 = sbr.rel (%p160) target = $region12
      $region11: #{tpu_custom_call.1} parent=5 // pred_region
        %s164 = ssub.s32 %s14, 1
        // Predicated region
        $region13: #{tpu_custom_call.1} parent=11 // pred_check
          %p165 = pneg %p61
        $region14: #{tpu_custom_call.1} parent=11 // pred_check_branch
          %167 = sbr.rel (%p165) target = $region16
        $region15: #{tpu_custom_call.1} parent=11 // pred_region
          _
        $region16: #{tpu_custom_call.1} parent=11 // pred_fallthru
          _
        // Predicated region
        $region17: #{tpu_custom_call.1} parent=11 // pred_check
          %p168 = pneg %p82
        $region18: #{tpu_custom_call.1} parent=11 // pred_check_branch
          %170 = sbr.rel (%p168) target = $region20
        $region19: #{tpu_custom_call.1} parent=11 // pred_region
          _
        $region20: #{tpu_custom_call.1} parent=11 // pred_fallthru
          _
        // Predicated region
        $region21: #{tpu_custom_call.1} parent=11 // pred_check
          %p171 = pneg %p103
        $region22: #{tpu_custom_call.1} parent=11 // pred_check_branch
          %173 = sbr.rel (%p171) target = $region24
        $region23: #{tpu_custom_call.1} parent=11 // pred_region
          _
        $region24: #{tpu_custom_call.1} parent=11 // pred_fallthru
          _
        // Predicated region
        $region25: #{tpu_custom_call.1} parent=11 // pred_check
          %p174 = pneg %p124
        $region26: #{tpu_custom_call.1} parent=11 // pred_check_branch
          %176 = sbr.rel (%p174) target = $region28
        $region27: #{tpu_custom_call.1} parent=11 // pred_region
          _
        $region28: #{tpu_custom_call.1} parent=11 // pred_fallthru
          _
      $region12: #{tpu_custom_call.1} parent=5 // pred_fallthru
        _
      %p177 = scmp.lt.s32.totalorder %s14, 4
      // Predicated region
      $region29: #{tpu_custom_call.1} parent=5 // pred_check
        %p178 = pneg %p177
      $region30: #{tpu_custom_call.1} parent=5 // pred_check_branch
        %180 = sbr.rel (%p178) target = $region32
      $region31: #{tpu_custom_call.1} parent=5 // pred_region
        // Predicated region
        $region33: #{tpu_custom_call.1} parent=31 // pred_check
          %p181 = pneg %p34
        $region34: #{tpu_custom_call.1} parent=31 // pred_check_branch
          %183 = sbr.rel (%p181) target = $region36
        $region35: #{tpu_custom_call.1} parent=31 // pred_region
          %s184 = smul.u32 16, %s14
          %p185 = scmp.lt.s32.totalorder %s184, 63
          %s186 = scalar_select %p185, %s184, 63
          %s187 = smul.addr %s186, 8
          %s188 = scalar_lea.vmem %s0, %s187
          %s189 = smul.u32 16, %s14
        $region36: #{tpu_custom_call.1} parent=31 // pred_fallthru
          _
      $region32: #{tpu_custom_call.1} parent=5 // pred_fallthru
        _
      %p190 = scmp.le.s32.totalorder 1, %s14
      %p191 = scmp.lt.s32.totalorder %s14, 5
      %p192 = pnand %p190, %p191
      %p193 = pneg %p192
      // Predicated region
      $region37: #{tpu_custom_call.1} parent=5 // pred_check
        _
      $region38: #{tpu_custom_call.1} parent=5 // pred_check_branch
        %195 = sbr.rel (%p192) target = $region40
      $region39: #{tpu_custom_call.1} parent=5 // pred_region
        %s196 = ssub.s32 %s14, 1
        %s197 = smul.u32 16, %s19
        %p198 = scmp.lt.s32.totalorder %s197, 63
        %s199 = scalar_select %p198, %s197, 63
        %s200 = smul.addr %s199, 8
        %s201 = scalar_lea.vmem %s0, %s200
        %p202 = pneg %p40
        %p203 = pneg %p37
        %p204 = pneg %p61
        %p205 = pneg %p58
        %p206 = pneg %p82
        %p207 = pneg %p79
        %p208 = pneg %p103
        %p209 = pneg %p100
        %p210 = pneg %p124
        %p211 = pneg %p121
        %p212 = pneg %p150
        %p213 = pneg %p147
        %s214 = sand.u32 %s137, 1
        %s215 = scalar_lea.sflag [#allocation3], %s214
        %s216 = sand.u32 %s137, 1
        %s217 = smul.addr %s216, 64
        %s218 = scalar_lea.vmem [#allocation2], %s217
        %s219 = smul.u32 16, %s19
        %p220 = scmp.lt.s32.totalorder %s219, 63
        %s221 = scalar_select %p220, %s219, 63
        %s222 = smul.addr %s221, 8
        %s223 = scalar_lea.vmem %s0, %s222
        %s224 = smul.u32 16, %s19
        %s225 = smul.u32 2, %s19
        %v226 = vld [vmem:[%s223] sm:$0xff]
        %v227 = vld [vmem:[%s223 + $0x8] sm:$0xff]
        %v228 = vld [vmem:[%s223 + $0x10] sm:$0xff]
        %v229 = vld [vmem:[%s223 + $0x18] sm:$0xff]
        %v230 = vld [vmem:[%s223 + $0x20] sm:$0xff]
        %v231 = vld [vmem:[%s223 + $0x28] sm:$0xff]
        %v232 = vld [vmem:[%s223 + $0x30] sm:$0xff]
        %v233 = vld [vmem:[%s223 + $0x38] sm:$0xff]
        %v234 = vld [vmem:[%s223 + $0x40] sm:$0xff]
        %v235 = vld [vmem:[%s223 + $0x48] sm:$0xff]
        %v236 = vld [vmem:[%s223 + $0x50] sm:$0xff]
        %v237 = vld [vmem:[%s223 + $0x58] sm:$0xff]
        %v238 = vld [vmem:[%s223 + $0x60] sm:$0xff]
        %v239 = vld [vmem:[%s223 + $0x68] sm:$0xff]
        %v240 = vld [vmem:[%s223 + $0x70] sm:$0xff]
        %v241 = vld [vmem:[%s223 + $0x78] sm:$0xff]
        %v242 = vld [vmem:[%s1] sm:$0xff]
        %v243 = vld [vmem:[%s1 + $0x8] sm:$0xff]
        %v244 = vld [vmem:[%s1 + $0x10] sm:$0xff]
        %v245 = vld [vmem:[%s1 + $0x18] sm:$0xff]
        %v246 = vld [vmem:[%s1 + $0x20] sm:$0xff]
        %v247 = vld [vmem:[%s1 + $0x28] sm:$0xff]
        %v248 = vld [vmem:[%s1 + $0x30] sm:$0xff]
        %v249 = vld [vmem:[%s1 + $0x38] sm:$0xff]
        %v250 = vld [vmem:[%s1 + $0x40] sm:$0xff]
        %v251 = vld [vmem:[%s1 + $0x48] sm:$0xff]
        %v252 = vld [vmem:[%s1 + $0x50] sm:$0xff]
        %v253 = vld [vmem:[%s1 + $0x58] sm:$0xff]
        %v254 = vld [vmem:[%s1 + $0x60] sm:$0xff]
        %v255 = vld [vmem:[%s1 + $0x68] sm:$0xff]
        %v256 = vld [vmem:[%s1 + $0x70] sm:$0xff]
        %v257 = vld [vmem:[%s1 + $0x78] sm:$0xff]
        %v258 = vld [vmem:[%s2] sm:$0xff]
        %v259 = vld [vmem:[%s2 + $0x8] sm:$0xff]
        %v262 = vcombine.high %v258, %v258
        %v263 = vcombine.high %v259, %v259
        %vm264 = vcmask 31744
        %v266 = vsel %vm264, %v242, 0
        %v269 = vsel %vm264, %v243, 0
        %v272 = vsel %vm264, %v244, 0
        %v275 = vsel %vm264, %v245, 0
        %v278 = vsel %vm264, %v246, 0
        %v281 = vsel %vm264, %v247, 0
        %v284 = vsel %vm264, %v248, 0
        %v287 = vsel %vm264, %v249, 0
        %v290 = vsel %vm264, %v250, 0
        %v293 = vsel %vm264, %v251, 0
        %v296 = vsel %vm264, %v252, 0
        %v299 = vsel %vm264, %v253, 0
        %v302 = vsel %vm264, %v254, 0
        %v305 = vsel %vm264, %v255, 0
        %v308 = vsel %vm264, %v256, 0
        %v311 = vsel %vm264, %v257, 0
        %vm313 = vcmask 1043456
        %v314 = vsel %vm313, %v258, 0
        %v316 = vsel %vm313, %v262, 0
        %v318 = vsel %vm313, %v259, 0
        %v320 = vsel %vm313, %v263, 0
        %322 = vmatprep.subr.mxu0 0.0
        %323 = vmatpush1.msra.mxu0 0.0
        %324 = vmatprep.subr.mxu0 0.0
        %325 = vmatpush1.msra.mxu0 0.0
        %326 = vmatprep.subr.mxu0 0.0
        %327 = vmatpush1.msra.mxu0 0.0
        %328 = vmatprep.subr.mxu0 0.0
        %329 = vmatpush1.msra.mxu0 0.0
        %330 = vmatprep.subr.mxu0 0.0
        %331 = vmatpush1.msra.mxu0 0.0
        %332 = vmatprep.subr.mxu0 0.0
        %333 = vmatpush1.msra.mxu0 0.0
        %334 = vmatprep.subr.mxu0 0.0
        %335 = vmatpush1.msra.mxu0 0.0
        %336 = vmatprep.subr.mxu0 0.0
        %337 = vmatpush1.msra.mxu0 0.0
        %338 = vmatprep.subr.mxu0 0.0
        %339 = vmatpush1.msra.mxu0 0.0
        %340 = vmatprep.subr.mxu0 0.0
        %341 = vmatpush1.msra.mxu0 0.0
        %342 = vmatprep.subr.mxu0 0.0
        %343 = vmatpush1.msra.mxu0 0.0
        %344 = vmatprep.subr.mxu0 0.0
        %345 = vmatpush1.msra.mxu0 0.0
        %346 = vmatprep.subr.mxu0 0.0
        %347 = vmatpush1.msra.mxu0 0.0
        %348 = vmatprep.subr.mxu0 0.0
        %349 = vmatpush1.msra.mxu0 0.0
        %350 = vmatprep.subr.mxu0 0.0
        %351 = vmatpush1.msra.mxu0 0.0
        %352 = vmatprep.subr.mxu0 %v316
        %353 = vmatpush1.msra.mxu0 %v314
        %354 = vmatprep.subr.mxu0 0.0
        %355 = vmatpush2.msra.mxu0 0.0
        %356 = vmatprep.subr.mxu0 0.0
        %357 = vmatpush2.msra.mxu0 0.0
        %358 = vmatprep.subr.mxu0 0.0
        %359 = vmatpush2.msra.mxu0 0.0
        %360 = vmatprep.subr.mxu0 0.0
        %361 = vmatpush2.msra.mxu0 0.0
        %362 = vmatprep.subr.mxu0 0.0
        %363 = vmatpush2.msra.mxu0 0.0
        %364 = vmatprep.subr.mxu0 0.0
        %365 = vmatpush2.msra.mxu0 0.0
        %366 = vmatprep.subr.mxu0 0.0
        %367 = vmatpush2.msra.mxu0 0.0
        %368 = vmatprep.subr.mxu0 0.0
        %369 = vmatpush2.msra.mxu0 0.0
        %370 = vmatprep.subr.mxu0 0.0
        %371 = vmatpush2.msra.mxu0 0.0
        %372 = vmatprep.subr.mxu0 0.0
        %373 = vmatpush2.msra.mxu0 0.0
        %374 = vmatprep.subr.mxu0 0.0
        %375 = vmatpush2.msra.mxu0 0.0
        %376 = vmatprep.subr.mxu0 0.0
        %377 = vmatpush2.msra.mxu0 0.0
        %378 = vmatprep.subr.mxu0 0.0
        %379 = vmatpush2.msra.mxu0 0.0
        %380 = vmatprep.subr.mxu0 0.0
        %381 = vmatpush2.msra.mxu0 0.0
        %382 = vmatprep.subr.mxu0 0.0
        %383 = vmatpush2.msra.mxu0 0.0
        %384 = vmatprep.subr.mxu0 0.0
        %385 = vmatpush2.msra.mxu0 0.0
        %386 = vmatprep.mubr.f32.mxu0 0.0
        %387 = vmatmul.mubr.f32.gmra.mxu0 %v266
        %v388 = vpop.f32.mrf.mxu0
        %v389 = vadd.f32 0.0, %v388
        %v390 = vpop.f32.mrf.mxu0
        %v391 = vadd.f32 0.0, %v390
        %392 = vmatprep.mubr.f32.mxu0 0.0
        %393 = vmatmul.mubr.f32.gmra.mxu0 %v269
        %v394 = vpop.f32.mrf.mxu0
        %v395 = vadd.f32 0.0, %v394
        %v396 = vpop.f32.mrf.mxu0
        %v397 = vadd.f32 0.0, %v396
        %398 = vmatprep.mubr.f32.mxu0 0.0
        %399 = vmatmul.mubr.f32.gmra.mxu0 %v272
        %v400 = vpop.f32.mrf.mxu0
        %v401 = vadd.f32 0.0, %v400
        %v402 = vpop.f32.mrf.mxu0
        %v403 = vadd.f32 0.0, %v402
        %404 = vmatprep.mubr.f32.mxu0 0.0
        %405 = vmatmul.mubr.f32.gmra.mxu0 %v275
        %v406 = vpop.f32.mrf.mxu0
        %v407 = vadd.f32 0.0, %v406
        %v408 = vpop.f32.mrf.mxu0
        %v409 = vadd.f32 0.0, %v408
        %410 = vmatprep.mubr.f32.mxu0 0.0
        %411 = vmatmul.mubr.f32.gmra.mxu0 %v278
        %v412 = vpop.f32.mrf.mxu0
        %v413 = vadd.f32 0.0, %v412
        %v414 = vpop.f32.mrf.mxu0
        %v415 = vadd.f32 0.0, %v414
        %416 = vmatprep.mubr.f32.mxu0 0.0
        %417 = vmatmul.mubr.f32.gmra.mxu0 %v281
        %v418 = vpop.f32.mrf.mxu0
        %v419 = vadd.f32 0.0, %v418
        %v420 = vpop.f32.mrf.mxu0
        %v421 = vadd.f32 0.0, %v420
        %422 = vmatprep.mubr.f32.mxu0 0.0
        %423 = vmatmul.mubr.f32.gmra.mxu0 %v284
        %v424 = vpop.f32.mrf.mxu0
        %v425 = vadd.f32 0.0, %v424
        %v426 = vpop.f32.mrf.mxu0
        %v427 = vadd.f32 0.0, %v426
        %428 = vmatprep.mubr.f32.mxu0 0.0
        %429 = vmatmul.mubr.f32.gmra.mxu0 %v287
        %v430 = vpop.f32.mrf.mxu0
        %v431 = vadd.f32 0.0, %v430
        %v432 = vpop.f32.mrf.mxu0
        %v433 = vadd.f32 0.0, %v432
        %434 = vmatprep.mubr.f32.mxu0 0.0
        %435 = vmatmul.mubr.f32.gmra.mxu0 %v290
        %v436 = vpop.f32.mrf.mxu0
        %v437 = vadd.f32 0.0, %v436
        %v438 = vpop.f32.mrf.mxu0
        %v439 = vadd.f32 0.0, %v438
        %440 = vmatprep.mubr.f32.mxu0 0.0
        %441 = vmatmul.mubr.f32.gmra.mxu0 %v293
        %v442 = vpop.f32.mrf.mxu0
        %v443 = vadd.f32 0.0, %v442
        %v444 = vpop.f32.mrf.mxu0
        %v445 = vadd.f32 0.0, %v444
        %446 = vmatprep.mubr.f32.mxu0 0.0
        %447 = vmatmul.mubr.f32.gmra.mxu0 %v296
        %v448 = vpop.f32.mrf.mxu0
        %v449 = vadd.f32 0.0, %v448
        %v450 = vpop.f32.mrf.mxu0
        %v451 = vadd.f32 0.0, %v450
        %452 = vmatprep.mubr.f32.mxu0 0.0
        %453 = vmatmul.mubr.f32.gmra.mxu0 %v299
        %v454 = vpop.f32.mrf.mxu0
        %v455 = vadd.f32 0.0, %v454
        %v456 = vpop.f32.mrf.mxu0
        %v457 = vadd.f32 0.0, %v456
        %458 = vmatprep.mubr.f32.mxu0 0.0
        %459 = vmatmul.mubr.f32.gmra.mxu0 %v302
        %v460 = vpop.f32.mrf.mxu0
        %v461 = vadd.f32 0.0, %v460
        %v462 = vpop.f32.mrf.mxu0
        %v463 = vadd.f32 0.0, %v462
        %464 = vmatprep.mubr.f32.mxu0 0.0
        %465 = vmatmul.mubr.f32.gmra.mxu0 %v305
        %v466 = vpop.f32.mrf.mxu0
        %v467 = vadd.f32 0.0, %v466
        %v468 = vpop.f32.mrf.mxu0
        %v469 = vadd.f32 0.0, %v468
        %470 = vmatprep.mubr.f32.mxu0 0.0
        %471 = vmatmul.mubr.f32.gmra.mxu0 %v308
        %v472 = vpop.f32.mrf.mxu0
        %v473 = vadd.f32 0.0, %v472
        %v474 = vpop.f32.mrf.mxu0
        %v475 = vadd.f32 0.0, %v474
        %476 = vmatprep.mubr.f32.mxu0 0.0
        %477 = vmatmul.mubr.f32.gmra.mxu0 %v311
        %v478 = vpop.f32.mrf.mxu0
        %v479 = vadd.f32 0.0, %v478
        %v480 = vpop.f32.mrf.mxu0
        %v481 = vadd.f32 0.0, %v480
        %482 = vdwg.mxu0
        %483 = vmatprep.subr.mxu0 0.0
        %484 = vmatpush1.msra.mxu0 0.0
        %485 = vmatprep.subr.mxu0 0.0
        %486 = vmatpush1.msra.mxu0 0.0
        %487 = vmatprep.subr.mxu0 0.0
        %488 = vmatpush1.msra.mxu0 0.0
        %489 = vmatprep.subr.mxu0 0.0
        %490 = vmatpush1.msra.mxu0 0.0
        %491 = vmatprep.subr.mxu0 0.0
        %492 = vmatpush1.msra.mxu0 0.0
        %493 = vmatprep.subr.mxu0 0.0
        %494 = vmatpush1.msra.mxu0 0.0
        %495 = vmatprep.subr.mxu0 0.0
        %496 = vmatpush1.msra.mxu0 0.0
        %497 = vmatprep.subr.mxu0 0.0
        %498 = vmatpush1.msra.mxu0 0.0
        %499 = vmatprep.subr.mxu0 0.0
        %500 = vmatpush1.msra.mxu0 0.0
        %501 = vmatprep.subr.mxu0 0.0
        %502 = vmatpush1.msra.mxu0 0.0
        %503 = vmatprep.subr.mxu0 0.0
        %504 = vmatpush1.msra.mxu0 0.0
        %505 = vmatprep.subr.mxu0 0.0
        %506 = vmatpush1.msra.mxu0 0.0
        %507 = vmatprep.subr.mxu0 0.0
        %508 = vmatpush1.msra.mxu0 0.0
        %509 = vmatprep.subr.mxu0 0.0
        %510 = vmatpush1.msra.mxu0 0.0
        %511 = vmatprep.subr.mxu0 0.0
        %512 = vmatpush1.msra.mxu0 0.0
        %513 = vmatprep.subr.mxu0 %v320
        %514 = vmatpush1.msra.mxu0 %v318
        %515 = vmatprep.subr.mxu0 0.0
        %516 = vmatpush2.msra.mxu0 0.0
        %517 = vmatprep.subr.mxu0 0.0
        %518 = vmatpush2.msra.mxu0 0.0
        %519 = vmatprep.subr.mxu0 0.0
        %520 = vmatpush2.msra.mxu0 0.0
        %521 = vmatprep.subr.mxu0 0.0
        %522 = vmatpush2.msra.mxu0 0.0
        %523 = vmatprep.subr.mxu0 0.0
        %524 = vmatpush2.msra.mxu0 0.0
        %525 = vmatprep.subr.mxu0 0.0
        %526 = vmatpush2.msra.mxu0 0.0
        %527 = vmatprep.subr.mxu0 0.0
        %528 = vmatpush2.msra.mxu0 0.0
        %529 = vmatprep.subr.mxu0 0.0
        %530 = vmatpush2.msra.mxu0 0.0
        %531 = vmatprep.subr.mxu0 0.0
        %532 = vmatpush2.msra.mxu0 0.0
        %533 = vmatprep.subr.mxu0 0.0
        %534 = vmatpush2.msra.mxu0 0.0
        %535 = vmatprep.subr.mxu0 0.0
        %536 = vmatpush2.msra.mxu0 0.0
        %537 = vmatprep.subr.mxu0 0.0
        %538 = vmatpush2.msra.mxu0 0.0
        %539 = vmatprep.subr.mxu0 0.0
        %540 = vmatpush2.msra.mxu0 0.0
        %541 = vmatprep.subr.mxu0 0.0
        %542 = vmatpush2.msra.mxu0 0.0
        %543 = vmatprep.subr.mxu0 0.0
        %544 = vmatpush2.msra.mxu0 0.0
        %545 = vmatprep.subr.mxu0 0.0
        %546 = vmatpush2.msra.mxu0 0.0
        %547 = vmatprep.mubr.f32.mxu0 0.0
        %548 = vmatmul.mubr.f32.gmra.mxu0 %v266
        %v549 = vpop.f32.mrf.mxu0
        %v550 = vadd.f32 0.0, %v549
        %v551 = vpop.f32.mrf.mxu0
        %v552 = vadd.f32 0.0, %v551
        %553 = vmatprep.mubr.f32.mxu0 0.0
        %554 = vmatmul.mubr.f32.gmra.mxu0 %v269
        %v555 = vpop.f32.mrf.mxu0
        %v556 = vadd.f32 0.0, %v555
        %v557 = vpop.f32.mrf.mxu0
        %v558 = vadd.f32 0.0, %v557
        %559 = vmatprep.mubr.f32.mxu0 0.0
        %560 = vmatmul.mubr.f32.gmra.mxu0 %v272
        %v561 = vpop.f32.mrf.mxu0
        %v562 = vadd.f32 0.0, %v561
        %v563 = vpop.f32.mrf.mxu0
        %v564 = vadd.f32 0.0, %v563
        %565 = vmatprep.mubr.f32.mxu0 0.0
        %566 = vmatmul.mubr.f32.gmra.mxu0 %v275
        %v567 = vpop.f32.mrf.mxu0
        %v568 = vadd.f32 0.0, %v567
        %v569 = vpop.f32.mrf.mxu0
        %v570 = vadd.f32 0.0, %v569
        %571 = vmatprep.mubr.f32.mxu0 0.0
        %572 = vmatmul.mubr.f32.gmra.mxu0 %v278
        %v573 = vpop.f32.mrf.mxu0
        %v574 = vadd.f32 0.0, %v573
        %v575 = vpop.f32.mrf.mxu0
        %v576 = vadd.f32 0.0, %v575
        %577 = vmatprep.mubr.f32.mxu0 0.0
        %578 = vmatmul.mubr.f32.gmra.mxu0 %v281
        %v579 = vpop.f32.mrf.mxu0
        %v580 = vadd.f32 0.0, %v579
        %v581 = vpop.f32.mrf.mxu0
        %v582 = vadd.f32 0.0, %v581
        %583 = vmatprep.mubr.f32.mxu0 0.0
        %584 = vmatmul.mubr.f32.gmra.mxu0 %v284
        %v585 = vpop.f32.mrf.mxu0
        %v586 = vadd.f32 0.0, %v585
        %v587 = vpop.f32.mrf.mxu0
        %v588 = vadd.f32 0.0, %v587
        %589 = vmatprep.mubr.f32.mxu0 0.0
        %590 = vmatmul.mubr.f32.gmra.mxu0 %v287
        %v591 = vpop.f32.mrf.mxu0
        %v592 = vadd.f32 0.0, %v591
        %v593 = vpop.f32.mrf.mxu0
        %v594 = vadd.f32 0.0, %v593
        %595 = vmatprep.mubr.f32.mxu0 0.0
        %596 = vmatmul.mubr.f32.gmra.mxu0 %v290
        %v597 = vpop.f32.mrf.mxu0
        %v598 = vadd.f32 0.0, %v597
        %v599 = vpop.f32.mrf.mxu0
        %v600 = vadd.f32 0.0, %v599
        %601 = vmatprep.mubr.f32.mxu0 0.0
        %602 = vmatmul.mubr.f32.gmra.mxu0 %v293
        %v603 = vpop.f32.mrf.mxu0
        %v604 = vadd.f32 0.0, %v603
        %v605 = vpop.f32.mrf.mxu0
        %v606 = vadd.f32 0.0, %v605
        %607 = vmatprep.mubr.f32.mxu0 0.0
        %608 = vmatmul.mubr.f32.gmra.mxu0 %v296
        %v609 = vpop.f32.mrf.mxu0
        %v610 = vadd.f32 0.0, %v609
        %v611 = vpop.f32.mrf.mxu0
        %v612 = vadd.f32 0.0, %v611
        %613 = vmatprep.mubr.f32.mxu0 0.0
        %614 = vmatmul.mubr.f32.gmra.mxu0 %v299
        %v615 = vpop.f32.mrf.mxu0
        %v616 = vadd.f32 0.0, %v615
        %v617 = vpop.f32.mrf.mxu0
        %v618 = vadd.f32 0.0, %v617
        %619 = vmatprep.mubr.f32.mxu0 0.0
        %620 = vmatmul.mubr.f32.gmra.mxu0 %v302
        %v621 = vpop.f32.mrf.mxu0
        %v622 = vadd.f32 0.0, %v621
        %v623 = vpop.f32.mrf.mxu0
        %v624 = vadd.f32 0.0, %v623
        %625 = vmatprep.mubr.f32.mxu0 0.0
        %626 = vmatmul.mubr.f32.gmra.mxu0 %v305
        %v627 = vpop.f32.mrf.mxu0
        %v628 = vadd.f32 0.0, %v627
        %v629 = vpop.f32.mrf.mxu0
        %v630 = vadd.f32 0.0, %v629
        %631 = vmatprep.mubr.f32.mxu0 0.0
        %632 = vmatmul.mubr.f32.gmra.mxu0 %v308
        %v633 = vpop.f32.mrf.mxu0
        %v634 = vadd.f32 0.0, %v633
        %v635 = vpop.f32.mrf.mxu0
        %v636 = vadd.f32 0.0, %v635
        %637 = vmatprep.mubr.f32.mxu0 0.0
        %638 = vmatmul.mubr.f32.gmra.mxu0 %v311
        %v639 = vpop.f32.mrf.mxu0
        %v640 = vadd.f32 0.0, %v639
        %v641 = vpop.f32.mrf.mxu0
        %v642 = vadd.f32 0.0, %v641
        %643 = vdwg.mxu0
        %645 = vset.pattern.permute.xlu0 0
        %646 = vperm.xlu0 %645, %v226
        %v647 = vpop.permute.xlu0 %646
        %650 = vset.pattern.permute.xlu0 0
        %651 = vperm.xlu0 %650, %v227
        %v652 = vpop.permute.xlu0 %651
        %655 = vset.pattern.permute.xlu0 0
        %656 = vperm.xlu0 %655, %v228
        %v657 = vpop.permute.xlu0 %656
        %660 = vset.pattern.permute.xlu0 0
        %661 = vperm.xlu0 %660, %v229
        %v662 = vpop.permute.xlu0 %661
        %665 = vset.pattern.permute.xlu0 0
        %666 = vperm.xlu0 %665, %v230
        %v667 = vpop.permute.xlu0 %666
        %670 = vset.pattern.permute.xlu0 0
        %671 = vperm.xlu0 %670, %v231
        %v672 = vpop.permute.xlu0 %671
        %675 = vset.pattern.permute.xlu0 0
        %676 = vperm.xlu0 %675, %v232
        %v677 = vpop.permute.xlu0 %676
        %680 = vset.pattern.permute.xlu0 0
        %681 = vperm.xlu0 %680, %v233
        %v682 = vpop.permute.xlu0 %681
        %685 = vset.pattern.permute.xlu0 0
        %686 = vperm.xlu0 %685, %v234
        %v687 = vpop.permute.xlu0 %686
        %690 = vset.pattern.permute.xlu0 0
        %691 = vperm.xlu0 %690, %v235
        %v692 = vpop.permute.xlu0 %691
        %695 = vset.pattern.permute.xlu0 0
        %696 = vperm.xlu0 %695, %v236
        %v697 = vpop.permute.xlu0 %696
        %700 = vset.pattern.permute.xlu0 0
        %701 = vperm.xlu0 %700, %v237
        %v702 = vpop.permute.xlu0 %701
        %705 = vset.pattern.permute.xlu0 0
        %706 = vperm.xlu0 %705, %v238
        %v707 = vpop.permute.xlu0 %706
        %710 = vset.pattern.permute.xlu0 0
        %711 = vperm.xlu0 %710, %v239
        %v712 = vpop.permute.xlu0 %711
        %715 = vset.pattern.permute.xlu0 0
        %716 = vperm.xlu0 %715, %v240
        %v717 = vpop.permute.xlu0 %716
        %720 = vset.pattern.permute.xlu0 0
        %721 = vperm.xlu0 %720, %v241
        %v722 = vpop.permute.xlu0 %721
        %v724 = vmul.f32 %v647, %v389
        %v725 = vmul.f32 %v652, %v395
        %v726 = vmul.f32 %v657, %v401
        %v727 = vmul.f32 %v662, %v407
        %v728 = vmul.f32 %v667, %v413
        %v729 = vmul.f32 %v672, %v419
        %v730 = vmul.f32 %v677, %v425
        %v731 = vmul.f32 %v682, %v431
        %v732 = vmul.f32 %v687, %v437
        %v733 = vmul.f32 %v692, %v443
        %v734 = vmul.f32 %v697, %v449
        %v735 = vmul.f32 %v702, %v455
        %v736 = vmul.f32 %v707, %v461
        %v737 = vmul.f32 %v712, %v467
        %v738 = vmul.f32 %v717, %v473
        %v739 = vmul.f32 %v722, %v479
        %v740 = vadd.f32 %v724, %v391
        %v741 = vadd.f32 %v725, %v397
        %v742 = vadd.f32 %v726, %v403
        %v743 = vadd.f32 %v727, %v409
        %v744 = vadd.f32 %v728, %v415
        %v745 = vadd.f32 %v729, %v421
        %v746 = vadd.f32 %v730, %v427
        %v747 = vadd.f32 %v731, %v433
        %v748 = vadd.f32 %v732, %v439
        %v749 = vadd.f32 %v733, %v445
        %v750 = vadd.f32 %v734, %v451
        %v751 = vadd.f32 %v735, %v457
        %v752 = vadd.f32 %v736, %v463
        %v753 = vadd.f32 %v737, %v469
        %v754 = vadd.f32 %v738, %v475
        %v755 = vadd.f32 %v739, %v481
        %v756 = vtanh.pop %v740
        %v757 = vtanh.pop %v741
        %v758 = vtanh.pop %v742
        %v759 = vtanh.pop %v743
        %v760 = vtanh.pop %v744
        %v761 = vtanh.pop %v745
        %v762 = vtanh.pop %v746
        %v763 = vtanh.pop %v747
        %v764 = vtanh.pop %v748
        %v765 = vtanh.pop %v749
        %v766 = vtanh.pop %v750
        %v767 = vtanh.pop %v751
        %v768 = vtanh.pop %v752
        %v769 = vtanh.pop %v753
        %v770 = vtanh.pop %v754
        %v771 = vtanh.pop %v755
        %v772 = vld [vmem:[%s3] sm:$0xff]
        %v773 = vld [vmem:[%s3 + $0x8] sm:$0xff]
        %v774 = vld [vmem:[%s3 + $0x10] sm:$0xff]
        %v775 = vld [vmem:[%s3 + $0x18] sm:$0xff]
        %v776 = vld [vmem:[%s3 + $0x20] sm:$0xff]
        %v777 = vld [vmem:[%s3 + $0x28] sm:$0xff]
        %v778 = vld [vmem:[%s3 + $0x30] sm:$0xff]
        %v779 = vld [vmem:[%s3 + $0x38] sm:$0xff]
        %v780 = vld [vmem:[%s3 + $0x40] sm:$0xff]
        %v781 = vld [vmem:[%s3 + $0x48] sm:$0xff]
        %v782 = vld [vmem:[%s3 + $0x50] sm:$0xff]
        %v783 = vld [vmem:[%s3 + $0x58] sm:$0xff]
        %v784 = vld [vmem:[%s3 + $0x60] sm:$0x1]
        %v785 = vld [vmem:[%s3 + $0x68] sm:$0x1]
        %v786 = vld [vmem:[%s3 + $0x70] sm:$0x1]
        %v787 = vld [vmem:[%s3 + $0x78] sm:$0x1]
        %vm788 = vcmask 203776
        %v790 = vsel %vm788, %v756, 0
        %v793 = vsel %vm788, %v757, 0
        %v796 = vsel %vm788, %v758, 0
        %v799 = vsel %vm788, %v759, 0
        %v802 = vsel %vm788, %v760, 0
        %v805 = vsel %vm788, %v761, 0
        %v808 = vsel %vm788, %v762, 0
        %v811 = vsel %vm788, %v763, 0
        %v814 = vsel %vm788, %v764, 0
        %v817 = vsel %vm788, %v765, 0
        %v820 = vsel %vm788, %v766, 0
        %v823 = vsel %vm788, %v767, 0
        %v826 = vsel %vm788, %v768, 0
        %v829 = vsel %vm788, %v769, 0
        %v832 = vsel %vm788, %v770, 0
        %v835 = vsel %vm788, %v771, 0
        %vm837 = vcmask 1040384
        %v839 = vsel %vm837, %v784, 0
        %v842 = vsel %vm837, %v785, 0
        %v845 = vsel %vm837, %v786, 0
        %v848 = vsel %vm837, %v787, 0
        %850 = vmatprep.subr.mxu0 0.0
        %851 = vmatpush1.msra.mxu0 0.0
        %852 = vmatprep.subr.mxu0 0.0
        %853 = vmatpush1.msra.mxu0 0.0
        %854 = vmatprep.subr.mxu0 0.0
        %855 = vmatpush1.msra.mxu0 0.0
        %856 = vmatprep.subr.mxu0 0.0
        %857 = vmatpush1.msra.mxu0 0.0
        %858 = vmatprep.subr.mxu0 0.0
        %859 = vmatpush1.msra.mxu0 0.0
        %860 = vmatprep.subr.mxu0 0.0
        %861 = vmatpush1.msra.mxu0 0.0
        %862 = vmatprep.subr.mxu0 0.0
        %863 = vmatpush1.msra.mxu0 0.0
        %864 = vmatprep.subr.mxu0 0.0
        %865 = vmatpush1.msra.mxu0 0.0
        %866 = vmatprep.subr.mxu0 0.0
        %867 = vmatpush1.msra.mxu0 0.0
        %868 = vmatprep.subr.mxu0 0.0
        %869 = vmatpush1.msra.mxu0 0.0
        %870 = vmatprep.subr.mxu0 0.0
        %871 = vmatpush1.msra.mxu0 0.0
        %872 = vmatprep.subr.mxu0 0.0
        %873 = vmatpush1.msra.mxu0 0.0
        %874 = vmatprep.subr.mxu0 %v842
        %875 = vmatpush1.msra.mxu0 %v839
        %876 = vmatprep.subr.mxu0 %v781
        %877 = vmatpush1.msra.mxu0 %v780
        %878 = vmatprep.subr.mxu0 %v777
        %879 = vmatpush1.msra.mxu0 %v776
        %880 = vmatprep.subr.mxu0 %v773
        %881 = vmatpush1.msra.mxu0 %v772
        %882 = vmatprep.subr.mxu0 0.0
        %883 = vmatpush2.msra.mxu0 0.0
        %884 = vmatprep.subr.mxu0 0.0
        %885 = vmatpush2.msra.mxu0 0.0
        %886 = vmatprep.subr.mxu0 0.0
        %887 = vmatpush2.msra.mxu0 0.0
        %888 = vmatprep.subr.mxu0 0.0
        %889 = vmatpush2.msra.mxu0 0.0
        %890 = vmatprep.subr.mxu0 0.0
        %891 = vmatpush2.msra.mxu0 0.0
        %892 = vmatprep.subr.mxu0 0.0
        %893 = vmatpush2.msra.mxu0 0.0
        %894 = vmatprep.subr.mxu0 0.0
        %895 = vmatpush2.msra.mxu0 0.0
        %896 = vmatprep.subr.mxu0 0.0
        %897 = vmatpush2.msra.mxu0 0.0
        %898 = vmatprep.subr.mxu0 0.0
        %899 = vmatpush2.msra.mxu0 0.0
        %900 = vmatprep.subr.mxu0 0.0
        %901 = vmatpush2.msra.mxu0 0.0
        %902 = vmatprep.subr.mxu0 0.0
        %903 = vmatpush2.msra.mxu0 0.0
        %904 = vmatprep.subr.mxu0 0.0
        %905 = vmatpush2.msra.mxu0 0.0
        %906 = vmatprep.subr.mxu0 0.0
        %907 = vmatpush2.msra.mxu0 0.0
        %908 = vmatprep.subr.mxu0 0.0
        %909 = vmatpush2.msra.mxu0 0.0
        %910 = vmatprep.subr.mxu0 0.0
        %911 = vmatpush2.msra.mxu0 0.0
        %912 = vmatprep.subr.mxu0 0.0
        %913 = vmatpush2.msra.mxu0 0.0
        %914 = vmatprep.mubr.f32.mxu0 0.0
        %915 = vmatmul.mubr.f32.gmra.mxu0 %v790
        %v916 = vpop.f32.mrf.mxu0
        %v917 = vadd.f32 0.0, %v916
        %v918 = vpop.f32.mrf.mxu0
        %v919 = vadd.f32 0.0, %v918
        %920 = vmatprep.mubr.f32.mxu0 0.0
        %921 = vmatmul.mubr.f32.gmra.mxu0 %v793
        %v922 = vpop.f32.mrf.mxu0
        %v923 = vadd.f32 0.0, %v922
        %v924 = vpop.f32.mrf.mxu0
        %v925 = vadd.f32 0.0, %v924
        %926 = vmatprep.mubr.f32.mxu0 0.0
        %927 = vmatmul.mubr.f32.gmra.mxu0 %v796
        %v928 = vpop.f32.mrf.mxu0
        %v929 = vadd.f32 0.0, %v928
        %v930 = vpop.f32.mrf.mxu0
        %v931 = vadd.f32 0.0, %v930
        %932 = vmatprep.mubr.f32.mxu0 0.0
        %933 = vmatmul.mubr.f32.gmra.mxu0 %v799
        %v934 = vpop.f32.mrf.mxu0
        %v935 = vadd.f32 0.0, %v934
        %v936 = vpop.f32.mrf.mxu0
        %v937 = vadd.f32 0.0, %v936
        %938 = vmatprep.mubr.f32.mxu0 0.0
        %939 = vmatmul.mubr.f32.gmra.mxu0 %v802
        %v940 = vpop.f32.mrf.mxu0
        %v941 = vadd.f32 0.0, %v940
        %v942 = vpop.f32.mrf.mxu0
        %v943 = vadd.f32 0.0, %v942
        %944 = vmatprep.mubr.f32.mxu0 0.0
        %945 = vmatmul.mubr.f32.gmra.mxu0 %v805
        %v946 = vpop.f32.mrf.mxu0
        %v947 = vadd.f32 0.0, %v946
        %v948 = vpop.f32.mrf.mxu0
        %v949 = vadd.f32 0.0, %v948
        %950 = vmatprep.mubr.f32.mxu0 0.0
        %951 = vmatmul.mubr.f32.gmra.mxu0 %v808
        %v952 = vpop.f32.mrf.mxu0
        %v953 = vadd.f32 0.0, %v952
        %v954 = vpop.f32.mrf.mxu0
        %v955 = vadd.f32 0.0, %v954
        %956 = vmatprep.mubr.f32.mxu0 0.0
        %957 = vmatmul.mubr.f32.gmra.mxu0 %v811
        %v958 = vpop.f32.mrf.mxu0
        %v959 = vadd.f32 0.0, %v958
        %v960 = vpop.f32.mrf.mxu0
        %v961 = vadd.f32 0.0, %v960
        %962 = vmatprep.mubr.f32.mxu0 0.0
        %963 = vmatmul.mubr.f32.gmra.mxu0 %v814
        %v964 = vpop.f32.mrf.mxu0
        %v965 = vadd.f32 0.0, %v964
        %v966 = vpop.f32.mrf.mxu0
        %v967 = vadd.f32 0.0, %v966
        %968 = vmatprep.mubr.f32.mxu0 0.0
        %969 = vmatmul.mubr.f32.gmra.mxu0 %v817
        %v970 = vpop.f32.mrf.mxu0
        %v971 = vadd.f32 0.0, %v970
        %v972 = vpop.f32.mrf.mxu0
        %v973 = vadd.f32 0.0, %v972
        %974 = vmatprep.mubr.f32.mxu0 0.0
        %975 = vmatmul.mubr.f32.gmra.mxu0 %v820
        %v976 = vpop.f32.mrf.mxu0
        %v977 = vadd.f32 0.0, %v976
        %v978 = vpop.f32.mrf.mxu0
        %v979 = vadd.f32 0.0, %v978
        %980 = vmatprep.mubr.f32.mxu0 0.0
        %981 = vmatmul.mubr.f32.gmra.mxu0 %v823
        %v982 = vpop.f32.mrf.mxu0
        %v983 = vadd.f32 0.0, %v982
        %v984 = vpop.f32.mrf.mxu0
        %v985 = vadd.f32 0.0, %v984
        %986 = vmatprep.mubr.f32.mxu0 0.0
        %987 = vmatmul.mubr.f32.gmra.mxu0 %v826
        %v988 = vpop.f32.mrf.mxu0
        %v989 = vadd.f32 0.0, %v988
        %v990 = vpop.f32.mrf.mxu0
        %v991 = vadd.f32 0.0, %v990
        %992 = vmatprep.mubr.f32.mxu0 0.0
        %993 = vmatmul.mubr.f32.gmra.mxu0 %v829
        %v994 = vpop.f32.mrf.mxu0
        %v995 = vadd.f32 0.0, %v994
        %v996 = vpop.f32.mrf.mxu0
        %v997 = vadd.f32 0.0, %v996
        %998 = vmatprep.mubr.f32.mxu0 0.0
        %999 = vmatmul.mubr.f32.gmra.mxu0 %v832
        %v1000 = vpop.f32.mrf.mxu0
        %v1001 = vadd.f32 0.0, %v1000
        %v1002 = vpop.f32.mrf.mxu0
        %v1003 = vadd.f32 0.0, %v1002
        %1004 = vmatprep.mubr.f32.mxu0 0.0
        %1005 = vmatmul.mubr.f32.gmra.mxu0 %v835
        %v1006 = vpop.f32.mrf.mxu0
        %v1007 = vadd.f32 0.0, %v1006
        %v1008 = vpop.f32.mrf.mxu0
        %v1009 = vadd.f32 0.0, %v1008
        %1010 = vdwg.mxu0
        %1011 = vmatprep.subr.mxu0 0.0
        %1012 = vmatpush1.msra.mxu0 0.0
        %1013 = vmatprep.subr.mxu0 0.0
        %1014 = vmatpush1.msra.mxu0 0.0
        %1015 = vmatprep.subr.mxu0 0.0
        %1016 = vmatpush1.msra.mxu0 0.0
        %1017 = vmatprep.subr.mxu0 0.0
        %1018 = vmatpush1.msra.mxu0 0.0
        %1019 = vmatprep.subr.mxu0 0.0
        %1020 = vmatpush1.msra.mxu0 0.0
        %1021 = vmatprep.subr.mxu0 0.0
        %1022 = vmatpush1.msra.mxu0 0.0
        %1023 = vmatprep.subr.mxu0 0.0
        %1024 = vmatpush1.msra.mxu0 0.0
        %1025 = vmatprep.subr.mxu0 0.0
        %1026 = vmatpush1.msra.mxu0 0.0
        %1027 = vmatprep.subr.mxu0 0.0
        %1028 = vmatpush1.msra.mxu0 0.0
        %1029 = vmatprep.subr.mxu0 0.0
        %1030 = vmatpush1.msra.mxu0 0.0
        %1031 = vmatprep.subr.mxu0 0.0
        %1032 = vmatpush1.msra.mxu0 0.0
        %1033 = vmatprep.subr.mxu0 0.0
        %1034 = vmatpush1.msra.mxu0 0.0
        %1035 = vmatprep.subr.mxu0 %v848
        %1036 = vmatpush1.msra.mxu0 %v845
        %1037 = vmatprep.subr.mxu0 %v783
        %1038 = vmatpush1.msra.mxu0 %v782
        %1039 = vmatprep.subr.mxu0 %v779
        %1040 = vmatpush1.msra.mxu0 %v778
        %1041 = vmatprep.subr.mxu0 %v775
        %1042 = vmatpush1.msra.mxu0 %v774
        %1043 = vmatprep.subr.mxu0 0.0
        %1044 = vmatpush2.msra.mxu0 0.0
        %1045 = vmatprep.subr.mxu0 0.0
        %1046 = vmatpush2.msra.mxu0 0.0
        %1047 = vmatprep.subr.mxu0 0.0
        %1048 = vmatpush2.msra.mxu0 0.0
        %1049 = vmatprep.subr.mxu0 0.0
        %1050 = vmatpush2.msra.mxu0 0.0
        %1051 = vmatprep.subr.mxu0 0.0
        %1052 = vmatpush2.msra.mxu0 0.0
        %1053 = vmatprep.subr.mxu0 0.0
        %1054 = vmatpush2.msra.mxu0 0.0
        %1055 = vmatprep.subr.mxu0 0.0
        %1056 = vmatpush2.msra.mxu0 0.0
        %1057 = vmatprep.subr.mxu0 0.0
        %1058 = vmatpush2.msra.mxu0 0.0
        %1059 = vmatprep.subr.mxu0 0.0
        %1060 = vmatpush2.msra.mxu0 0.0
        %1061 = vmatprep.subr.mxu0 0.0
        %1062 = vmatpush2.msra.mxu0 0.0
        %1063 = vmatprep.subr.mxu0 0.0
        %1064 = vmatpush2.msra.mxu0 0.0
        %1065 = vmatprep.subr.mxu0 0.0
        %1066 = vmatpush2.msra.mxu0 0.0
        %1067 = vmatprep.subr.mxu0 0.0
        %1068 = vmatpush2.msra.mxu0 0.0
        %1069 = vmatprep.subr.mxu0 0.0
        %1070 = vmatpush2.msra.mxu0 0.0
        %1071 = vmatprep.subr.mxu0 0.0
        %1072 = vmatpush2.msra.mxu0 0.0
        %1073 = vmatprep.subr.mxu0 0.0
        %1074 = vmatpush2.msra.mxu0 0.0
        %1075 = vmatprep.mubr.f32.mxu0 0.0
        %1076 = vmatmul.mubr.f32.gmra.mxu0 %v790
        %v1077 = vpop.f32.mrf.mxu0
        %v1078 = vadd.f32 0.0, %v1077
        %v1079 = vpop.f32.mrf.mxu0
        %v1080 = vadd.f32 0.0, %v1079
        %1081 = vmatprep.mubr.f32.mxu0 0.0
        %1082 = vmatmul.mubr.f32.gmra.mxu0 %v793
        %v1083 = vpop.f32.mrf.mxu0
        %v1084 = vadd.f32 0.0, %v1083
        %v1085 = vpop.f32.mrf.mxu0
        %v1086 = vadd.f32 0.0, %v1085
        %1087 = vmatprep.mubr.f32.mxu0 0.0
        %1088 = vmatmul.mubr.f32.gmra.mxu0 %v796
        %v1089 = vpop.f32.mrf.mxu0
        %v1090 = vadd.f32 0.0, %v1089
        %v1091 = vpop.f32.mrf.mxu0
        %v1092 = vadd.f32 0.0, %v1091
        %1093 = vmatprep.mubr.f32.mxu0 0.0
        %1094 = vmatmul.mubr.f32.gmra.mxu0 %v799
        %v1095 = vpop.f32.mrf.mxu0
        %v1096 = vadd.f32 0.0, %v1095
        %v1097 = vpop.f32.mrf.mxu0
        %v1098 = vadd.f32 0.0, %v1097
        %1099 = vmatprep.mubr.f32.mxu0 0.0
        %1100 = vmatmul.mubr.f32.gmra.mxu0 %v802
        %v1101 = vpop.f32.mrf.mxu0
        %v1102 = vadd.f32 0.0, %v1101
        %v1103 = vpop.f32.mrf.mxu0
        %v1104 = vadd.f32 0.0, %v1103
        %1105 = vmatprep.mubr.f32.mxu0 0.0
        %1106 = vmatmul.mubr.f32.gmra.mxu0 %v805
        %v1107 = vpop.f32.mrf.mxu0
        %v1108 = vadd.f32 0.0, %v1107
        %v1109 = vpop.f32.mrf.mxu0
        %v1110 = vadd.f32 0.0, %v1109
        %1111 = vmatprep.mubr.f32.mxu0 0.0
        %1112 = vmatmul.mubr.f32.gmra.mxu0 %v808
        %v1113 = vpop.f32.mrf.mxu0
        %v1114 = vadd.f32 0.0, %v1113
        %v1115 = vpop.f32.mrf.mxu0
        %v1116 = vadd.f32 0.0, %v1115
        %1117 = vmatprep.mubr.f32.mxu0 0.0
        %1118 = vmatmul.mubr.f32.gmra.mxu0 %v811
        %v1119 = vpop.f32.mrf.mxu0
        %v1120 = vadd.f32 0.0, %v1119
        %v1121 = vpop.f32.mrf.mxu0
        %v1122 = vadd.f32 0.0, %v1121
        %1123 = vmatprep.mubr.f32.mxu0 0.0
        %1124 = vmatmul.mubr.f32.gmra.mxu0 %v814
        %v1125 = vpop.f32.mrf.mxu0
        %v1126 = vadd.f32 0.0, %v1125
        %v1127 = vpop.f32.mrf.mxu0
        %v1128 = vadd.f32 0.0, %v1127
        %1129 = vmatprep.mubr.f32.mxu0 0.0
        %1130 = vmatmul.mubr.f32.gmra.mxu0 %v817
        %v1131 = vpop.f32.mrf.mxu0
        %v1132 = vadd.f32 0.0, %v1131
        %v1133 = vpop.f32.mrf.mxu0
        %v1134 = vadd.f32 0.0, %v1133
        %1135 = vmatprep.mubr.f32.mxu0 0.0
        %1136 = vmatmul.mubr.f32.gmra.mxu0 %v820
        %v1137 = vpop.f32.mrf.mxu0
        %v1138 = vadd.f32 0.0, %v1137
        %v1139 = vpop.f32.mrf.mxu0
        %v1140 = vadd.f32 0.0, %v1139
        %1141 = vmatprep.mubr.f32.mxu0 0.0
        %1142 = vmatmul.mubr.f32.gmra.mxu0 %v823
        %v1143 = vpop.f32.mrf.mxu0
        %v1144 = vadd.f32 0.0, %v1143
        %v1145 = vpop.f32.mrf.mxu0
        %v1146 = vadd.f32 0.0, %v1145
        %1147 = vmatprep.mubr.f32.mxu0 0.0
        %1148 = vmatmul.mubr.f32.gmra.mxu0 %v826
        %v1149 = vpop.f32.mrf.mxu0
        %v1150 = vadd.f32 0.0, %v1149
        %v1151 = vpop.f32.mrf.mxu0
        %v1152 = vadd.f32 0.0, %v1151
        %1153 = vmatprep.mubr.f32.mxu0 0.0
        %1154 = vmatmul.mubr.f32.gmra.mxu0 %v829
        %v1155 = vpop.f32.mrf.mxu0
        %v1156 = vadd.f32 0.0, %v1155
        %v1157 = vpop.f32.mrf.mxu0
        %v1158 = vadd.f32 0.0, %v1157
        %1159 = vmatprep.mubr.f32.mxu0 0.0
        %1160 = vmatmul.mubr.f32.gmra.mxu0 %v832
        %v1161 = vpop.f32.mrf.mxu0
        %v1162 = vadd.f32 0.0, %v1161
        %v1163 = vpop.f32.mrf.mxu0
        %v1164 = vadd.f32 0.0, %v1163
        %1165 = vmatprep.mubr.f32.mxu0 0.0
        %1166 = vmatmul.mubr.f32.gmra.mxu0 %v835
        %v1167 = vpop.f32.mrf.mxu0
        %v1168 = vadd.f32 0.0, %v1167
        %v1169 = vpop.f32.mrf.mxu0
        %v1170 = vadd.f32 0.0, %v1169
        %1171 = vdwg.mxu0
        %1172 = vset.pattern.permute.xlu0 0
        %1173 = vperm.xlu0 %1172, %v242
        %v1174 = vpop.permute.xlu0 %1173
        %1176 = vset.pattern.permute.xlu0 0
        %1177 = vperm.xlu0 %1176, %v243
        %v1178 = vpop.permute.xlu0 %1177
        %1180 = vset.pattern.permute.xlu0 0
        %1181 = vperm.xlu0 %1180, %v244
        %v1182 = vpop.permute.xlu0 %1181
        %1184 = vset.pattern.permute.xlu0 0
        %1185 = vperm.xlu0 %1184, %v245
        %v1186 = vpop.permute.xlu0 %1185
        %1188 = vset.pattern.permute.xlu0 0
        %1189 = vperm.xlu0 %1188, %v246
        %v1190 = vpop.permute.xlu0 %1189
        %1192 = vset.pattern.permute.xlu0 0
        %1193 = vperm.xlu0 %1192, %v247
        %v1194 = vpop.permute.xlu0 %1193
        %1196 = vset.pattern.permute.xlu0 0
        %1197 = vperm.xlu0 %1196, %v248
        %v1198 = vpop.permute.xlu0 %1197
        %1200 = vset.pattern.permute.xlu0 0
        %1201 = vperm.xlu0 %1200, %v249
        %v1202 = vpop.permute.xlu0 %1201
        %1204 = vset.pattern.permute.xlu0 0
        %1205 = vperm.xlu0 %1204, %v250
        %v1206 = vpop.permute.xlu0 %1205
        %1208 = vset.pattern.permute.xlu0 0
        %1209 = vperm.xlu0 %1208, %v251
        %v1210 = vpop.permute.xlu0 %1209
        %1212 = vset.pattern.permute.xlu0 0
        %1213 = vperm.xlu0 %1212, %v252
        %v1214 = vpop.permute.xlu0 %1213
        %1216 = vset.pattern.permute.xlu0 0
        %1217 = vperm.xlu0 %1216, %v253
        %v1218 = vpop.permute.xlu0 %1217
        %1220 = vset.pattern.permute.xlu0 0
        %1221 = vperm.xlu0 %1220, %v254
        %v1222 = vpop.permute.xlu0 %1221
        %1224 = vset.pattern.permute.xlu0 0
        %1225 = vperm.xlu0 %1224, %v255
        %v1226 = vpop.permute.xlu0 %1225
        %1228 = vset.pattern.permute.xlu0 0
        %1229 = vperm.xlu0 %1228, %v256
        %v1230 = vpop.permute.xlu0 %1229
        %1232 = vset.pattern.permute.xlu0 0
        %1233 = vperm.xlu0 %1232, %v257
        %v1234 = vpop.permute.xlu0 %1233
        %v1236 = vmul.f32 %v1174, %v917
        %v1237 = vmul.f32 %v1178, %v923
        %v1238 = vmul.f32 %v1182, %v929
        %v1239 = vmul.f32 %v1186, %v935
        %v1240 = vmul.f32 %v1190, %v941
        %v1241 = vmul.f32 %v1194, %v947
        %v1242 = vmul.f32 %v1198, %v953
        %v1243 = vmul.f32 %v1202, %v959
        %v1244 = vmul.f32 %v1206, %v965
        %v1245 = vmul.f32 %v1210, %v971
        %v1246 = vmul.f32 %v1214, %v977
        %v1247 = vmul.f32 %v1218, %v983
        %v1248 = vmul.f32 %v1222, %v989
        %v1249 = vmul.f32 %v1226, %v995
        %v1250 = vmul.f32 %v1230, %v1001
        %v1251 = vmul.f32 %v1234, %v1007
        %1252 = vset.pattern.permute.xlu0 1
        %1253 = vperm.xlu0 %1252, %v242
        %v1254 = vpop.permute.xlu0 %1253
        %1256 = vset.pattern.permute.xlu0 1
        %1257 = vperm.xlu0 %1256, %v243
        %v1258 = vpop.permute.xlu0 %1257
        %1260 = vset.pattern.permute.xlu0 1
        %1261 = vperm.xlu0 %1260, %v244
        %v1262 = vpop.permute.xlu0 %1261
        %1264 = vset.pattern.permute.xlu0 1
        %1265 = vperm.xlu0 %1264, %v245
        %v1266 = vpop.permute.xlu0 %1265
        %1268 = vset.pattern.permute.xlu0 1
        %1269 = vperm.xlu0 %1268, %v246
        %v1270 = vpop.permute.xlu0 %1269
        %1272 = vset.pattern.permute.xlu0 1
        %1273 = vperm.xlu0 %1272, %v247
        %v1274 = vpop.permute.xlu0 %1273
        %1276 = vset.pattern.permute.xlu0 1
        %1277 = vperm.xlu0 %1276, %v248
        %v1278 = vpop.permute.xlu0 %1277
        %1280 = vset.pattern.permute.xlu0 1
        %1281 = vperm.xlu0 %1280, %v249
        %v1282 = vpop.permute.xlu0 %1281
        %1284 = vset.pattern.permute.xlu0 1
        %1285 = vperm.xlu0 %1284, %v250
        %v1286 = vpop.permute.xlu0 %1285
        %1288 = vset.pattern.permute.xlu0 1
        %1289 = vperm.xlu0 %1288, %v251
        %v1290 = vpop.permute.xlu0 %1289
        %1292 = vset.pattern.permute.xlu0 1
        %1293 = vperm.xlu0 %1292, %v252
        %v1294 = vpop.permute.xlu0 %1293
        %1296 = vset.pattern.permute.xlu0 1
        %1297 = vperm.xlu0 %1296, %v253
        %v1298 = vpop.permute.xlu0 %1297
        %1300 = vset.pattern.permute.xlu0 1
        %1301 = vperm.xlu0 %1300, %v254
        %v1302 = vpop.permute.xlu0 %1301
        %1304 = vset.pattern.permute.xlu0 1
        %1305 = vperm.xlu0 %1304, %v255
        %v1306 = vpop.permute.xlu0 %1305
        %1308 = vset.pattern.permute.xlu0 1
        %1309 = vperm.xlu0 %1308, %v256
        %v1310 = vpop.permute.xlu0 %1309
        %1312 = vset.pattern.permute.xlu0 1
        %1313 = vperm.xlu0 %1312, %v257
        %v1314 = vpop.permute.xlu0 %1313
        %v1316 = vmul.f32 %v1254, %v919
        %v1317 = vmul.f32 %v1258, %v925
        %v1318 = vmul.f32 %v1262, %v931
        %v1319 = vmul.f32 %v1266, %v937
        %v1320 = vmul.f32 %v1270, %v943
        %v1321 = vmul.f32 %v1274, %v949
        %v1322 = vmul.f32 %v1278, %v955
        %v1323 = vmul.f32 %v1282, %v961
        %v1324 = vmul.f32 %v1286, %v967
        %v1325 = vmul.f32 %v1290, %v973
        %v1326 = vmul.f32 %v1294, %v979
        %v1327 = vmul.f32 %v1298, %v985
        %v1328 = vmul.f32 %v1302, %v991
        %v1329 = vmul.f32 %v1306, %v997
        %v1330 = vmul.f32 %v1310, %v1003
        %v1331 = vmul.f32 %v1314, %v1009
        %v1332 = vadd.f32 %v1236, %v1316
        %v1333 = vadd.f32 %v1237, %v1317
        %v1334 = vadd.f32 %v1238, %v1318
        %v1335 = vadd.f32 %v1239, %v1319
        %v1336 = vadd.f32 %v1240, %v1320
        %v1337 = vadd.f32 %v1241, %v1321
        %v1338 = vadd.f32 %v1242, %v1322
        %v1339 = vadd.f32 %v1243, %v1323
        %v1340 = vadd.f32 %v1244, %v1324
        %v1341 = vadd.f32 %v1245, %v1325
        %v1342 = vadd.f32 %v1246, %v1326
        %v1343 = vadd.f32 %v1247, %v1327
        %v1344 = vadd.f32 %v1248, %v1328
        %v1345 = vadd.f32 %v1249, %v1329
        %v1346 = vadd.f32 %v1250, %v1330
        %v1347 = vadd.f32 %v1251, %v1331
        %1348 = vset.pattern.permute.xlu0 2
        %1349 = vperm.xlu0 %1348, %v242
        %v1350 = vpop.permute.xlu0 %1349
        %1352 = vset.pattern.permute.xlu0 2
        %1353 = vperm.xlu0 %1352, %v243
        %v1354 = vpop.permute.xlu0 %1353
        %1356 = vset.pattern.permute.xlu0 2
        %1357 = vperm.xlu0 %1356, %v244
        %v1358 = vpop.permute.xlu0 %1357
        %1360 = vset.pattern.permute.xlu0 2
        %1361 = vperm.xlu0 %1360, %v245
        %v1362 = vpop.permute.xlu0 %1361
        %1364 = vset.pattern.permute.xlu0 2
        %1365 = vperm.xlu0 %1364, %v246
        %v1366 = vpop.permute.xlu0 %1365
        %1368 = vset.pattern.permute.xlu0 2
        %1369 = vperm.xlu0 %1368, %v247
        %v1370 = vpop.permute.xlu0 %1369
        %1372 = vset.pattern.permute.xlu0 2
        %1373 = vperm.xlu0 %1372, %v248
        %v1374 = vpop.permute.xlu0 %1373
        %1376 = vset.pattern.permute.xlu0 2
        %1377 = vperm.xlu0 %1376, %v249
        %v1378 = vpop.permute.xlu0 %1377
        %1380 = vset.pattern.permute.xlu0 2
        %1381 = vperm.xlu0 %1380, %v250
        %v1382 = vpop.permute.xlu0 %1381
        %1384 = vset.pattern.permute.xlu0 2
        %1385 = vperm.xlu0 %1384, %v251
        %v1386 = vpop.permute.xlu0 %1385
        %1388 = vset.pattern.permute.xlu0 2
        %1389 = vperm.xlu0 %1388, %v252
        %v1390 = vpop.permute.xlu0 %1389
        %1392 = vset.pattern.permute.xlu0 2
        %1393 = vperm.xlu0 %1392, %v253
        %v1394 = vpop.permute.xlu0 %1393
        %1396 = vset.pattern.permute.xlu0 2
        %1397 = vperm.xlu0 %1396, %v254
        %v1398 = vpop.permute.xlu0 %1397
        %1400 = vset.pattern.permute.xlu0 2
        %1401 = vperm.xlu0 %1400, %v255
        %v1402 = vpop.permute.xlu0 %1401
        %1404 = vset.pattern.permute.xlu0 2
        %1405 = vperm.xlu0 %1404, %v256
        %v1406 = vpop.permute.xlu0 %1405
        %1408 = vset.pattern.permute.xlu0 2
        %1409 = vperm.xlu0 %1408, %v257
        %v1410 = vpop.permute.xlu0 %1409
        %v1412 = vmul.f32 %v1350, %v1078
        %v1413 = vmul.f32 %v1354, %v1084
        %v1414 = vmul.f32 %v1358, %v1090
        %v1415 = vmul.f32 %v1362, %v1096
        %v1416 = vmul.f32 %v1366, %v1102
        %v1417 = vmul.f32 %v1370, %v1108
        %v1418 = vmul.f32 %v1374, %v1114
        %v1419 = vmul.f32 %v1378, %v1120
        %v1420 = vmul.f32 %v1382, %v1126
        %v1421 = vmul.f32 %v1386, %v1132
        %v1422 = vmul.f32 %v1390, %v1138
        %v1423 = vmul.f32 %v1394, %v1144
        %v1424 = vmul.f32 %v1398, %v1150
        %v1425 = vmul.f32 %v1402, %v1156
        %v1426 = vmul.f32 %v1406, %v1162
        %v1427 = vmul.f32 %v1410, %v1168
        %v1428 = vadd.f32 %v1332, %v1412
        %v1429 = vadd.f32 %v1333, %v1413
        %v1430 = vadd.f32 %v1334, %v1414
        %v1431 = vadd.f32 %v1335, %v1415
        %v1432 = vadd.f32 %v1336, %v1416
        %v1433 = vadd.f32 %v1337, %v1417
        %v1434 = vadd.f32 %v1338, %v1418
        %v1435 = vadd.f32 %v1339, %v1419
        %v1436 = vadd.f32 %v1340, %v1420
        %v1437 = vadd.f32 %v1341, %v1421
        %v1438 = vadd.f32 %v1342, %v1422
        %v1439 = vadd.f32 %v1343, %v1423
        %v1440 = vadd.f32 %v1344, %v1424
        %v1441 = vadd.f32 %v1345, %v1425
        %v1442 = vadd.f32 %v1346, %v1426
        %v1443 = vadd.f32 %v1347, %v1427
        %1444 = vset.pattern.permute.xlu0 3
        %1445 = vperm.xlu0 %1444, %v242
        %v1446 = vpop.permute.xlu0 %1445
        %1448 = vset.pattern.permute.xlu0 3
        %1449 = vperm.xlu0 %1448, %v243
        %v1450 = vpop.permute.xlu0 %1449
        %1452 = vset.pattern.permute.xlu0 3
        %1453 = vperm.xlu0 %1452, %v244
        %v1454 = vpop.permute.xlu0 %1453
        %1456 = vset.pattern.permute.xlu0 3
        %1457 = vperm.xlu0 %1456, %v245
        %v1458 = vpop.permute.xlu0 %1457
        %1460 = vset.pattern.permute.xlu0 3
        %1461 = vperm.xlu0 %1460, %v246
        %v1462 = vpop.permute.xlu0 %1461
        %1464 = vset.pattern.permute.xlu0 3
        %1465 = vperm.xlu0 %1464, %v247
        %v1466 = vpop.permute.xlu0 %1465
        %1468 = vset.pattern.permute.xlu0 3
        %1469 = vperm.xlu0 %1468, %v248
        %v1470 = vpop.permute.xlu0 %1469
        %1472 = vset.pattern.permute.xlu0 3
        %1473 = vperm.xlu0 %1472, %v249
        %v1474 = vpop.permute.xlu0 %1473
        %1476 = vset.pattern.permute.xlu0 3
        %1477 = vperm.xlu0 %1476, %v250
        %v1478 = vpop.permute.xlu0 %1477
        %1480 = vset.pattern.permute.xlu0 3
        %1481 = vperm.xlu0 %1480, %v251
        %v1482 = vpop.permute.xlu0 %1481
        %1484 = vset.pattern.permute.xlu0 3
        %1485 = vperm.xlu0 %1484, %v252
        %v1486 = vpop.permute.xlu0 %1485
        %1488 = vset.pattern.permute.xlu0 3
        %1489 = vperm.xlu0 %1488, %v253
        %v1490 = vpop.permute.xlu0 %1489
        %1492 = vset.pattern.permute.xlu0 3
        %1493 = vperm.xlu0 %1492, %v254
        %v1494 = vpop.permute.xlu0 %1493
        %1496 = vset.pattern.permute.xlu0 3
        %1497 = vperm.xlu0 %1496, %v255
        %v1498 = vpop.permute.xlu0 %1497
        %1500 = vset.pattern.permute.xlu0 3
        %1501 = vperm.xlu0 %1500, %v256
        %v1502 = vpop.permute.xlu0 %1501
        %1504 = vset.pattern.permute.xlu0 3
        %1505 = vperm.xlu0 %1504, %v257
        %v1506 = vpop.permute.xlu0 %1505
        %v1508 = vmul.f32 %v1446, %v1080
        %v1509 = vmul.f32 %v1450, %v1086
        %v1510 = vmul.f32 %v1454, %v1092
        %v1511 = vmul.f32 %v1458, %v1098
        %v1512 = vmul.f32 %v1462, %v1104
        %v1513 = vmul.f32 %v1466, %v1110
        %v1514 = vmul.f32 %v1470, %v1116
        %v1515 = vmul.f32 %v1474, %v1122
        %v1516 = vmul.f32 %v1478, %v1128
        %v1517 = vmul.f32 %v1482, %v1134
        %v1518 = vmul.f32 %v1486, %v1140
        %v1519 = vmul.f32 %v1490, %v1146
        %v1520 = vmul.f32 %v1494, %v1152
        %v1521 = vmul.f32 %v1498, %v1158
        %v1522 = vmul.f32 %v1502, %v1164
        %v1523 = vmul.f32 %v1506, %v1170
        %v1524 = vadd.f32 %v1428, %v1508
        %v1525 = vadd.f32 %v1429, %v1509
        %v1526 = vadd.f32 %v1430, %v1510
        %v1527 = vadd.f32 %v1431, %v1511
        %v1528 = vadd.f32 %v1432, %v1512
        %v1529 = vadd.f32 %v1433, %v1513
        %v1530 = vadd.f32 %v1434, %v1514
        %v1531 = vadd.f32 %v1435, %v1515
        %v1532 = vadd.f32 %v1436, %v1516
        %v1533 = vadd.f32 %v1437, %v1517
        %v1534 = vadd.f32 %v1438, %v1518
        %v1535 = vadd.f32 %v1439, %v1519
        %v1536 = vadd.f32 %v1440, %v1520
        %v1537 = vadd.f32 %v1441, %v1521
        %v1538 = vadd.f32 %v1442, %v1522
        %v1539 = vadd.f32 %v1443, %v1523
        %v1540 = vadd.f32 %v1524, %v550
        %v1541 = vadd.f32 %v1525, %v556
        %v1542 = vadd.f32 %v1526, %v562
        %v1543 = vadd.f32 %v1527, %v568
        %v1544 = vadd.f32 %v1528, %v574
        %v1545 = vadd.f32 %v1529, %v580
        %v1546 = vadd.f32 %v1530, %v586
        %v1547 = vadd.f32 %v1531, %v592
        %v1548 = vadd.f32 %v1532, %v598
        %v1549 = vadd.f32 %v1533, %v604
        %v1550 = vadd.f32 %v1534, %v610
        %v1551 = vadd.f32 %v1535, %v616
        %v1552 = vadd.f32 %v1536, %v622
        %v1553 = vadd.f32 %v1537, %v628
        %v1554 = vadd.f32 %v1538, %v634
        %v1555 = vadd.f32 %v1539, %v640
        %v1556 = vtanh.pop %v1540
        %v1557 = vtanh.pop %v1541
        %v1558 = vtanh.pop %v1542
        %v1559 = vtanh.pop %v1543
        %v1560 = vtanh.pop %v1544
        %v1561 = vtanh.pop %v1545
        %v1562 = vtanh.pop %v1546
        %v1563 = vtanh.pop %v1547
        %v1564 = vtanh.pop %v1548
        %v1565 = vtanh.pop %v1549
        %v1566 = vtanh.pop %v1550
        %v1567 = vtanh.pop %v1551
        %v1568 = vtanh.pop %v1552
        %v1569 = vtanh.pop %v1553
        %v1570 = vtanh.pop %v1554
        %v1571 = vtanh.pop %v1555
        %1572 = vrot.lane.b32.xlu0 %v756, 25
        %v1573 = vpop.permute.xlu0 %1572
        %1574 = vrot.lane.b32.xlu0 %v757, 25
        %v1575 = vpop.permute.xlu0 %1574
        %1576 = vrot.lane.b32.xlu0 %v758, 25
        %v1577 = vpop.permute.xlu0 %1576
        %1578 = vrot.lane.b32.xlu0 %v759, 25
        %v1579 = vpop.permute.xlu0 %1578
        %1580 = vrot.lane.b32.xlu0 %v760, 25
        %v1581 = vpop.permute.xlu0 %1580
        %1582 = vrot.lane.b32.xlu0 %v761, 25
        %v1583 = vpop.permute.xlu0 %1582
        %1584 = vrot.lane.b32.xlu0 %v762, 25
        %v1585 = vpop.permute.xlu0 %1584
        %1586 = vrot.lane.b32.xlu0 %v763, 25
        %v1587 = vpop.permute.xlu0 %1586
        %1588 = vrot.lane.b32.xlu0 %v764, 25
        %v1589 = vpop.permute.xlu0 %1588
        %1590 = vrot.lane.b32.xlu0 %v765, 25
        %v1591 = vpop.permute.xlu0 %1590
        %1592 = vrot.lane.b32.xlu0 %v766, 25
        %v1593 = vpop.permute.xlu0 %1592
        %1594 = vrot.lane.b32.xlu0 %v767, 25
        %v1595 = vpop.permute.xlu0 %1594
        %1596 = vrot.lane.b32.xlu0 %v768, 25
        %v1597 = vpop.permute.xlu0 %1596
        %1598 = vrot.lane.b32.xlu0 %v769, 25
        %v1599 = vpop.permute.xlu0 %1598
        %1600 = vrot.lane.b32.xlu0 %v770, 25
        %v1601 = vpop.permute.xlu0 %1600
        %1602 = vrot.lane.b32.xlu0 %v771, 25
        %v1603 = vpop.permute.xlu0 %1602
        %v1620 = vsel %vm788, %v756, %v1573
        %v1621 = vsel %vm788, %v757, %v1575
        %v1622 = vsel %vm788, %v758, %v1577
        %v1623 = vsel %vm788, %v759, %v1579
        %v1624 = vsel %vm788, %v760, %v1581
        %v1625 = vsel %vm788, %v761, %v1583
        %v1626 = vsel %vm788, %v762, %v1585
        %v1627 = vsel %vm788, %v763, %v1587
        %v1628 = vsel %vm788, %v764, %v1589
        %v1629 = vsel %vm788, %v765, %v1591
        %v1630 = vsel %vm788, %v766, %v1593
        %v1631 = vsel %vm788, %v767, %v1595
        %v1632 = vsel %vm788, %v768, %v1597
        %v1633 = vsel %vm788, %v769, %v1599
        %v1634 = vsel %vm788, %v770, %v1601
        %v1635 = vsel %vm788, %v771, %v1603
        %v1636 = vadd.f32 %v1556, %v1620
        %v1637 = vadd.f32 %v1557, %v1621
        %v1638 = vadd.f32 %v1558, %v1622
        %v1639 = vadd.f32 %v1559, %v1623
        %v1640 = vadd.f32 %v1560, %v1624
        %v1641 = vadd.f32 %v1561, %v1625
        %v1642 = vadd.f32 %v1562, %v1626
        %v1643 = vadd.f32 %v1563, %v1627
        %v1644 = vadd.f32 %v1564, %v1628
        %v1645 = vadd.f32 %v1565, %v1629
        %v1646 = vadd.f32 %v1566, %v1630
        %v1647 = vadd.f32 %v1567, %v1631
        %v1648 = vadd.f32 %v1568, %v1632
        %v1649 = vadd.f32 %v1569, %v1633
        %v1650 = vadd.f32 %v1570, %v1634
        %v1651 = vadd.f32 %v1571, %v1635
        %v1652 = vld [vmem:[%s4] sm:$0xff]
        %v1653 = vld [vmem:[%s4 + $0x8] sm:$0xff]
        %v1654 = vld [vmem:[%s4 + $0x10] sm:$0xff]
        %v1655 = vld [vmem:[%s4 + $0x18] sm:$0xff]
        %v1656 = vld [vmem:[%s4 + $0x20] sm:$0xff]
        %v1657 = vld [vmem:[%s4 + $0x28] sm:$0xff]
        %v1658 = vld [vmem:[%s4 + $0x30] sm:$0xff]
        %v1659 = vld [vmem:[%s4 + $0x38] sm:$0xff]
        %v1660 = vld [vmem:[%s4 + $0x40] sm:$0xff]
        %v1661 = vld [vmem:[%s4 + $0x48] sm:$0xff]
        %v1662 = vld [vmem:[%s4 + $0x50] sm:$0xff]
        %v1663 = vld [vmem:[%s4 + $0x58] sm:$0xff]
        %v1664 = vld [vmem:[%s4 + $0x60] sm:$0xff]
        %v1665 = vld [vmem:[%s4 + $0x68] sm:$0xff]
        %v1666 = vld [vmem:[%s4 + $0x70] sm:$0xff]
        %v1667 = vld [vmem:[%s4 + $0x78] sm:$0xff]
        %v1668 = vld [vmem:[%s4 + $0x80] sm:$0xff]
        %v1669 = vld [vmem:[%s4 + $0x88] sm:$0xff]
        %v1670 = vld [vmem:[%s4 + $0x90] sm:$0xff]
        %v1671 = vld [vmem:[%s4 + $0x98] sm:$0xff]
        %v1672 = vld [vmem:[%s4 + $0xa0] sm:$0xff]
        %v1673 = vld [vmem:[%s4 + $0xa8] sm:$0xff]
        %v1674 = vld [vmem:[%s4 + $0xb0] sm:$0xff]
        %v1675 = vld [vmem:[%s4 + $0xb8] sm:$0xff]
        %v1676 = vld [vmem:[%s4 + $0xc0] sm:$0x3]
        %v1677 = vld [vmem:[%s4 + $0xc8] sm:$0x3]
        %v1678 = vld [vmem:[%s4 + $0xd0] sm:$0x3]
        %v1679 = vld [vmem:[%s4 + $0xd8] sm:$0x3]
        %vm1680 = vcmask 408576
        %v1682 = vsel %vm1680, %v1636, 0
        %v1685 = vsel %vm1680, %v1637, 0
        %v1688 = vsel %vm1680, %v1638, 0
        %v1691 = vsel %vm1680, %v1639, 0
        %v1694 = vsel %vm1680, %v1640, 0
        %v1697 = vsel %vm1680, %v1641, 0
        %v1700 = vsel %vm1680, %v1642, 0
        %v1703 = vsel %vm1680, %v1643, 0
        %v1706 = vsel %vm1680, %v1644, 0
        %v1709 = vsel %vm1680, %v1645, 0
        %v1712 = vsel %vm1680, %v1646, 0
        %v1715 = vsel %vm1680, %v1647, 0
        %v1718 = vsel %vm1680, %v1648, 0
        %v1721 = vsel %vm1680, %v1649, 0
        %v1724 = vsel %vm1680, %v1650, 0
        %v1727 = vsel %vm1680, %v1651, 0
        %vm1729 = vcmask 1041408
        %v1731 = vsel %vm1729, %v1676, 0
        %v1734 = vsel %vm1729, %v1677, 0
        %v1737 = vsel %vm1729, %v1678, 0
        %v1740 = vsel %vm1729, %v1679, 0
        %1742 = vmatprep.subr.mxu0 0.0
        %1743 = vmatpush1.msra.mxu0 0.0
        %1744 = vmatprep.subr.mxu0 0.0
        %1745 = vmatpush1.msra.mxu0 0.0
        %1746 = vmatprep.subr.mxu0 0.0
        %1747 = vmatpush1.msra.mxu0 0.0
        %1748 = vmatprep.subr.mxu0 0.0
        %1749 = vmatpush1.msra.mxu0 0.0
        %1750 = vmatprep.subr.mxu0 0.0
        %1751 = vmatpush1.msra.mxu0 0.0
        %1752 = vmatprep.subr.mxu0 0.0
        %1753 = vmatpush1.msra.mxu0 0.0
        %1754 = vmatprep.subr.mxu0 0.0
        %1755 = vmatpush1.msra.mxu0 0.0
        %1756 = vmatprep.subr.mxu0 0.0
        %1757 = vmatpush1.msra.mxu0 0.0
        %1758 = vmatprep.subr.mxu0 0.0
        %1759 = vmatpush1.msra.mxu0 0.0
        %1760 = vmatprep.subr.mxu0 %v1734
        %1761 = vmatpush1.msra.mxu0 %v1731
        %1762 = vmatprep.subr.mxu0 %v1673
        %1763 = vmatpush1.msra.mxu0 %v1672
        %1764 = vmatprep.subr.mxu0 %v1669
        %1765 = vmatpush1.msra.mxu0 %v1668
        %1766 = vmatprep.subr.mxu0 %v1665
        %1767 = vmatpush1.msra.mxu0 %v1664
        %1768 = vmatprep.subr.mxu0 %v1661
        %1769 = vmatpush1.msra.mxu0 %v1660
        %1770 = vmatprep.subr.mxu0 %v1657
        %1771 = vmatpush1.msra.mxu0 %v1656
        %1772 = vmatprep.subr.mxu0 %v1653
        %1773 = vmatpush1.msra.mxu0 %v1652
        %1774 = vmatprep.subr.mxu0 0.0
        %1775 = vmatpush2.msra.mxu0 0.0
        %1776 = vmatprep.subr.mxu0 0.0
        %1777 = vmatpush2.msra.mxu0 0.0
        %1778 = vmatprep.subr.mxu0 0.0
        %1779 = vmatpush2.msra.mxu0 0.0
        %1780 = vmatprep.subr.mxu0 0.0
        %1781 = vmatpush2.msra.mxu0 0.0
        %1782 = vmatprep.subr.mxu0 0.0
        %1783 = vmatpush2.msra.mxu0 0.0
        %1784 = vmatprep.subr.mxu0 0.0
        %1785 = vmatpush2.msra.mxu0 0.0
        %1786 = vmatprep.subr.mxu0 0.0
        %1787 = vmatpush2.msra.mxu0 0.0
        %1788 = vmatprep.subr.mxu0 0.0
        %1789 = vmatpush2.msra.mxu0 0.0
        %1790 = vmatprep.subr.mxu0 0.0
        %1791 = vmatpush2.msra.mxu0 0.0
        %1792 = vmatprep.subr.mxu0 0.0
        %1793 = vmatpush2.msra.mxu0 0.0
        %1794 = vmatprep.subr.mxu0 0.0
        %1795 = vmatpush2.msra.mxu0 0.0
        %1796 = vmatprep.subr.mxu0 0.0
        %1797 = vmatpush2.msra.mxu0 0.0
        %1798 = vmatprep.subr.mxu0 0.0
        %1799 = vmatpush2.msra.mxu0 0.0
        %1800 = vmatprep.subr.mxu0 0.0
        %1801 = vmatpush2.msra.mxu0 0.0
        %1802 = vmatprep.subr.mxu0 0.0
        %1803 = vmatpush2.msra.mxu0 0.0
        %1804 = vmatprep.subr.mxu0 0.0
        %1805 = vmatpush2.msra.mxu0 0.0
        %1806 = vmatprep.mubr.f32.mxu0 0.0
        %1807 = vmatmul.mubr.f32.gmra.mxu0 %v1682
        %v1808 = vpop.f32.mrf.mxu0
        %v1809 = vadd.f32 0.0, %v1808
        %v1810 = vpop.f32.mrf.mxu0
        %v1811 = vadd.f32 0.0, %v1810
        %1812 = vmatprep.mubr.f32.mxu0 0.0
        %1813 = vmatmul.mubr.f32.gmra.mxu0 %v1685
        %v1814 = vpop.f32.mrf.mxu0
        %v1815 = vadd.f32 0.0, %v1814
        %v1816 = vpop.f32.mrf.mxu0
        %v1817 = vadd.f32 0.0, %v1816
        %1818 = vmatprep.mubr.f32.mxu0 0.0
        %1819 = vmatmul.mubr.f32.gmra.mxu0 %v1688
        %v1820 = vpop.f32.mrf.mxu0
        %v1821 = vadd.f32 0.0, %v1820
        %v1822 = vpop.f32.mrf.mxu0
        %v1823 = vadd.f32 0.0, %v1822
        %1824 = vmatprep.mubr.f32.mxu0 0.0
        %1825 = vmatmul.mubr.f32.gmra.mxu0 %v1691
        %v1826 = vpop.f32.mrf.mxu0
        %v1827 = vadd.f32 0.0, %v1826
        %v1828 = vpop.f32.mrf.mxu0
        %v1829 = vadd.f32 0.0, %v1828
        %1830 = vmatprep.mubr.f32.mxu0 0.0
        %1831 = vmatmul.mubr.f32.gmra.mxu0 %v1694
        %v1832 = vpop.f32.mrf.mxu0
        %v1833 = vadd.f32 0.0, %v1832
        %v1834 = vpop.f32.mrf.mxu0
        %v1835 = vadd.f32 0.0, %v1834
        %1836 = vmatprep.mubr.f32.mxu0 0.0
        %1837 = vmatmul.mubr.f32.gmra.mxu0 %v1697
        %v1838 = vpop.f32.mrf.mxu0
        %v1839 = vadd.f32 0.0, %v1838
        %v1840 = vpop.f32.mrf.mxu0
        %v1841 = vadd.f32 0.0, %v1840
        %1842 = vmatprep.mubr.f32.mxu0 0.0
        %1843 = vmatmul.mubr.f32.gmra.mxu0 %v1700
        %v1844 = vpop.f32.mrf.mxu0
        %v1845 = vadd.f32 0.0, %v1844
        %v1846 = vpop.f32.mrf.mxu0
        %v1847 = vadd.f32 0.0, %v1846
        %1848 = vmatprep.mubr.f32.mxu0 0.0
        %1849 = vmatmul.mubr.f32.gmra.mxu0 %v1703
        %v1850 = vpop.f32.mrf.mxu0
        %v1851 = vadd.f32 0.0, %v1850
        %v1852 = vpop.f32.mrf.mxu0
        %v1853 = vadd.f32 0.0, %v1852
        %1854 = vmatprep.mubr.f32.mxu0 0.0
        %1855 = vmatmul.mubr.f32.gmra.mxu0 %v1706
        %v1856 = vpop.f32.mrf.mxu0
        %v1857 = vadd.f32 0.0, %v1856
        %v1858 = vpop.f32.mrf.mxu0
        %v1859 = vadd.f32 0.0, %v1858
        %1860 = vmatprep.mubr.f32.mxu0 0.0
        %1861 = vmatmul.mubr.f32.gmra.mxu0 %v1709
        %v1862 = vpop.f32.mrf.mxu0
        %v1863 = vadd.f32 0.0, %v1862
        %v1864 = vpop.f32.mrf.mxu0
        %v1865 = vadd.f32 0.0, %v1864
        %1866 = vmatprep.mubr.f32.mxu0 0.0
        %1867 = vmatmul.mubr.f32.gmra.mxu0 %v1712
        %v1868 = vpop.f32.mrf.mxu0
        %v1869 = vadd.f32 0.0, %v1868
        %v1870 = vpop.f32.mrf.mxu0
        %v1871 = vadd.f32 0.0, %v1870
        %1872 = vmatprep.mubr.f32.mxu0 0.0
        %1873 = vmatmul.mubr.f32.gmra.mxu0 %v1715
        %v1874 = vpop.f32.mrf.mxu0
        %v1875 = vadd.f32 0.0, %v1874
        %v1876 = vpop.f32.mrf.mxu0
        %v1877 = vadd.f32 0.0, %v1876
        %1878 = vmatprep.mubr.f32.mxu0 0.0
        %1879 = vmatmul.mubr.f32.gmra.mxu0 %v1718
        %v1880 = vpop.f32.mrf.mxu0
        %v1881 = vadd.f32 0.0, %v1880
        %v1882 = vpop.f32.mrf.mxu0
        %v1883 = vadd.f32 0.0, %v1882
        %1884 = vmatprep.mubr.f32.mxu0 0.0
        %1885 = vmatmul.mubr.f32.gmra.mxu0 %v1721
        %v1886 = vpop.f32.mrf.mxu0
        %v1887 = vadd.f32 0.0, %v1886
        %v1888 = vpop.f32.mrf.mxu0
        %v1889 = vadd.f32 0.0, %v1888
        %1890 = vmatprep.mubr.f32.mxu0 0.0
        %1891 = vmatmul.mubr.f32.gmra.mxu0 %v1724
        %v1892 = vpop.f32.mrf.mxu0
        %v1893 = vadd.f32 0.0, %v1892
        %v1894 = vpop.f32.mrf.mxu0
        %v1895 = vadd.f32 0.0, %v1894
        %1896 = vmatprep.mubr.f32.mxu0 0.0
        %1897 = vmatmul.mubr.f32.gmra.mxu0 %v1727
        %v1898 = vpop.f32.mrf.mxu0
        %v1899 = vadd.f32 0.0, %v1898
        %v1900 = vpop.f32.mrf.mxu0
        %v1901 = vadd.f32 0.0, %v1900
        %1902 = vdwg.mxu0
        %1903 = vmatprep.subr.mxu0 0.0
        %1904 = vmatpush1.msra.mxu0 0.0
        %1905 = vmatprep.subr.mxu0 0.0
        %1906 = vmatpush1.msra.mxu0 0.0
        %1907 = vmatprep.subr.mxu0 0.0
        %1908 = vmatpush1.msra.mxu0 0.0
        %1909 = vmatprep.subr.mxu0 0.0
        %1910 = vmatpush1.msra.mxu0 0.0
        %1911 = vmatprep.subr.mxu0 0.0
        %1912 = vmatpush1.msra.mxu0 0.0
        %1913 = vmatprep.subr.mxu0 0.0
        %1914 = vmatpush1.msra.mxu0 0.0
        %1915 = vmatprep.subr.mxu0 0.0
        %1916 = vmatpush1.msra.mxu0 0.0
        %1917 = vmatprep.subr.mxu0 0.0
        %1918 = vmatpush1.msra.mxu0 0.0
        %1919 = vmatprep.subr.mxu0 0.0
        %1920 = vmatpush1.msra.mxu0 0.0
        %1921 = vmatprep.subr.mxu0 %v1740
        %1922 = vmatpush1.msra.mxu0 %v1737
        %1923 = vmatprep.subr.mxu0 %v1675
        %1924 = vmatpush1.msra.mxu0 %v1674
        %1925 = vmatprep.subr.mxu0 %v1671
        %1926 = vmatpush1.msra.mxu0 %v1670
        %1927 = vmatprep.subr.mxu0 %v1667
        %1928 = vmatpush1.msra.mxu0 %v1666
        %1929 = vmatprep.subr.mxu0 %v1663
        %1930 = vmatpush1.msra.mxu0 %v1662
        %1931 = vmatprep.subr.mxu0 %v1659
        %1932 = vmatpush1.msra.mxu0 %v1658
        %1933 = vmatprep.subr.mxu0 %v1655
        %1934 = vmatpush1.msra.mxu0 %v1654
        %1935 = vmatprep.subr.mxu0 0.0
        %1936 = vmatpush2.msra.mxu0 0.0
        %1937 = vmatprep.subr.mxu0 0.0
        %1938 = vmatpush2.msra.mxu0 0.0
        %1939 = vmatprep.subr.mxu0 0.0
        %1940 = vmatpush2.msra.mxu0 0.0
        %1941 = vmatprep.subr.mxu0 0.0
        %1942 = vmatpush2.msra.mxu0 0.0
        %1943 = vmatprep.subr.mxu0 0.0
        %1944 = vmatpush2.msra.mxu0 0.0
        %1945 = vmatprep.subr.mxu0 0.0
        %1946 = vmatpush2.msra.mxu0 0.0
        %1947 = vmatprep.subr.mxu0 0.0
        %1948 = vmatpush2.msra.mxu0 0.0
        %1949 = vmatprep.subr.mxu0 0.0
        %1950 = vmatpush2.msra.mxu0 0.0
        %1951 = vmatprep.subr.mxu0 0.0
        %1952 = vmatpush2.msra.mxu0 0.0
        %1953 = vmatprep.subr.mxu0 0.0
        %1954 = vmatpush2.msra.mxu0 0.0
        %1955 = vmatprep.subr.mxu0 0.0
        %1956 = vmatpush2.msra.mxu0 0.0
        %1957 = vmatprep.subr.mxu0 0.0
        %1958 = vmatpush2.msra.mxu0 0.0
        %1959 = vmatprep.subr.mxu0 0.0
        %1960 = vmatpush2.msra.mxu0 0.0
        %1961 = vmatprep.subr.mxu0 0.0
        %1962 = vmatpush2.msra.mxu0 0.0
        %1963 = vmatprep.subr.mxu0 0.0
        %1964 = vmatpush2.msra.mxu0 0.0
        %1965 = vmatprep.subr.mxu0 0.0
        %1966 = vmatpush2.msra.mxu0 0.0
        %1967 = vmatprep.mubr.f32.mxu0 0.0
        %1968 = vmatmul.mubr.f32.gmra.mxu0 %v1682
        %v1969 = vpop.f32.mrf.mxu0
        %v1970 = vadd.f32 0.0, %v1969
        %v1971 = vpop.f32.mrf.mxu0
        %v1972 = vadd.f32 0.0, %v1971
        %1973 = vmatprep.mubr.f32.mxu0 0.0
        %1974 = vmatmul.mubr.f32.gmra.mxu0 %v1685
        %v1975 = vpop.f32.mrf.mxu0
        %v1976 = vadd.f32 0.0, %v1975
        %v1977 = vpop.f32.mrf.mxu0
        %v1978 = vadd.f32 0.0, %v1977
        %1979 = vmatprep.mubr.f32.mxu0 0.0
        %1980 = vmatmul.mubr.f32.gmra.mxu0 %v1688
        %v1981 = vpop.f32.mrf.mxu0
        %v1982 = vadd.f32 0.0, %v1981
        %v1983 = vpop.f32.mrf.mxu0
        %v1984 = vadd.f32 0.0, %v1983
        %1985 = vmatprep.mubr.f32.mxu0 0.0
        %1986 = vmatmul.mubr.f32.gmra.mxu0 %v1691
        %v1987 = vpop.f32.mrf.mxu0
        %v1988 = vadd.f32 0.0, %v1987
        %v1989 = vpop.f32.mrf.mxu0
        %v1990 = vadd.f32 0.0, %v1989
        %1991 = vmatprep.mubr.f32.mxu0 0.0
        %1992 = vmatmul.mubr.f32.gmra.mxu0 %v1694
        %v1993 = vpop.f32.mrf.mxu0
        %v1994 = vadd.f32 0.0, %v1993
        %v1995 = vpop.f32.mrf.mxu0
        %v1996 = vadd.f32 0.0, %v1995
        %1997 = vmatprep.mubr.f32.mxu0 0.0
        %1998 = vmatmul.mubr.f32.gmra.mxu0 %v1697
        %v1999 = vpop.f32.mrf.mxu0
        %v2000 = vadd.f32 0.0, %v1999
        %v2001 = vpop.f32.mrf.mxu0
        %v2002 = vadd.f32 0.0, %v2001
        %2003 = vmatprep.mubr.f32.mxu0 0.0
        %2004 = vmatmul.mubr.f32.gmra.mxu0 %v1700
        %v2005 = vpop.f32.mrf.mxu0
        %v2006 = vadd.f32 0.0, %v2005
        %v2007 = vpop.f32.mrf.mxu0
        %v2008 = vadd.f32 0.0, %v2007
        %2009 = vmatprep.mubr.f32.mxu0 0.0
        %2010 = vmatmul.mubr.f32.gmra.mxu0 %v1703
        %v2011 = vpop.f32.mrf.mxu0
        %v2012 = vadd.f32 0.0, %v2011
        %v2013 = vpop.f32.mrf.mxu0
        %v2014 = vadd.f32 0.0, %v2013
        %2015 = vmatprep.mubr.f32.mxu0 0.0
        %2016 = vmatmul.mubr.f32.gmra.mxu0 %v1706
        %v2017 = vpop.f32.mrf.mxu0
        %v2018 = vadd.f32 0.0, %v2017
        %v2019 = vpop.f32.mrf.mxu0
        %v2020 = vadd.f32 0.0, %v2019
        %2021 = vmatprep.mubr.f32.mxu0 0.0
        %2022 = vmatmul.mubr.f32.gmra.mxu0 %v1709
        %v2023 = vpop.f32.mrf.mxu0
        %v2024 = vadd.f32 0.0, %v2023
        %v2025 = vpop.f32.mrf.mxu0
        %v2026 = vadd.f32 0.0, %v2025
        %2027 = vmatprep.mubr.f32.mxu0 0.0
        %2028 = vmatmul.mubr.f32.gmra.mxu0 %v1712
        %v2029 = vpop.f32.mrf.mxu0
        %v2030 = vadd.f32 0.0, %v2029
        %v2031 = vpop.f32.mrf.mxu0
        %v2032 = vadd.f32 0.0, %v2031
        %2033 = vmatprep.mubr.f32.mxu0 0.0
        %2034 = vmatmul.mubr.f32.gmra.mxu0 %v1715
        %v2035 = vpop.f32.mrf.mxu0
        %v2036 = vadd.f32 0.0, %v2035
        %v2037 = vpop.f32.mrf.mxu0
        %v2038 = vadd.f32 0.0, %v2037
        %2039 = vmatprep.mubr.f32.mxu0 0.0
        %2040 = vmatmul.mubr.f32.gmra.mxu0 %v1718
        %v2041 = vpop.f32.mrf.mxu0
        %v2042 = vadd.f32 0.0, %v2041
        %v2043 = vpop.f32.mrf.mxu0
        %v2044 = vadd.f32 0.0, %v2043
        %2045 = vmatprep.mubr.f32.mxu0 0.0
        %2046 = vmatmul.mubr.f32.gmra.mxu0 %v1721
        %v2047 = vpop.f32.mrf.mxu0
        %v2048 = vadd.f32 0.0, %v2047
        %v2049 = vpop.f32.mrf.mxu0
        %v2050 = vadd.f32 0.0, %v2049
        %2051 = vmatprep.mubr.f32.mxu0 0.0
        %2052 = vmatmul.mubr.f32.gmra.mxu0 %v1724
        %v2053 = vpop.f32.mrf.mxu0
        %v2054 = vadd.f32 0.0, %v2053
        %v2055 = vpop.f32.mrf.mxu0
        %v2056 = vadd.f32 0.0, %v2055
        %2057 = vmatprep.mubr.f32.mxu0 0.0
        %2058 = vmatmul.mubr.f32.gmra.mxu0 %v1727
        %v2059 = vpop.f32.mrf.mxu0
        %v2060 = vadd.f32 0.0, %v2059
        %v2061 = vpop.f32.mrf.mxu0
        %v2062 = vadd.f32 0.0, %v2061
        %2063 = vdwg.mxu0
        %v2064 = vmul.f32 %v1174, %v1809
        %v2065 = vmul.f32 %v1178, %v1815
        %v2066 = vmul.f32 %v1182, %v1821
        %v2067 = vmul.f32 %v1186, %v1827
        %v2068 = vmul.f32 %v1190, %v1833
        %v2069 = vmul.f32 %v1194, %v1839
        %v2070 = vmul.f32 %v1198, %v1845
        %v2071 = vmul.f32 %v1202, %v1851
        %v2072 = vmul.f32 %v1206, %v1857
        %v2073 = vmul.f32 %v1210, %v1863
        %v2074 = vmul.f32 %v1214, %v1869
        %v2075 = vmul.f32 %v1218, %v1875
        %v2076 = vmul.f32 %v1222, %v1881
        %v2077 = vmul.f32 %v1226, %v1887
        %v2078 = vmul.f32 %v1230, %v1893
        %v2079 = vmul.f32 %v1234, %v1899
        %v2080 = vmul.f32 %v1254, %v1811
        %v2081 = vmul.f32 %v1258, %v1817
        %v2082 = vmul.f32 %v1262, %v1823
        %v2083 = vmul.f32 %v1266, %v1829
        %v2084 = vmul.f32 %v1270, %v1835
        %v2085 = vmul.f32 %v1274, %v1841
        %v2086 = vmul.f32 %v1278, %v1847
        %v2087 = vmul.f32 %v1282, %v1853
        %v2088 = vmul.f32 %v1286, %v1859
        %v2089 = vmul.f32 %v1290, %v1865
        %v2090 = vmul.f32 %v1294, %v1871
        %v2091 = vmul.f32 %v1298, %v1877
        %v2092 = vmul.f32 %v1302, %v1883
        %v2093 = vmul.f32 %v1306, %v1889
        %v2094 = vmul.f32 %v1310, %v1895
        %v2095 = vmul.f32 %v1314, %v1901
        %v2096 = vadd.f32 %v2064, %v2080
        %v2097 = vadd.f32 %v2065, %v2081
        %v2098 = vadd.f32 %v2066, %v2082
        %v2099 = vadd.f32 %v2067, %v2083
        %v2100 = vadd.f32 %v2068, %v2084
        %v2101 = vadd.f32 %v2069, %v2085
        %v2102 = vadd.f32 %v2070, %v2086
        %v2103 = vadd.f32 %v2071, %v2087
        %v2104 = vadd.f32 %v2072, %v2088
        %v2105 = vadd.f32 %v2073, %v2089
        %v2106 = vadd.f32 %v2074, %v2090
        %v2107 = vadd.f32 %v2075, %v2091
        %v2108 = vadd.f32 %v2076, %v2092
        %v2109 = vadd.f32 %v2077, %v2093
        %v2110 = vadd.f32 %v2078, %v2094
        %v2111 = vadd.f32 %v2079, %v2095
        %v2112 = vmul.f32 %v1350, %v1970
        %v2113 = vmul.f32 %v1354, %v1976
        %v2114 = vmul.f32 %v1358, %v1982
        %v2115 = vmul.f32 %v1362, %v1988
        %v2116 = vmul.f32 %v1366, %v1994
        %v2117 = vmul.f32 %v1370, %v2000
        %v2118 = vmul.f32 %v1374, %v2006
        %v2119 = vmul.f32 %v1378, %v2012
        %v2120 = vmul.f32 %v1382, %v2018
        %v2121 = vmul.f32 %v1386, %v2024
        %v2122 = vmul.f32 %v1390, %v2030
        %v2123 = vmul.f32 %v1394, %v2036
        %v2124 = vmul.f32 %v1398, %v2042
        %v2125 = vmul.f32 %v1402, %v2048
        %v2126 = vmul.f32 %v1406, %v2054
        %v2127 = vmul.f32 %v1410, %v2060
        %v2128 = vadd.f32 %v2096, %v2112
        %v2129 = vadd.f32 %v2097, %v2113
        %v2130 = vadd.f32 %v2098, %v2114
        %v2131 = vadd.f32 %v2099, %v2115
        %v2132 = vadd.f32 %v2100, %v2116
        %v2133 = vadd.f32 %v2101, %v2117
        %v2134 = vadd.f32 %v2102, %v2118
        %v2135 = vadd.f32 %v2103, %v2119
        %v2136 = vadd.f32 %v2104, %v2120
        %v2137 = vadd.f32 %v2105, %v2121
        %v2138 = vadd.f32 %v2106, %v2122
        %v2139 = vadd.f32 %v2107, %v2123
        %v2140 = vadd.f32 %v2108, %v2124
        %v2141 = vadd.f32 %v2109, %v2125
        %v2142 = vadd.f32 %v2110, %v2126
        %v2143 = vadd.f32 %v2111, %v2127
        %v2144 = vmul.f32 %v1446, %v1972
        %v2145 = vmul.f32 %v1450, %v1978
        %v2146 = vmul.f32 %v1454, %v1984
        %v2147 = vmul.f32 %v1458, %v1990
        %v2148 = vmul.f32 %v1462, %v1996
        %v2149 = vmul.f32 %v1466, %v2002
        %v2150 = vmul.f32 %v1470, %v2008
        %v2151 = vmul.f32 %v1474, %v2014
        %v2152 = vmul.f32 %v1478, %v2020
        %v2153 = vmul.f32 %v1482, %v2026
        %v2154 = vmul.f32 %v1486, %v2032
        %v2155 = vmul.f32 %v1490, %v2038
        %v2156 = vmul.f32 %v1494, %v2044
        %v2157 = vmul.f32 %v1498, %v2050
        %v2158 = vmul.f32 %v1502, %v2056
        %v2159 = vmul.f32 %v1506, %v2062
        %v2160 = vadd.f32 %v2128, %v2144
        %v2161 = vadd.f32 %v2129, %v2145
        %v2162 = vadd.f32 %v2130, %v2146
        %v2163 = vadd.f32 %v2131, %v2147
        %v2164 = vadd.f32 %v2132, %v2148
        %v2165 = vadd.f32 %v2133, %v2149
        %v2166 = vadd.f32 %v2134, %v2150
        %v2167 = vadd.f32 %v2135, %v2151
        %v2168 = vadd.f32 %v2136, %v2152
        %v2169 = vadd.f32 %v2137, %v2153
        %v2170 = vadd.f32 %v2138, %v2154
        %v2171 = vadd.f32 %v2139, %v2155
        %v2172 = vadd.f32 %v2140, %v2156
        %v2173 = vadd.f32 %v2141, %v2157
        %v2174 = vadd.f32 %v2142, %v2158
        %v2175 = vadd.f32 %v2143, %v2159
        %v2176 = vadd.f32 %v2160, %v552
        %v2177 = vadd.f32 %v2161, %v558
        %v2178 = vadd.f32 %v2162, %v564
        %v2179 = vadd.f32 %v2163, %v570
        %v2180 = vadd.f32 %v2164, %v576
        %v2181 = vadd.f32 %v2165, %v582
        %v2182 = vadd.f32 %v2166, %v588
        %v2183 = vadd.f32 %v2167, %v594
        %v2184 = vadd.f32 %v2168, %v600
        %v2185 = vadd.f32 %v2169, %v606
        %v2186 = vadd.f32 %v2170, %v612
        %v2187 = vadd.f32 %v2171, %v618
        %v2188 = vadd.f32 %v2172, %v624
        %v2189 = vadd.f32 %v2173, %v630
        %v2190 = vadd.f32 %v2174, %v636
        %v2191 = vadd.f32 %v2175, %v642
        %v2192 = vtanh.pop %v2176
        %v2193 = vtanh.pop %v2177
        %v2194 = vtanh.pop %v2178
        %v2195 = vtanh.pop %v2179
        %v2196 = vtanh.pop %v2180
        %v2197 = vtanh.pop %v2181
        %v2198 = vtanh.pop %v2182
        %v2199 = vtanh.pop %v2183
        %v2200 = vtanh.pop %v2184
        %v2201 = vtanh.pop %v2185
        %v2202 = vtanh.pop %v2186
        %v2203 = vtanh.pop %v2187
        %v2204 = vtanh.pop %v2188
        %v2205 = vtanh.pop %v2189
        %v2206 = vtanh.pop %v2190
        %v2207 = vtanh.pop %v2191
        %2208 = vrot.lane.b32.xlu0 %v1636, 50
        %v2209 = vpop.permute.xlu0 %2208
        %2210 = vrot.lane.b32.xlu0 %v1637, 50
        %v2211 = vpop.permute.xlu0 %2210
        %2212 = vrot.lane.b32.xlu0 %v1638, 50
        %v2213 = vpop.permute.xlu0 %2212
        %2214 = vrot.lane.b32.xlu0 %v1639, 50
        %v2215 = vpop.permute.xlu0 %2214
        %2216 = vrot.lane.b32.xlu0 %v1640, 50
        %v2217 = vpop.permute.xlu0 %2216
        %2218 = vrot.lane.b32.xlu0 %v1641, 50
        %v2219 = vpop.permute.xlu0 %2218
        %2220 = vrot.lane.b32.xlu0 %v1642, 50
        %v2221 = vpop.permute.xlu0 %2220
        %2222 = vrot.lane.b32.xlu0 %v1643, 50
        %v2223 = vpop.permute.xlu0 %2222
        %2224 = vrot.lane.b32.xlu0 %v1644, 50
        %v2225 = vpop.permute.xlu0 %2224
        %2226 = vrot.lane.b32.xlu0 %v1645, 50
        %v2227 = vpop.permute.xlu0 %2226
        %2228 = vrot.lane.b32.xlu0 %v1646, 50
        %v2229 = vpop.permute.xlu0 %2228
        %2230 = vrot.lane.b32.xlu0 %v1647, 50
        %v2231 = vpop.permute.xlu0 %2230
        %2232 = vrot.lane.b32.xlu0 %v1648, 50
        %v2233 = vpop.permute.xlu0 %2232
        %2234 = vrot.lane.b32.xlu0 %v1649, 50
        %v2235 = vpop.permute.xlu0 %2234
        %2236 = vrot.lane.b32.xlu0 %v1650, 50
        %v2237 = vpop.permute.xlu0 %2236
        %2238 = vrot.lane.b32.xlu0 %v1651, 50
        %v2239 = vpop.permute.xlu0 %2238
        %v2256 = vsel %vm1680, %v1636, %v2209
        %v2257 = vsel %vm1680, %v1637, %v2211
        %v2258 = vsel %vm1680, %v1638, %v2213
        %v2259 = vsel %vm1680, %v1639, %v2215
        %v2260 = vsel %vm1680, %v1640, %v2217
        %v2261 = vsel %vm1680, %v1641, %v2219
        %v2262 = vsel %vm1680, %v1642, %v2221
        %v2263 = vsel %vm1680, %v1643, %v2223
        %v2264 = vsel %vm1680, %v1644, %v2225
        %v2265 = vsel %vm1680, %v1645, %v2227
        %v2266 = vsel %vm1680, %v1646, %v2229
        %v2267 = vsel %vm1680, %v1647, %v2231
        %v2268 = vsel %vm1680, %v1648, %v2233
        %v2269 = vsel %vm1680, %v1649, %v2235
        %v2270 = vsel %vm1680, %v1650, %v2237
        %v2271 = vsel %vm1680, %v1651, %v2239
        %v2272 = vadd.f32 %v2192, %v2256
        %v2273 = vadd.f32 %v2193, %v2257
        %v2274 = vadd.f32 %v2194, %v2258
        %v2275 = vadd.f32 %v2195, %v2259
        %v2276 = vadd.f32 %v2196, %v2260
        %v2277 = vadd.f32 %v2197, %v2261
        %v2278 = vadd.f32 %v2198, %v2262
        %v2279 = vadd.f32 %v2199, %v2263
        %v2280 = vadd.f32 %v2200, %v2264
        %v2281 = vadd.f32 %v2201, %v2265
        %v2282 = vadd.f32 %v2202, %v2266
        %v2283 = vadd.f32 %v2203, %v2267
        %v2284 = vadd.f32 %v2204, %v2268
        %v2285 = vadd.f32 %v2205, %v2269
        %v2286 = vadd.f32 %v2206, %v2270
        %v2287 = vadd.f32 %v2207, %v2271
        %vm2288 = vcmask 818176
        %v2289 = vsel %vm2288, %v2272, 0.0
        %v2290 = vsel %vm2288, %v2273, 0.0
        %v2291 = vsel %vm2288, %v2274, 0.0
        %v2292 = vsel %vm2288, %v2275, 0.0
        %v2293 = vsel %vm2288, %v2276, 0.0
        %v2294 = vsel %vm2288, %v2277, 0.0
        %v2295 = vsel %vm2288, %v2278, 0.0
        %v2296 = vsel %vm2288, %v2279, 0.0
        %v2297 = vsel %vm2288, %v2280, 0.0
        %v2298 = vsel %vm2288, %v2281, 0.0
        %v2299 = vsel %vm2288, %v2282, 0.0
        %v2300 = vsel %vm2288, %v2283, 0.0
        %v2301 = vsel %vm2288, %v2284, 0.0
        %v2302 = vsel %vm2288, %v2285, 0.0
        %v2303 = vsel %vm2288, %v2286, 0.0
        %v2304 = vsel %vm2288, %v2287, 0.0
        %2305 = vset.pattern.permute.xlu0 1
        %2306 = vperm.xlu0 %2305, %v226
        %v2307 = vpop.permute.xlu0 %2306
        %2309 = vset.pattern.permute.xlu0 1
        %2310 = vperm.xlu0 %2309, %v227
        %v2311 = vpop.permute.xlu0 %2310
        %2313 = vset.pattern.permute.xlu0 1
        %2314 = vperm.xlu0 %2313, %v228
        %v2315 = vpop.permute.xlu0 %2314
        %2317 = vset.pattern.permute.xlu0 1
        %2318 = vperm.xlu0 %2317, %v229
        %v2319 = vpop.permute.xlu0 %2318
        %2321 = vset.pattern.permute.xlu0 1
        %2322 = vperm.xlu0 %2321, %v230
        %v2323 = vpop.permute.xlu0 %2322
        %2325 = vset.pattern.permute.xlu0 1
        %2326 = vperm.xlu0 %2325, %v231
        %v2327 = vpop.permute.xlu0 %2326
        %2329 = vset.pattern.permute.xlu0 1
        %2330 = vperm.xlu0 %2329, %v232
        %v2331 = vpop.permute.xlu0 %2330
        %2333 = vset.pattern.permute.xlu0 1
        %2334 = vperm.xlu0 %2333, %v233
        %v2335 = vpop.permute.xlu0 %2334
        %2337 = vset.pattern.permute.xlu0 1
        %2338 = vperm.xlu0 %2337, %v234
        %v2339 = vpop.permute.xlu0 %2338
        %2341 = vset.pattern.permute.xlu0 1
        %2342 = vperm.xlu0 %2341, %v235
        %v2343 = vpop.permute.xlu0 %2342
        %2345 = vset.pattern.permute.xlu0 1
        %2346 = vperm.xlu0 %2345, %v236
        %v2347 = vpop.permute.xlu0 %2346
        %2349 = vset.pattern.permute.xlu0 1
        %2350 = vperm.xlu0 %2349, %v237
        %v2351 = vpop.permute.xlu0 %2350
        %2353 = vset.pattern.permute.xlu0 1
        %2354 = vperm.xlu0 %2353, %v238
        %v2355 = vpop.permute.xlu0 %2354
        %2357 = vset.pattern.permute.xlu0 1
        %2358 = vperm.xlu0 %2357, %v239
        %v2359 = vpop.permute.xlu0 %2358
        %2361 = vset.pattern.permute.xlu0 1
        %2362 = vperm.xlu0 %2361, %v240
        %v2363 = vpop.permute.xlu0 %2362
        %2365 = vset.pattern.permute.xlu0 1
        %2366 = vperm.xlu0 %2365, %v241
        %v2367 = vpop.permute.xlu0 %2366
        %v2369 = vmul.f32 %v2307, %v2289
        %v2370 = vmul.f32 %v2311, %v2290
        %v2371 = vmul.f32 %v2315, %v2291
        %v2372 = vmul.f32 %v2319, %v2292
        %v2373 = vmul.f32 %v2323, %v2293
        %v2374 = vmul.f32 %v2327, %v2294
        %v2375 = vmul.f32 %v2331, %v2295
        %v2376 = vmul.f32 %v2335, %v2296
        %v2377 = vmul.f32 %v2339, %v2297
        %v2378 = vmul.f32 %v2343, %v2298
        %v2379 = vmul.f32 %v2347, %v2299
        %v2380 = vmul.f32 %v2351, %v2300
        %v2381 = vmul.f32 %v2355, %v2301
        %v2382 = vmul.f32 %v2359, %v2302
        %v2383 = vmul.f32 %v2363, %v2303
        %v2384 = vmul.f32 %v2367, %v2304
        %v2385 = vrot.slane %v2369, 4
        %v2386 = vadd.f32 %v2369, %v2385
        %v2387 = vrot.slane %v2386, 2
        %v2388 = vadd.f32 %v2386, %v2387
        %v2389 = vrot.slane %v2388, 1
        %v2390 = vadd.f32 %v2388, %v2389
        %v2391 = vrot.slane %v2370, 4
        %v2392 = vadd.f32 %v2370, %v2391
        %v2393 = vrot.slane %v2392, 2
        %v2394 = vadd.f32 %v2392, %v2393
        %v2395 = vrot.slane %v2394, 1
        %v2396 = vadd.f32 %v2394, %v2395
        %v2397 = vrot.slane %v2371, 4
        %v2398 = vadd.f32 %v2371, %v2397
        %v2399 = vrot.slane %v2398, 2
        %v2400 = vadd.f32 %v2398, %v2399
        %v2401 = vrot.slane %v2400, 1
        %v2402 = vadd.f32 %v2400, %v2401
        %v2403 = vrot.slane %v2372, 4
        %v2404 = vadd.f32 %v2372, %v2403
        %v2405 = vrot.slane %v2404, 2
        %v2406 = vadd.f32 %v2404, %v2405
        %v2407 = vrot.slane %v2406, 1
        %v2408 = vadd.f32 %v2406, %v2407
        %v2409 = vrot.slane %v2373, 4
        %v2410 = vadd.f32 %v2373, %v2409
        %v2411 = vrot.slane %v2410, 2
        %v2412 = vadd.f32 %v2410, %v2411
        %v2413 = vrot.slane %v2412, 1
        %v2414 = vadd.f32 %v2412, %v2413
        %v2415 = vrot.slane %v2374, 4
        %v2416 = vadd.f32 %v2374, %v2415
        %v2417 = vrot.slane %v2416, 2
        %v2418 = vadd.f32 %v2416, %v2417
        %v2419 = vrot.slane %v2418, 1
        %v2420 = vadd.f32 %v2418, %v2419
        %v2421 = vrot.slane %v2375, 4
        %v2422 = vadd.f32 %v2375, %v2421
        %v2423 = vrot.slane %v2422, 2
        %v2424 = vadd.f32 %v2422, %v2423
        %v2425 = vrot.slane %v2424, 1
        %v2426 = vadd.f32 %v2424, %v2425
        %v2427 = vrot.slane %v2376, 4
        %v2428 = vadd.f32 %v2376, %v2427
        %v2429 = vrot.slane %v2428, 2
        %v2430 = vadd.f32 %v2428, %v2429
        %v2431 = vrot.slane %v2430, 1
        %v2432 = vadd.f32 %v2430, %v2431
        %v2433 = vrot.slane %v2377, 4
        %v2434 = vadd.f32 %v2377, %v2433
        %v2435 = vrot.slane %v2434, 2
        %v2436 = vadd.f32 %v2434, %v2435
        %v2437 = vrot.slane %v2436, 1
        %v2438 = vadd.f32 %v2436, %v2437
        %v2439 = vrot.slane %v2378, 4
        %v2440 = vadd.f32 %v2378, %v2439
        %v2441 = vrot.slane %v2440, 2
        %v2442 = vadd.f32 %v2440, %v2441
        %v2443 = vrot.slane %v2442, 1
        %v2444 = vadd.f32 %v2442, %v2443
        %v2445 = vrot.slane %v2379, 4
        %v2446 = vadd.f32 %v2379, %v2445
        %v2447 = vrot.slane %v2446, 2
        %v2448 = vadd.f32 %v2446, %v2447
        %v2449 = vrot.slane %v2448, 1
        %v2450 = vadd.f32 %v2448, %v2449
        %v2451 = vrot.slane %v2380, 4
        %v2452 = vadd.f32 %v2380, %v2451
        %v2453 = vrot.slane %v2452, 2
        %v2454 = vadd.f32 %v2452, %v2453
        %v2455 = vrot.slane %v2454, 1
        %v2456 = vadd.f32 %v2454, %v2455
        %v2457 = vrot.slane %v2381, 4
        %v2458 = vadd.f32 %v2381, %v2457
        %v2459 = vrot.slane %v2458, 2
        %v2460 = vadd.f32 %v2458, %v2459
        %v2461 = vrot.slane %v2460, 1
        %v2462 = vadd.f32 %v2460, %v2461
        %v2463 = vrot.slane %v2382, 4
        %v2464 = vadd.f32 %v2382, %v2463
        %v2465 = vrot.slane %v2464, 2
        %v2466 = vadd.f32 %v2464, %v2465
        %v2467 = vrot.slane %v2466, 1
        %v2468 = vadd.f32 %v2466, %v2467
        %v2469 = vrot.slane %v2383, 4
        %v2470 = vadd.f32 %v2383, %v2469
        %v2471 = vrot.slane %v2470, 2
        %v2472 = vadd.f32 %v2470, %v2471
        %v2473 = vrot.slane %v2472, 1
        %v2474 = vadd.f32 %v2472, %v2473
        %v2475 = vrot.slane %v2384, 4
        %v2476 = vadd.f32 %v2384, %v2475
        %v2477 = vrot.slane %v2476, 2
        %v2478 = vadd.f32 %v2476, %v2477
        %v2479 = vrot.slane %v2478, 1
        %v2480 = vadd.f32 %v2478, %v2479
        %2481 = vset.pattern.permute.xlu0 2
        %2482 = vperm.xlu0 %2481, %v226
        %v2483 = vpop.permute.xlu0 %2482
        %2485 = vset.pattern.permute.xlu0 2
        %2486 = vperm.xlu0 %2485, %v227
        %v2487 = vpop.permute.xlu0 %2486
        %2489 = vset.pattern.permute.xlu0 2
        %2490 = vperm.xlu0 %2489, %v228
        %v2491 = vpop.permute.xlu0 %2490
        %2493 = vset.pattern.permute.xlu0 2
        %2494 = vperm.xlu0 %2493, %v229
        %v2495 = vpop.permute.xlu0 %2494
        %2497 = vset.pattern.permute.xlu0 2
        %2498 = vperm.xlu0 %2497, %v230
        %v2499 = vpop.permute.xlu0 %2498
        %2501 = vset.pattern.permute.xlu0 2
        %2502 = vperm.xlu0 %2501, %v231
        %v2503 = vpop.permute.xlu0 %2502
        %2505 = vset.pattern.permute.xlu0 2
        %2506 = vperm.xlu0 %2505, %v232
        %v2507 = vpop.permute.xlu0 %2506
        %2509 = vset.pattern.permute.xlu0 2
        %2510 = vperm.xlu0 %2509, %v233
        %v2511 = vpop.permute.xlu0 %2510
        %2513 = vset.pattern.permute.xlu0 2
        %2514 = vperm.xlu0 %2513, %v234
        %v2515 = vpop.permute.xlu0 %2514
        %2517 = vset.pattern.permute.xlu0 2
        %2518 = vperm.xlu0 %2517, %v235
        %v2519 = vpop.permute.xlu0 %2518
        %2521 = vset.pattern.permute.xlu0 2
        %2522 = vperm.xlu0 %2521, %v236
        %v2523 = vpop.permute.xlu0 %2522
        %2525 = vset.pattern.permute.xlu0 2
        %2526 = vperm.xlu0 %2525, %v237
        %v2527 = vpop.permute.xlu0 %2526
        %2529 = vset.pattern.permute.xlu0 2
        %2530 = vperm.xlu0 %2529, %v238
        %v2531 = vpop.permute.xlu0 %2530
        %2533 = vset.pattern.permute.xlu0 2
        %2534 = vperm.xlu0 %2533, %v239
        %v2535 = vpop.permute.xlu0 %2534
        %2537 = vset.pattern.permute.xlu0 2
        %2538 = vperm.xlu0 %2537, %v240
        %v2539 = vpop.permute.xlu0 %2538
        %2541 = vset.pattern.permute.xlu0 2
        %2542 = vperm.xlu0 %2541, %v241
        %v2543 = vpop.permute.xlu0 %2542
        %v2545 = vmul.f32 %v2483, %v2289
        %v2546 = vmul.f32 %v2487, %v2290
        %v2547 = vmul.f32 %v2491, %v2291
        %v2548 = vmul.f32 %v2495, %v2292
        %v2549 = vmul.f32 %v2499, %v2293
        %v2550 = vmul.f32 %v2503, %v2294
        %v2551 = vmul.f32 %v2507, %v2295
        %v2552 = vmul.f32 %v2511, %v2296
        %v2553 = vmul.f32 %v2515, %v2297
        %v2554 = vmul.f32 %v2519, %v2298
        %v2555 = vmul.f32 %v2523, %v2299
        %v2556 = vmul.f32 %v2527, %v2300
        %v2557 = vmul.f32 %v2531, %v2301
        %v2558 = vmul.f32 %v2535, %v2302
        %v2559 = vmul.f32 %v2539, %v2303
        %v2560 = vmul.f32 %v2543, %v2304
        %v2561 = vrot.slane %v2545, 4
        %v2562 = vadd.f32 %v2545, %v2561
        %v2563 = vrot.slane %v2562, 2
        %v2564 = vadd.f32 %v2562, %v2563
        %v2565 = vrot.slane %v2564, 1
        %v2566 = vadd.f32 %v2564, %v2565
        %v2567 = vrot.slane %v2546, 4
        %v2568 = vadd.f32 %v2546, %v2567
        %v2569 = vrot.slane %v2568, 2
        %v2570 = vadd.f32 %v2568, %v2569
        %v2571 = vrot.slane %v2570, 1
        %v2572 = vadd.f32 %v2570, %v2571
        %v2573 = vrot.slane %v2547, 4
        %v2574 = vadd.f32 %v2547, %v2573
        %v2575 = vrot.slane %v2574, 2
        %v2576 = vadd.f32 %v2574, %v2575
        %v2577 = vrot.slane %v2576, 1
        %v2578 = vadd.f32 %v2576, %v2577
        %v2579 = vrot.slane %v2548, 4
        %v2580 = vadd.f32 %v2548, %v2579
        %v2581 = vrot.slane %v2580, 2
        %v2582 = vadd.f32 %v2580, %v2581
        %v2583 = vrot.slane %v2582, 1
        %v2584 = vadd.f32 %v2582, %v2583
        %v2585 = vrot.slane %v2549, 4
        %v2586 = vadd.f32 %v2549, %v2585
        %v2587 = vrot.slane %v2586, 2
        %v2588 = vadd.f32 %v2586, %v2587
        %v2589 = vrot.slane %v2588, 1
        %v2590 = vadd.f32 %v2588, %v2589
        %v2591 = vrot.slane %v2550, 4
        %v2592 = vadd.f32 %v2550, %v2591
        %v2593 = vrot.slane %v2592, 2
        %v2594 = vadd.f32 %v2592, %v2593
        %v2595 = vrot.slane %v2594, 1
        %v2596 = vadd.f32 %v2594, %v2595
        %v2597 = vrot.slane %v2551, 4
        %v2598 = vadd.f32 %v2551, %v2597
        %v2599 = vrot.slane %v2598, 2
        %v2600 = vadd.f32 %v2598, %v2599
        %v2601 = vrot.slane %v2600, 1
        %v2602 = vadd.f32 %v2600, %v2601
        %v2603 = vrot.slane %v2552, 4
        %v2604 = vadd.f32 %v2552, %v2603
        %v2605 = vrot.slane %v2604, 2
        %v2606 = vadd.f32 %v2604, %v2605
        %v2607 = vrot.slane %v2606, 1
        %v2608 = vadd.f32 %v2606, %v2607
        %v2609 = vrot.slane %v2553, 4
        %v2610 = vadd.f32 %v2553, %v2609
        %v2611 = vrot.slane %v2610, 2
        %v2612 = vadd.f32 %v2610, %v2611
        %v2613 = vrot.slane %v2612, 1
        %v2614 = vadd.f32 %v2612, %v2613
        %v2615 = vrot.slane %v2554, 4
        %v2616 = vadd.f32 %v2554, %v2615
        %v2617 = vrot.slane %v2616, 2
        %v2618 = vadd.f32 %v2616, %v2617
        %v2619 = vrot.slane %v2618, 1
        %v2620 = vadd.f32 %v2618, %v2619
        %v2621 = vrot.slane %v2555, 4
        %v2622 = vadd.f32 %v2555, %v2621
        %v2623 = vrot.slane %v2622, 2
        %v2624 = vadd.f32 %v2622, %v2623
        %v2625 = vrot.slane %v2624, 1
        %v2626 = vadd.f32 %v2624, %v2625
        %v2627 = vrot.slane %v2556, 4
        %v2628 = vadd.f32 %v2556, %v2627
        %v2629 = vrot.slane %v2628, 2
        %v2630 = vadd.f32 %v2628, %v2629
        %v2631 = vrot.slane %v2630, 1
        %v2632 = vadd.f32 %v2630, %v2631
        %v2633 = vrot.slane %v2557, 4
        %v2634 = vadd.f32 %v2557, %v2633
        %v2635 = vrot.slane %v2634, 2
        %v2636 = vadd.f32 %v2634, %v2635
        %v2637 = vrot.slane %v2636, 1
        %v2638 = vadd.f32 %v2636, %v2637
        %v2639 = vrot.slane %v2558, 4
        %v2640 = vadd.f32 %v2558, %v2639
        %v2641 = vrot.slane %v2640, 2
        %v2642 = vadd.f32 %v2640, %v2641
        %v2643 = vrot.slane %v2642, 1
        %v2644 = vadd.f32 %v2642, %v2643
        %v2645 = vrot.slane %v2559, 4
        %v2646 = vadd.f32 %v2559, %v2645
        %v2647 = vrot.slane %v2646, 2
        %v2648 = vadd.f32 %v2646, %v2647
        %v2649 = vrot.slane %v2648, 1
        %v2650 = vadd.f32 %v2648, %v2649
        %v2651 = vrot.slane %v2560, 4
        %v2652 = vadd.f32 %v2560, %v2651
        %v2653 = vrot.slane %v2652, 2
        %v2654 = vadd.f32 %v2652, %v2653
        %v2655 = vrot.slane %v2654, 1
        %v2656 = vadd.f32 %v2654, %v2655
        %2657 = vset.pattern.permute.xlu0 3
        %2658 = vperm.xlu0 %2657, %v226
        %v2659 = vpop.permute.xlu0 %2658
        %2661 = vset.pattern.permute.xlu0 3
        %2662 = vperm.xlu0 %2661, %v227
        %v2663 = vpop.permute.xlu0 %2662
        %2665 = vset.pattern.permute.xlu0 3
        %2666 = vperm.xlu0 %2665, %v228
        %v2667 = vpop.permute.xlu0 %2666
        %2669 = vset.pattern.permute.xlu0 3
        %2670 = vperm.xlu0 %2669, %v229
        %v2671 = vpop.permute.xlu0 %2670
        %2673 = vset.pattern.permute.xlu0 3
        %2674 = vperm.xlu0 %2673, %v230
        %v2675 = vpop.permute.xlu0 %2674
        %2677 = vset.pattern.permute.xlu0 3
        %2678 = vperm.xlu0 %2677, %v231
        %v2679 = vpop.permute.xlu0 %2678
        %2681 = vset.pattern.permute.xlu0 3
        %2682 = vperm.xlu0 %2681, %v232
        %v2683 = vpop.permute.xlu0 %2682
        %2685 = vset.pattern.permute.xlu0 3
        %2686 = vperm.xlu0 %2685, %v233
        %v2687 = vpop.permute.xlu0 %2686
        %2689 = vset.pattern.permute.xlu0 3
        %2690 = vperm.xlu0 %2689, %v234
        %v2691 = vpop.permute.xlu0 %2690
        %2693 = vset.pattern.permute.xlu0 3
        %2694 = vperm.xlu0 %2693, %v235
        %v2695 = vpop.permute.xlu0 %2694
        %2697 = vset.pattern.permute.xlu0 3
        %2698 = vperm.xlu0 %2697, %v236
        %v2699 = vpop.permute.xlu0 %2698
        %2701 = vset.pattern.permute.xlu0 3
        %2702 = vperm.xlu0 %2701, %v237
        %v2703 = vpop.permute.xlu0 %2702
        %2705 = vset.pattern.permute.xlu0 3
        %2706 = vperm.xlu0 %2705, %v238
        %v2707 = vpop.permute.xlu0 %2706
        %2709 = vset.pattern.permute.xlu0 3
        %2710 = vperm.xlu0 %2709, %v239
        %v2711 = vpop.permute.xlu0 %2710
        %2713 = vset.pattern.permute.xlu0 3
        %2714 = vperm.xlu0 %2713, %v240
        %v2715 = vpop.permute.xlu0 %2714
        %2717 = vset.pattern.permute.xlu0 3
        %2718 = vperm.xlu0 %2717, %v241
        %v2719 = vpop.permute.xlu0 %2718
        %v2721 = vmul.f32 %v2659, %v2289
        %v2722 = vmul.f32 %v2663, %v2290
        %v2723 = vmul.f32 %v2667, %v2291
        %v2724 = vmul.f32 %v2671, %v2292
        %v2725 = vmul.f32 %v2675, %v2293
        %v2726 = vmul.f32 %v2679, %v2294
        %v2727 = vmul.f32 %v2683, %v2295
        %v2728 = vmul.f32 %v2687, %v2296
        %v2729 = vmul.f32 %v2691, %v2297
        %v2730 = vmul.f32 %v2695, %v2298
        %v2731 = vmul.f32 %v2699, %v2299
        %v2732 = vmul.f32 %v2703, %v2300
        %v2733 = vmul.f32 %v2707, %v2301
        %v2734 = vmul.f32 %v2711, %v2302
        %v2735 = vmul.f32 %v2715, %v2303
        %v2736 = vmul.f32 %v2719, %v2304
        %v2737 = vrot.slane %v2721, 4
        %v2738 = vadd.f32 %v2721, %v2737
        %v2739 = vrot.slane %v2738, 2
        %v2740 = vadd.f32 %v2738, %v2739
        %v2741 = vrot.slane %v2740, 1
        %v2742 = vadd.f32 %v2740, %v2741
        %v2743 = vrot.slane %v2722, 4
        %v2744 = vadd.f32 %v2722, %v2743
        %v2745 = vrot.slane %v2744, 2
        %v2746 = vadd.f32 %v2744, %v2745
        %v2747 = vrot.slane %v2746, 1
        %v2748 = vadd.f32 %v2746, %v2747
        %v2749 = vrot.slane %v2723, 4
        %v2750 = vadd.f32 %v2723, %v2749
        %v2751 = vrot.slane %v2750, 2
        %v2752 = vadd.f32 %v2750, %v2751
        %v2753 = vrot.slane %v2752, 1
        %v2754 = vadd.f32 %v2752, %v2753
        %v2755 = vrot.slane %v2724, 4
        %v2756 = vadd.f32 %v2724, %v2755
        %v2757 = vrot.slane %v2756, 2
        %v2758 = vadd.f32 %v2756, %v2757
        %v2759 = vrot.slane %v2758, 1
        %v2760 = vadd.f32 %v2758, %v2759
        %v2761 = vrot.slane %v2725, 4
        %v2762 = vadd.f32 %v2725, %v2761
        %v2763 = vrot.slane %v2762, 2
        %v2764 = vadd.f32 %v2762, %v2763
        %v2765 = vrot.slane %v2764, 1
        %v2766 = vadd.f32 %v2764, %v2765
        %v2767 = vrot.slane %v2726, 4
        %v2768 = vadd.f32 %v2726, %v2767
        %v2769 = vrot.slane %v2768, 2
        %v2770 = vadd.f32 %v2768, %v2769
        %v2771 = vrot.slane %v2770, 1
        %v2772 = vadd.f32 %v2770, %v2771
        %v2773 = vrot.slane %v2727, 4
        %v2774 = vadd.f32 %v2727, %v2773
        %v2775 = vrot.slane %v2774, 2
        %v2776 = vadd.f32 %v2774, %v2775
        %v2777 = vrot.slane %v2776, 1
        %v2778 = vadd.f32 %v2776, %v2777
        %v2779 = vrot.slane %v2728, 4
        %v2780 = vadd.f32 %v2728, %v2779
        %v2781 = vrot.slane %v2780, 2
        %v2782 = vadd.f32 %v2780, %v2781
        %v2783 = vrot.slane %v2782, 1
        %v2784 = vadd.f32 %v2782, %v2783
        %v2785 = vrot.slane %v2729, 4
        %v2786 = vadd.f32 %v2729, %v2785
        %v2787 = vrot.slane %v2786, 2
        %v2788 = vadd.f32 %v2786, %v2787
        %v2789 = vrot.slane %v2788, 1
        %v2790 = vadd.f32 %v2788, %v2789
        %v2791 = vrot.slane %v2730, 4
        %v2792 = vadd.f32 %v2730, %v2791
        %v2793 = vrot.slane %v2792, 2
        %v2794 = vadd.f32 %v2792, %v2793
        %v2795 = vrot.slane %v2794, 1
        %v2796 = vadd.f32 %v2794, %v2795
        %v2797 = vrot.slane %v2731, 4
        %v2798 = vadd.f32 %v2731, %v2797
        %v2799 = vrot.slane %v2798, 2
        %v2800 = vadd.f32 %v2798, %v2799
        %v2801 = vrot.slane %v2800, 1
        %v2802 = vadd.f32 %v2800, %v2801
        %v2803 = vrot.slane %v2732, 4
        %v2804 = vadd.f32 %v2732, %v2803
        %v2805 = vrot.slane %v2804, 2
        %v2806 = vadd.f32 %v2804, %v2805
        %v2807 = vrot.slane %v2806, 1
        %v2808 = vadd.f32 %v2806, %v2807
        %v2809 = vrot.slane %v2733, 4
        %v2810 = vadd.f32 %v2733, %v2809
        %v2811 = vrot.slane %v2810, 2
        %v2812 = vadd.f32 %v2810, %v2811
        %v2813 = vrot.slane %v2812, 1
        %v2814 = vadd.f32 %v2812, %v2813
        %v2815 = vrot.slane %v2734, 4
        %v2816 = vadd.f32 %v2734, %v2815
        %v2817 = vrot.slane %v2816, 2
        %v2818 = vadd.f32 %v2816, %v2817
        %v2819 = vrot.slane %v2818, 1
        %v2820 = vadd.f32 %v2818, %v2819
        %v2821 = vrot.slane %v2735, 4
        %v2822 = vadd.f32 %v2735, %v2821
        %v2823 = vrot.slane %v2822, 2
        %v2824 = vadd.f32 %v2822, %v2823
        %v2825 = vrot.slane %v2824, 1
        %v2826 = vadd.f32 %v2824, %v2825
        %v2827 = vrot.slane %v2736, 4
        %v2828 = vadd.f32 %v2736, %v2827
        %v2829 = vrot.slane %v2828, 2
        %v2830 = vadd.f32 %v2828, %v2829
        %v2831 = vrot.slane %v2830, 1
        %v2832 = vadd.f32 %v2830, %v2831
        %2834 = vset.pattern.permute.xlu0 0
        %2835 = vperm.xlu0 %2834, %v2390
        %v2836 = vpop.permute.xlu0 %2835
        %2839 = vset.pattern.permute.xlu0 0
        %2840 = vperm.xlu0 %2839, %v2396
        %v2841 = vpop.permute.xlu0 %2840
        %2844 = vset.pattern.permute.xlu0 0
        %2845 = vperm.xlu0 %2844, %v2402
        %v2846 = vpop.permute.xlu0 %2845
        %2849 = vset.pattern.permute.xlu0 0
        %2850 = vperm.xlu0 %2849, %v2408
        %v2851 = vpop.permute.xlu0 %2850
        %2854 = vset.pattern.permute.xlu0 0
        %2855 = vperm.xlu0 %2854, %v2414
        %v2856 = vpop.permute.xlu0 %2855
        %2859 = vset.pattern.permute.xlu0 0
        %2860 = vperm.xlu0 %2859, %v2420
        %v2861 = vpop.permute.xlu0 %2860
        %2864 = vset.pattern.permute.xlu0 0
        %2865 = vperm.xlu0 %2864, %v2426
        %v2866 = vpop.permute.xlu0 %2865
        %2869 = vset.pattern.permute.xlu0 0
        %2870 = vperm.xlu0 %2869, %v2432
        %v2871 = vpop.permute.xlu0 %2870
        %2874 = vset.pattern.permute.xlu0 0
        %2875 = vperm.xlu0 %2874, %v2438
        %v2876 = vpop.permute.xlu0 %2875
        %2879 = vset.pattern.permute.xlu0 0
        %2880 = vperm.xlu0 %2879, %v2444
        %v2881 = vpop.permute.xlu0 %2880
        %2884 = vset.pattern.permute.xlu0 0
        %2885 = vperm.xlu0 %2884, %v2450
        %v2886 = vpop.permute.xlu0 %2885
        %2889 = vset.pattern.permute.xlu0 0
        %2890 = vperm.xlu0 %2889, %v2456
        %v2891 = vpop.permute.xlu0 %2890
        %2894 = vset.pattern.permute.xlu0 0
        %2895 = vperm.xlu0 %2894, %v2462
        %v2896 = vpop.permute.xlu0 %2895
        %2899 = vset.pattern.permute.xlu0 0
        %2900 = vperm.xlu0 %2899, %v2468
        %v2901 = vpop.permute.xlu0 %2900
        %2904 = vset.pattern.permute.xlu0 0
        %2905 = vperm.xlu0 %2904, %v2474
        %v2906 = vpop.permute.xlu0 %2905
        %2909 = vset.pattern.permute.xlu0 0
        %2910 = vperm.xlu0 %2909, %v2480
        %v2911 = vpop.permute.xlu0 %2910
        %v2913 = vmul.f32 %v2836, %v2390
        %v2914 = vmul.f32 %v2841, %v2396
        %v2915 = vmul.f32 %v2846, %v2402
        %v2916 = vmul.f32 %v2851, %v2408
        %v2917 = vmul.f32 %v2856, %v2414
        %v2918 = vmul.f32 %v2861, %v2420
        %v2919 = vmul.f32 %v2866, %v2426
        %v2920 = vmul.f32 %v2871, %v2432
        %v2921 = vmul.f32 %v2876, %v2438
        %v2922 = vmul.f32 %v2881, %v2444
        %v2923 = vmul.f32 %v2886, %v2450
        %v2924 = vmul.f32 %v2891, %v2456
        %v2925 = vmul.f32 %v2896, %v2462
        %v2926 = vmul.f32 %v2901, %v2468
        %v2927 = vmul.f32 %v2906, %v2474
        %v2928 = vmul.f32 %v2911, %v2480
        %2930 = vset.pattern.permute.xlu0 0
        %2931 = vperm.xlu0 %2930, %v2566
        %v2932 = vpop.permute.xlu0 %2931
        %2935 = vset.pattern.permute.xlu0 0
        %2936 = vperm.xlu0 %2935, %v2572
        %v2937 = vpop.permute.xlu0 %2936
        %2940 = vset.pattern.permute.xlu0 0
        %2941 = vperm.xlu0 %2940, %v2578
        %v2942 = vpop.permute.xlu0 %2941
        %2945 = vset.pattern.permute.xlu0 0
        %2946 = vperm.xlu0 %2945, %v2584
        %v2947 = vpop.permute.xlu0 %2946
        %2950 = vset.pattern.permute.xlu0 0
        %2951 = vperm.xlu0 %2950, %v2590
        %v2952 = vpop.permute.xlu0 %2951
        %2955 = vset.pattern.permute.xlu0 0
        %2956 = vperm.xlu0 %2955, %v2596
        %v2957 = vpop.permute.xlu0 %2956
        %2960 = vset.pattern.permute.xlu0 0
        %2961 = vperm.xlu0 %2960, %v2602
        %v2962 = vpop.permute.xlu0 %2961
        %2965 = vset.pattern.permute.xlu0 0
        %2966 = vperm.xlu0 %2965, %v2608
        %v2967 = vpop.permute.xlu0 %2966
        %2970 = vset.pattern.permute.xlu0 0
        %2971 = vperm.xlu0 %2970, %v2614
        %v2972 = vpop.permute.xlu0 %2971
        %2975 = vset.pattern.permute.xlu0 0
        %2976 = vperm.xlu0 %2975, %v2620
        %v2977 = vpop.permute.xlu0 %2976
        %2980 = vset.pattern.permute.xlu0 0
        %2981 = vperm.xlu0 %2980, %v2626
        %v2982 = vpop.permute.xlu0 %2981
        %2985 = vset.pattern.permute.xlu0 0
        %2986 = vperm.xlu0 %2985, %v2632
        %v2987 = vpop.permute.xlu0 %2986
        %2990 = vset.pattern.permute.xlu0 0
        %2991 = vperm.xlu0 %2990, %v2638
        %v2992 = vpop.permute.xlu0 %2991
        %2995 = vset.pattern.permute.xlu0 0
        %2996 = vperm.xlu0 %2995, %v2644
        %v2997 = vpop.permute.xlu0 %2996
        %3000 = vset.pattern.permute.xlu0 0
        %3001 = vperm.xlu0 %3000, %v2650
        %v3002 = vpop.permute.xlu0 %3001
        %3005 = vset.pattern.permute.xlu0 0
        %3006 = vperm.xlu0 %3005, %v2656
        %v3007 = vpop.permute.xlu0 %3006
        %v3009 = vmul.f32 %v2932, %v2566
        %v3010 = vmul.f32 %v2937, %v2572
        %v3011 = vmul.f32 %v2942, %v2578
        %v3012 = vmul.f32 %v2947, %v2584
        %v3013 = vmul.f32 %v2952, %v2590
        %v3014 = vmul.f32 %v2957, %v2596
        %v3015 = vmul.f32 %v2962, %v2602
        %v3016 = vmul.f32 %v2967, %v2608
        %v3017 = vmul.f32 %v2972, %v2614
        %v3018 = vmul.f32 %v2977, %v2620
        %v3019 = vmul.f32 %v2982, %v2626
        %v3020 = vmul.f32 %v2987, %v2632
        %v3021 = vmul.f32 %v2992, %v2638
        %v3022 = vmul.f32 %v2997, %v2644
        %v3023 = vmul.f32 %v3002, %v2650
        %v3024 = vmul.f32 %v3007, %v2656
        %v3025 = vadd.f32 %v2913, %v3009
        %v3026 = vadd.f32 %v2914, %v3010
        %v3027 = vadd.f32 %v2915, %v3011
        %v3028 = vadd.f32 %v2916, %v3012
        %v3029 = vadd.f32 %v2917, %v3013
        %v3030 = vadd.f32 %v2918, %v3014
        %v3031 = vadd.f32 %v2919, %v3015
        %v3032 = vadd.f32 %v2920, %v3016
        %v3033 = vadd.f32 %v2921, %v3017
        %v3034 = vadd.f32 %v2922, %v3018
        %v3035 = vadd.f32 %v2923, %v3019
        %v3036 = vadd.f32 %v2924, %v3020
        %v3037 = vadd.f32 %v2925, %v3021
        %v3038 = vadd.f32 %v2926, %v3022
        %v3039 = vadd.f32 %v2927, %v3023
        %v3040 = vadd.f32 %v2928, %v3024
        %3042 = vset.pattern.permute.xlu0 0
        %3043 = vperm.xlu0 %3042, %v2742
        %v3044 = vpop.permute.xlu0 %3043
        %3047 = vset.pattern.permute.xlu0 0
        %3048 = vperm.xlu0 %3047, %v2748
        %v3049 = vpop.permute.xlu0 %3048
        %3052 = vset.pattern.permute.xlu0 0
        %3053 = vperm.xlu0 %3052, %v2754
        %v3054 = vpop.permute.xlu0 %3053
        %3057 = vset.pattern.permute.xlu0 0
        %3058 = vperm.xlu0 %3057, %v2760
        %v3059 = vpop.permute.xlu0 %3058
        %3062 = vset.pattern.permute.xlu0 0
        %3063 = vperm.xlu0 %3062, %v2766
        %v3064 = vpop.permute.xlu0 %3063
        %3067 = vset.pattern.permute.xlu0 0
        %3068 = vperm.xlu0 %3067, %v2772
        %v3069 = vpop.permute.xlu0 %3068
        %3072 = vset.pattern.permute.xlu0 0
        %3073 = vperm.xlu0 %3072, %v2778
        %v3074 = vpop.permute.xlu0 %3073
        %3077 = vset.pattern.permute.xlu0 0
        %3078 = vperm.xlu0 %3077, %v2784
        %v3079 = vpop.permute.xlu0 %3078
        %3082 = vset.pattern.permute.xlu0 0
        %3083 = vperm.xlu0 %3082, %v2790
        %v3084 = vpop.permute.xlu0 %3083
        %3087 = vset.pattern.permute.xlu0 0
        %3088 = vperm.xlu0 %3087, %v2796
        %v3089 = vpop.permute.xlu0 %3088
        %3092 = vset.pattern.permute.xlu0 0
        %3093 = vperm.xlu0 %3092, %v2802
        %v3094 = vpop.permute.xlu0 %3093
        %3097 = vset.pattern.permute.xlu0 0
        %3098 = vperm.xlu0 %3097, %v2808
        %v3099 = vpop.permute.xlu0 %3098
        %3102 = vset.pattern.permute.xlu0 0
        %3103 = vperm.xlu0 %3102, %v2814
        %v3104 = vpop.permute.xlu0 %3103
        %3107 = vset.pattern.permute.xlu0 0
        %3108 = vperm.xlu0 %3107, %v2820
        %v3109 = vpop.permute.xlu0 %3108
        %3112 = vset.pattern.permute.xlu0 0
        %3113 = vperm.xlu0 %3112, %v2826
        %v3114 = vpop.permute.xlu0 %3113
        %3117 = vset.pattern.permute.xlu0 0
        %3118 = vperm.xlu0 %3117, %v2832
        %v3119 = vpop.permute.xlu0 %3118
        %v3121 = vmul.f32 %v3044, %v2742
        %v3122 = vmul.f32 %v3049, %v2748
        %v3123 = vmul.f32 %v3054, %v2754
        %v3124 = vmul.f32 %v3059, %v2760
        %v3125 = vmul.f32 %v3064, %v2766
        %v3126 = vmul.f32 %v3069, %v2772
        %v3127 = vmul.f32 %v3074, %v2778
        %v3128 = vmul.f32 %v3079, %v2784
        %v3129 = vmul.f32 %v3084, %v2790
        %v3130 = vmul.f32 %v3089, %v2796
        %v3131 = vmul.f32 %v3094, %v2802
        %v3132 = vmul.f32 %v3099, %v2808
        %v3133 = vmul.f32 %v3104, %v2814
        %v3134 = vmul.f32 %v3109, %v2820
        %v3135 = vmul.f32 %v3114, %v2826
        %v3136 = vmul.f32 %v3119, %v2832
        %v3137 = vadd.f32 %v3025, %v3121
        %v3138 = vadd.f32 %v3026, %v3122
        %v3139 = vadd.f32 %v3027, %v3123
        %v3140 = vadd.f32 %v3028, %v3124
        %v3141 = vadd.f32 %v3029, %v3125
        %v3142 = vadd.f32 %v3030, %v3126
        %v3143 = vadd.f32 %v3031, %v3127
        %v3144 = vadd.f32 %v3032, %v3128
        %v3145 = vadd.f32 %v3033, %v3129
        %v3146 = vadd.f32 %v3034, %v3130
        %v3147 = vadd.f32 %v3035, %v3131
        %v3148 = vadd.f32 %v3036, %v3132
        %v3149 = vadd.f32 %v3037, %v3133
        %v3150 = vadd.f32 %v3038, %v3134
        %v3151 = vadd.f32 %v3039, %v3135
        %v3152 = vadd.f32 %v3040, %v3136
        %vm3169 = vcmask 1041409
        %v3170 = vsel %vm3169, %v3138, %v3137
        %vm3171 = vcmask 1042434
        %v3172 = vsel %vm3171, %v3139, %v3170
        %vm3173 = vcmask 1043459
        %v3174 = vsel %vm3173, %v3140, %v3172
        %vm3175 = vcmask 1044484
        %v3176 = vsel %vm3175, %v3141, %v3174
        %vm3177 = vcmask 1045509
        %v3178 = vsel %vm3177, %v3142, %v3176
        %vm3179 = vcmask 1046534
        %v3180 = vsel %vm3179, %v3143, %v3178
        %vm3181 = vcmask 1047559
        %v3182 = vsel %vm3181, %v3144, %v3180
        %v3183 = vsel %vm3169, %v3146, %v3145
        %v3184 = vsel %vm3171, %v3147, %v3183
        %v3185 = vsel %vm3173, %v3148, %v3184
        %v3186 = vsel %vm3175, %v3149, %v3185
        %v3187 = vsel %vm3177, %v3150, %v3186
        %v3188 = vsel %vm3179, %v3151, %v3187
        %v3189 = vsel %vm3181, %v3152, %v3188
        %3192 = vst [vmem:[%s218] sm:$0xff] %v3182
        %3193 = vst [vmem:[%s218 + $0x8] sm:$0xff] %v3189
        %3194 = vset.pattern.permute.xlu0 1
        %3195 = vperm.xlu0 %3194, %v2390
        %v3196 = vpop.permute.xlu0 %3195
        %3198 = vset.pattern.permute.xlu0 1
        %3199 = vperm.xlu0 %3198, %v2396
        %v3200 = vpop.permute.xlu0 %3199
        %3202 = vset.pattern.permute.xlu0 1
        %3203 = vperm.xlu0 %3202, %v2402
        %v3204 = vpop.permute.xlu0 %3203
        %3206 = vset.pattern.permute.xlu0 1
        %3207 = vperm.xlu0 %3206, %v2408
        %v3208 = vpop.permute.xlu0 %3207
        %3210 = vset.pattern.permute.xlu0 1
        %3211 = vperm.xlu0 %3210, %v2414
        %v3212 = vpop.permute.xlu0 %3211
        %3214 = vset.pattern.permute.xlu0 1
        %3215 = vperm.xlu0 %3214, %v2420
        %v3216 = vpop.permute.xlu0 %3215
        %3218 = vset.pattern.permute.xlu0 1
        %3219 = vperm.xlu0 %3218, %v2426
        %v3220 = vpop.permute.xlu0 %3219
        %3222 = vset.pattern.permute.xlu0 1
        %3223 = vperm.xlu0 %3222, %v2432
        %v3224 = vpop.permute.xlu0 %3223
        %3226 = vset.pattern.permute.xlu0 1
        %3227 = vperm.xlu0 %3226, %v2438
        %v3228 = vpop.permute.xlu0 %3227
        %3230 = vset.pattern.permute.xlu0 1
        %3231 = vperm.xlu0 %3230, %v2444
        %v3232 = vpop.permute.xlu0 %3231
        %3234 = vset.pattern.permute.xlu0 1
        %3235 = vperm.xlu0 %3234, %v2450
        %v3236 = vpop.permute.xlu0 %3235
        %3238 = vset.pattern.permute.xlu0 1
        %3239 = vperm.xlu0 %3238, %v2456
        %v3240 = vpop.permute.xlu0 %3239
        %3242 = vset.pattern.permute.xlu0 1
        %3243 = vperm.xlu0 %3242, %v2462
        %v3244 = vpop.permute.xlu0 %3243
        %3246 = vset.pattern.permute.xlu0 1
        %3247 = vperm.xlu0 %3246, %v2468
        %v3248 = vpop.permute.xlu0 %3247
        %3250 = vset.pattern.permute.xlu0 1
        %3251 = vperm.xlu0 %3250, %v2474
        %v3252 = vpop.permute.xlu0 %3251
        %3254 = vset.pattern.permute.xlu0 1
        %3255 = vperm.xlu0 %3254, %v2480
        %v3256 = vpop.permute.xlu0 %3255
        %v3258 = vmul.f32 %v3196, %v2390
        %v3259 = vmul.f32 %v3200, %v2396
        %v3260 = vmul.f32 %v3204, %v2402
        %v3261 = vmul.f32 %v3208, %v2408
        %v3262 = vmul.f32 %v3212, %v2414
        %v3263 = vmul.f32 %v3216, %v2420
        %v3264 = vmul.f32 %v3220, %v2426
        %v3265 = vmul.f32 %v3224, %v2432
        %v3266 = vmul.f32 %v3228, %v2438
        %v3267 = vmul.f32 %v3232, %v2444
        %v3268 = vmul.f32 %v3236, %v2450
        %v3269 = vmul.f32 %v3240, %v2456
        %v3270 = vmul.f32 %v3244, %v2462
        %v3271 = vmul.f32 %v3248, %v2468
        %v3272 = vmul.f32 %v3252, %v2474
        %v3273 = vmul.f32 %v3256, %v2480
        %3274 = vset.pattern.permute.xlu0 1
        %3275 = vperm.xlu0 %3274, %v2566
        %v3276 = vpop.permute.xlu0 %3275
        %3278 = vset.pattern.permute.xlu0 1
        %3279 = vperm.xlu0 %3278, %v2572
        %v3280 = vpop.permute.xlu0 %3279
        %3282 = vset.pattern.permute.xlu0 1
        %3283 = vperm.xlu0 %3282, %v2578
        %v3284 = vpop.permute.xlu0 %3283
        %3286 = vset.pattern.permute.xlu0 1
        %3287 = vperm.xlu0 %3286, %v2584
        %v3288 = vpop.permute.xlu0 %3287
        %3290 = vset.pattern.permute.xlu0 1
        %3291 = vperm.xlu0 %3290, %v2590
        %v3292 = vpop.permute.xlu0 %3291
        %3294 = vset.pattern.permute.xlu0 1
        %3295 = vperm.xlu0 %3294, %v2596
        %v3296 = vpop.permute.xlu0 %3295
        %3298 = vset.pattern.permute.xlu0 1
        %3299 = vperm.xlu0 %3298, %v2602
        %v3300 = vpop.permute.xlu0 %3299
        %3302 = vset.pattern.permute.xlu0 1
        %3303 = vperm.xlu0 %3302, %v2608
        %v3304 = vpop.permute.xlu0 %3303
        %3306 = vset.pattern.permute.xlu0 1
        %3307 = vperm.xlu0 %3306, %v2614
        %v3308 = vpop.permute.xlu0 %3307
        %3310 = vset.pattern.permute.xlu0 1
        %3311 = vperm.xlu0 %3310, %v2620
        %v3312 = vpop.permute.xlu0 %3311
        %3314 = vset.pattern.permute.xlu0 1
        %3315 = vperm.xlu0 %3314, %v2626
        %v3316 = vpop.permute.xlu0 %3315
        %3318 = vset.pattern.permute.xlu0 1
        %3319 = vperm.xlu0 %3318, %v2632
        %v3320 = vpop.permute.xlu0 %3319
        %3322 = vset.pattern.permute.xlu0 1
        %3323 = vperm.xlu0 %3322, %v2638
        %v3324 = vpop.permute.xlu0 %3323
        %3326 = vset.pattern.permute.xlu0 1
        %3327 = vperm.xlu0 %3326, %v2644
        %v3328 = vpop.permute.xlu0 %3327
        %3330 = vset.pattern.permute.xlu0 1
        %3331 = vperm.xlu0 %3330, %v2650
        %v3332 = vpop.permute.xlu0 %3331
        %3334 = vset.pattern.permute.xlu0 1
        %3335 = vperm.xlu0 %3334, %v2656
        %v3336 = vpop.permute.xlu0 %3335
        %v3338 = vmul.f32 %v3276, %v2566
        %v3339 = vmul.f32 %v3280, %v2572
        %v3340 = vmul.f32 %v3284, %v2578
        %v3341 = vmul.f32 %v3288, %v2584
        %v3342 = vmul.f32 %v3292, %v2590
        %v3343 = vmul.f32 %v3296, %v2596
        %v3344 = vmul.f32 %v3300, %v2602
        %v3345 = vmul.f32 %v3304, %v2608
        %v3346 = vmul.f32 %v3308, %v2614
        %v3347 = vmul.f32 %v3312, %v2620
        %v3348 = vmul.f32 %v3316, %v2626
        %v3349 = vmul.f32 %v3320, %v2632
        %v3350 = vmul.f32 %v3324, %v2638
        %v3351 = vmul.f32 %v3328, %v2644
        %v3352 = vmul.f32 %v3332, %v2650
        %v3353 = vmul.f32 %v3336, %v2656
        %v3354 = vadd.f32 %v3258, %v3338
        %v3355 = vadd.f32 %v3259, %v3339
        %v3356 = vadd.f32 %v3260, %v3340
        %v3357 = vadd.f32 %v3261, %v3341
        %v3358 = vadd.f32 %v3262, %v3342
        %v3359 = vadd.f32 %v3263, %v3343
        %v3360 = vadd.f32 %v3264, %v3344
        %v3361 = vadd.f32 %v3265, %v3345
        %v3362 = vadd.f32 %v3266, %v3346
        %v3363 = vadd.f32 %v3267, %v3347
        %v3364 = vadd.f32 %v3268, %v3348
        %v3365 = vadd.f32 %v3269, %v3349
        %v3366 = vadd.f32 %v3270, %v3350
        %v3367 = vadd.f32 %v3271, %v3351
        %v3368 = vadd.f32 %v3272, %v3352
        %v3369 = vadd.f32 %v3273, %v3353
        %3370 = vset.pattern.permute.xlu0 1
        %3371 = vperm.xlu0 %3370, %v2742
        %v3372 = vpop.permute.xlu0 %3371
        %3374 = vset.pattern.permute.xlu0 1
        %3375 = vperm.xlu0 %3374, %v2748
        %v3376 = vpop.permute.xlu0 %3375
        %3378 = vset.pattern.permute.xlu0 1
        %3379 = vperm.xlu0 %3378, %v2754
        %v3380 = vpop.permute.xlu0 %3379
        %3382 = vset.pattern.permute.xlu0 1
        %3383 = vperm.xlu0 %3382, %v2760
        %v3384 = vpop.permute.xlu0 %3383
        %3386 = vset.pattern.permute.xlu0 1
        %3387 = vperm.xlu0 %3386, %v2766
        %v3388 = vpop.permute.xlu0 %3387
        %3390 = vset.pattern.permute.xlu0 1
        %3391 = vperm.xlu0 %3390, %v2772
        %v3392 = vpop.permute.xlu0 %3391
        %3394 = vset.pattern.permute.xlu0 1
        %3395 = vperm.xlu0 %3394, %v2778
        %v3396 = vpop.permute.xlu0 %3395
        %3398 = vset.pattern.permute.xlu0 1
        %3399 = vperm.xlu0 %3398, %v2784
        %v3400 = vpop.permute.xlu0 %3399
        %3402 = vset.pattern.permute.xlu0 1
        %3403 = vperm.xlu0 %3402, %v2790
        %v3404 = vpop.permute.xlu0 %3403
        %3406 = vset.pattern.permute.xlu0 1
        %3407 = vperm.xlu0 %3406, %v2796
        %v3408 = vpop.permute.xlu0 %3407
        %3410 = vset.pattern.permute.xlu0 1
        %3411 = vperm.xlu0 %3410, %v2802
        %v3412 = vpop.permute.xlu0 %3411
        %3414 = vset.pattern.permute.xlu0 1
        %3415 = vperm.xlu0 %3414, %v2808
        %v3416 = vpop.permute.xlu0 %3415
        %3418 = vset.pattern.permute.xlu0 1
        %3419 = vperm.xlu0 %3418, %v2814
        %v3420 = vpop.permute.xlu0 %3419
        %3422 = vset.pattern.permute.xlu0 1
        %3423 = vperm.xlu0 %3422, %v2820
        %v3424 = vpop.permute.xlu0 %3423
        %3426 = vset.pattern.permute.xlu0 1
        %3427 = vperm.xlu0 %3426, %v2826
        %v3428 = vpop.permute.xlu0 %3427
        %3430 = vset.pattern.permute.xlu0 1
        %3431 = vperm.xlu0 %3430, %v2832
        %v3432 = vpop.permute.xlu0 %3431
        %v3434 = vmul.f32 %v3372, %v2742
        %v3435 = vmul.f32 %v3376, %v2748
        %v3436 = vmul.f32 %v3380, %v2754
        %v3437 = vmul.f32 %v3384, %v2760
        %v3438 = vmul.f32 %v3388, %v2766
        %v3439 = vmul.f32 %v3392, %v2772
        %v3440 = vmul.f32 %v3396, %v2778
        %v3441 = vmul.f32 %v3400, %v2784
        %v3442 = vmul.f32 %v3404, %v2790
        %v3443 = vmul.f32 %v3408, %v2796
        %v3444 = vmul.f32 %v3412, %v2802
        %v3445 = vmul.f32 %v3416, %v2808
        %v3446 = vmul.f32 %v3420, %v2814
        %v3447 = vmul.f32 %v3424, %v2820
        %v3448 = vmul.f32 %v3428, %v2826
        %v3449 = vmul.f32 %v3432, %v2832
        %v3450 = vadd.f32 %v3354, %v3434
        %v3451 = vadd.f32 %v3355, %v3435
        %v3452 = vadd.f32 %v3356, %v3436
        %v3453 = vadd.f32 %v3357, %v3437
        %v3454 = vadd.f32 %v3358, %v3438
        %v3455 = vadd.f32 %v3359, %v3439
        %v3456 = vadd.f32 %v3360, %v3440
        %v3457 = vadd.f32 %v3361, %v3441
        %v3458 = vadd.f32 %v3362, %v3442
        %v3459 = vadd.f32 %v3363, %v3443
        %v3460 = vadd.f32 %v3364, %v3444
        %v3461 = vadd.f32 %v3365, %v3445
        %v3462 = vadd.f32 %v3366, %v3446
        %v3463 = vadd.f32 %v3367, %v3447
        %v3464 = vadd.f32 %v3368, %v3448
        %v3465 = vadd.f32 %v3369, %v3449
        %v3482 = vsel %vm3169, %v3451, %v3450
        %v3483 = vsel %vm3171, %v3452, %v3482
        %v3484 = vsel %vm3173, %v3453, %v3483
        %v3485 = vsel %vm3175, %v3454, %v3484
        %v3486 = vsel %vm3177, %v3455, %v3485
        %v3487 = vsel %vm3179, %v3456, %v3486
        %v3488 = vsel %vm3181, %v3457, %v3487
        %v3489 = vsel %vm3169, %v3459, %v3458
        %v3490 = vsel %vm3171, %v3460, %v3489
        %v3491 = vsel %vm3173, %v3461, %v3490
        %v3492 = vsel %vm3175, %v3462, %v3491
        %v3493 = vsel %vm3177, %v3463, %v3492
        %v3494 = vsel %vm3179, %v3464, %v3493
        %v3495 = vsel %vm3181, %v3465, %v3494
        %s3498 = scalar_lea.vmem %s218, 16 [#allocation2]
        %3499 = vst [vmem:[%s3498] sm:$0xff] %v3488
        %3500 = vst [vmem:[%s3498 + $0x8] sm:$0xff] %v3495
        %3501 = vset.pattern.permute.xlu0 2
        %3502 = vperm.xlu0 %3501, %v2390
        %v3503 = vpop.permute.xlu0 %3502
        %3505 = vset.pattern.permute.xlu0 2
        %3506 = vperm.xlu0 %3505, %v2396
        %v3507 = vpop.permute.xlu0 %3506
        %3509 = vset.pattern.permute.xlu0 2
        %3510 = vperm.xlu0 %3509, %v2402
        %v3511 = vpop.permute.xlu0 %3510
        %3513 = vset.pattern.permute.xlu0 2
        %3514 = vperm.xlu0 %3513, %v2408
        %v3515 = vpop.permute.xlu0 %3514
        %3517 = vset.pattern.permute.xlu0 2
        %3518 = vperm.xlu0 %3517, %v2414
        %v3519 = vpop.permute.xlu0 %3518
        %3521 = vset.pattern.permute.xlu0 2
        %3522 = vperm.xlu0 %3521, %v2420
        %v3523 = vpop.permute.xlu0 %3522
        %3525 = vset.pattern.permute.xlu0 2
        %3526 = vperm.xlu0 %3525, %v2426
        %v3527 = vpop.permute.xlu0 %3526
        %3529 = vset.pattern.permute.xlu0 2
        %3530 = vperm.xlu0 %3529, %v2432
        %v3531 = vpop.permute.xlu0 %3530
        %3533 = vset.pattern.permute.xlu0 2
        %3534 = vperm.xlu0 %3533, %v2438
        %v3535 = vpop.permute.xlu0 %3534
        %3537 = vset.pattern.permute.xlu0 2
        %3538 = vperm.xlu0 %3537, %v2444
        %v3539 = vpop.permute.xlu0 %3538
        %3541 = vset.pattern.permute.xlu0 2
        %3542 = vperm.xlu0 %3541, %v2450
        %v3543 = vpop.permute.xlu0 %3542
        %3545 = vset.pattern.permute.xlu0 2
        %3546 = vperm.xlu0 %3545, %v2456
        %v3547 = vpop.permute.xlu0 %3546
        %3549 = vset.pattern.permute.xlu0 2
        %3550 = vperm.xlu0 %3549, %v2462
        %v3551 = vpop.permute.xlu0 %3550
        %3553 = vset.pattern.permute.xlu0 2
        %3554 = vperm.xlu0 %3553, %v2468
        %v3555 = vpop.permute.xlu0 %3554
        %3557 = vset.pattern.permute.xlu0 2
        %3558 = vperm.xlu0 %3557, %v2474
        %v3559 = vpop.permute.xlu0 %3558
        %3561 = vset.pattern.permute.xlu0 2
        %3562 = vperm.xlu0 %3561, %v2480
        %v3563 = vpop.permute.xlu0 %3562
        %v3565 = vmul.f32 %v3503, %v2390
        %v3566 = vmul.f32 %v3507, %v2396
        %v3567 = vmul.f32 %v3511, %v2402
        %v3568 = vmul.f32 %v3515, %v2408
        %v3569 = vmul.f32 %v3519, %v2414
        %v3570 = vmul.f32 %v3523, %v2420
        %v3571 = vmul.f32 %v3527, %v2426
        %v3572 = vmul.f32 %v3531, %v2432
        %v3573 = vmul.f32 %v3535, %v2438
        %v3574 = vmul.f32 %v3539, %v2444
        %v3575 = vmul.f32 %v3543, %v2450
        %v3576 = vmul.f32 %v3547, %v2456
        %v3577 = vmul.f32 %v3551, %v2462
        %v3578 = vmul.f32 %v3555, %v2468
        %v3579 = vmul.f32 %v3559, %v2474
        %v3580 = vmul.f32 %v3563, %v2480
        %3581 = vset.pattern.permute.xlu0 2
        %3582 = vperm.xlu0 %3581, %v2566
        %v3583 = vpop.permute.xlu0 %3582
        %3585 = vset.pattern.permute.xlu0 2
        %3586 = vperm.xlu0 %3585, %v2572
        %v3587 = vpop.permute.xlu0 %3586
        %3589 = vset.pattern.permute.xlu0 2
        %3590 = vperm.xlu0 %3589, %v2578
        %v3591 = vpop.permute.xlu0 %3590
        %3593 = vset.pattern.permute.xlu0 2
        %3594 = vperm.xlu0 %3593, %v2584
        %v3595 = vpop.permute.xlu0 %3594
        %3597 = vset.pattern.permute.xlu0 2
        %3598 = vperm.xlu0 %3597, %v2590
        %v3599 = vpop.permute.xlu0 %3598
        %3601 = vset.pattern.permute.xlu0 2
        %3602 = vperm.xlu0 %3601, %v2596
        %v3603 = vpop.permute.xlu0 %3602
        %3605 = vset.pattern.permute.xlu0 2
        %3606 = vperm.xlu0 %3605, %v2602
        %v3607 = vpop.permute.xlu0 %3606
        %3609 = vset.pattern.permute.xlu0 2
        %3610 = vperm.xlu0 %3609, %v2608
        %v3611 = vpop.permute.xlu0 %3610
        %3613 = vset.pattern.permute.xlu0 2
        %3614 = vperm.xlu0 %3613, %v2614
        %v3615 = vpop.permute.xlu0 %3614
        %3617 = vset.pattern.permute.xlu0 2
        %3618 = vperm.xlu0 %3617, %v2620
        %v3619 = vpop.permute.xlu0 %3618
        %3621 = vset.pattern.permute.xlu0 2
        %3622 = vperm.xlu0 %3621, %v2626
        %v3623 = vpop.permute.xlu0 %3622
        %3625 = vset.pattern.permute.xlu0 2
        %3626 = vperm.xlu0 %3625, %v2632
        %v3627 = vpop.permute.xlu0 %3626
        %3629 = vset.pattern.permute.xlu0 2
        %3630 = vperm.xlu0 %3629, %v2638
        %v3631 = vpop.permute.xlu0 %3630
        %3633 = vset.pattern.permute.xlu0 2
        %3634 = vperm.xlu0 %3633, %v2644
        %v3635 = vpop.permute.xlu0 %3634
        %3637 = vset.pattern.permute.xlu0 2
        %3638 = vperm.xlu0 %3637, %v2650
        %v3639 = vpop.permute.xlu0 %3638
        %3641 = vset.pattern.permute.xlu0 2
        %3642 = vperm.xlu0 %3641, %v2656
        %v3643 = vpop.permute.xlu0 %3642
        %v3645 = vmul.f32 %v3583, %v2566
        %v3646 = vmul.f32 %v3587, %v2572
        %v3647 = vmul.f32 %v3591, %v2578
        %v3648 = vmul.f32 %v3595, %v2584
        %v3649 = vmul.f32 %v3599, %v2590
        %v3650 = vmul.f32 %v3603, %v2596
        %v3651 = vmul.f32 %v3607, %v2602
        %v3652 = vmul.f32 %v3611, %v2608
        %v3653 = vmul.f32 %v3615, %v2614
        %v3654 = vmul.f32 %v3619, %v2620
        %v3655 = vmul.f32 %v3623, %v2626
        %v3656 = vmul.f32 %v3627, %v2632
        %v3657 = vmul.f32 %v3631, %v2638
        %v3658 = vmul.f32 %v3635, %v2644
        %v3659 = vmul.f32 %v3639, %v2650
        %v3660 = vmul.f32 %v3643, %v2656
        %v3661 = vadd.f32 %v3565, %v3645
        %v3662 = vadd.f32 %v3566, %v3646
        %v3663 = vadd.f32 %v3567, %v3647
        %v3664 = vadd.f32 %v3568, %v3648
        %v3665 = vadd.f32 %v3569, %v3649
        %v3666 = vadd.f32 %v3570, %v3650
        %v3667 = vadd.f32 %v3571, %v3651
        %v3668 = vadd.f32 %v3572, %v3652
        %v3669 = vadd.f32 %v3573, %v3653
        %v3670 = vadd.f32 %v3574, %v3654
        %v3671 = vadd.f32 %v3575, %v3655
        %v3672 = vadd.f32 %v3576, %v3656
        %v3673 = vadd.f32 %v3577, %v3657
        %v3674 = vadd.f32 %v3578, %v3658
        %v3675 = vadd.f32 %v3579, %v3659
        %v3676 = vadd.f32 %v3580, %v3660
        %3677 = vset.pattern.permute.xlu0 2
        %3678 = vperm.xlu0 %3677, %v2742
        %v3679 = vpop.permute.xlu0 %3678
        %3681 = vset.pattern.permute.xlu0 2
        %3682 = vperm.xlu0 %3681, %v2748
        %v3683 = vpop.permute.xlu0 %3682
        %3685 = vset.pattern.permute.xlu0 2
        %3686 = vperm.xlu0 %3685, %v2754
        %v3687 = vpop.permute.xlu0 %3686
        %3689 = vset.pattern.permute.xlu0 2
        %3690 = vperm.xlu0 %3689, %v2760
        %v3691 = vpop.permute.xlu0 %3690
        %3693 = vset.pattern.permute.xlu0 2
        %3694 = vperm.xlu0 %3693, %v2766
        %v3695 = vpop.permute.xlu0 %3694
        %3697 = vset.pattern.permute.xlu0 2
        %3698 = vperm.xlu0 %3697, %v2772
        %v3699 = vpop.permute.xlu0 %3698
        %3701 = vset.pattern.permute.xlu0 2
        %3702 = vperm.xlu0 %3701, %v2778
        %v3703 = vpop.permute.xlu0 %3702
        %3705 = vset.pattern.permute.xlu0 2
        %3706 = vperm.xlu0 %3705, %v2784
        %v3707 = vpop.permute.xlu0 %3706
        %3709 = vset.pattern.permute.xlu0 2
        %3710 = vperm.xlu0 %3709, %v2790
        %v3711 = vpop.permute.xlu0 %3710
        %3713 = vset.pattern.permute.xlu0 2
        %3714 = vperm.xlu0 %3713, %v2796
        %v3715 = vpop.permute.xlu0 %3714
        %3717 = vset.pattern.permute.xlu0 2
        %3718 = vperm.xlu0 %3717, %v2802
        %v3719 = vpop.permute.xlu0 %3718
        %3721 = vset.pattern.permute.xlu0 2
        %3722 = vperm.xlu0 %3721, %v2808
        %v3723 = vpop.permute.xlu0 %3722
        %3725 = vset.pattern.permute.xlu0 2
        %3726 = vperm.xlu0 %3725, %v2814
        %v3727 = vpop.permute.xlu0 %3726
        %3729 = vset.pattern.permute.xlu0 2
        %3730 = vperm.xlu0 %3729, %v2820
        %v3731 = vpop.permute.xlu0 %3730
        %3733 = vset.pattern.permute.xlu0 2
        %3734 = vperm.xlu0 %3733, %v2826
        %v3735 = vpop.permute.xlu0 %3734
        %3737 = vset.pattern.permute.xlu0 2
        %3738 = vperm.xlu0 %3737, %v2832
        %v3739 = vpop.permute.xlu0 %3738
        %v3741 = vmul.f32 %v3679, %v2742
        %v3742 = vmul.f32 %v3683, %v2748
        %v3743 = vmul.f32 %v3687, %v2754
        %v3744 = vmul.f32 %v3691, %v2760
        %v3745 = vmul.f32 %v3695, %v2766
        %v3746 = vmul.f32 %v3699, %v2772
        %v3747 = vmul.f32 %v3703, %v2778
        %v3748 = vmul.f32 %v3707, %v2784
        %v3749 = vmul.f32 %v3711, %v2790
        %v3750 = vmul.f32 %v3715, %v2796
        %v3751 = vmul.f32 %v3719, %v2802
        %v3752 = vmul.f32 %v3723, %v2808
        %v3753 = vmul.f32 %v3727, %v2814
        %v3754 = vmul.f32 %v3731, %v2820
        %v3755 = vmul.f32 %v3735, %v2826
        %v3756 = vmul.f32 %v3739, %v2832
        %v3757 = vadd.f32 %v3661, %v3741
        %v3758 = vadd.f32 %v3662, %v3742
        %v3759 = vadd.f32 %v3663, %v3743
        %v3760 = vadd.f32 %v3664, %v3744
        %v3761 = vadd.f32 %v3665, %v3745
        %v3762 = vadd.f32 %v3666, %v3746
        %v3763 = vadd.f32 %v3667, %v3747
        %v3764 = vadd.f32 %v3668, %v3748
        %v3765 = vadd.f32 %v3669, %v3749
        %v3766 = vadd.f32 %v3670, %v3750
        %v3767 = vadd.f32 %v3671, %v3751
        %v3768 = vadd.f32 %v3672, %v3752
        %v3769 = vadd.f32 %v3673, %v3753
        %v3770 = vadd.f32 %v3674, %v3754
        %v3771 = vadd.f32 %v3675, %v3755
        %v3772 = vadd.f32 %v3676, %v3756
        %v3789 = vsel %vm3169, %v3758, %v3757
        %v3790 = vsel %vm3171, %v3759, %v3789
        %v3791 = vsel %vm3173, %v3760, %v3790
        %v3792 = vsel %vm3175, %v3761, %v3791
        %v3793 = vsel %vm3177, %v3762, %v3792
        %v3794 = vsel %vm3179, %v3763, %v3793
        %v3795 = vsel %vm3181, %v3764, %v3794
        %v3796 = vsel %vm3169, %v3766, %v3765
        %v3797 = vsel %vm3171, %v3767, %v3796
        %v3798 = vsel %vm3173, %v3768, %v3797
        %v3799 = vsel %vm3175, %v3769, %v3798
        %v3800 = vsel %vm3177, %v3770, %v3799
        %v3801 = vsel %vm3179, %v3771, %v3800
        %v3802 = vsel %vm3181, %v3772, %v3801
        %s3805 = scalar_lea.vmem %s218, 32 [#allocation2]
        %3806 = vst [vmem:[%s3805] sm:$0xff] %v3795
        %3807 = vst [vmem:[%s3805 + $0x8] sm:$0xff] %v3802
        %3808 = vset.pattern.permute.xlu0 3
        %3809 = vperm.xlu0 %3808, %v2390
        %v3810 = vpop.permute.xlu0 %3809
        %3812 = vset.pattern.permute.xlu0 3
        %3813 = vperm.xlu0 %3812, %v2396
        %v3814 = vpop.permute.xlu0 %3813
        %3816 = vset.pattern.permute.xlu0 3
        %3817 = vperm.xlu0 %3816, %v2402
        %v3818 = vpop.permute.xlu0 %3817
        %3820 = vset.pattern.permute.xlu0 3
        %3821 = vperm.xlu0 %3820, %v2408
        %v3822 = vpop.permute.xlu0 %3821
        %3824 = vset.pattern.permute.xlu0 3
        %3825 = vperm.xlu0 %3824, %v2414
        %v3826 = vpop.permute.xlu0 %3825
        %3828 = vset.pattern.permute.xlu0 3
        %3829 = vperm.xlu0 %3828, %v2420
        %v3830 = vpop.permute.xlu0 %3829
        %3832 = vset.pattern.permute.xlu0 3
        %3833 = vperm.xlu0 %3832, %v2426
        %v3834 = vpop.permute.xlu0 %3833
        %3836 = vset.pattern.permute.xlu0 3
        %3837 = vperm.xlu0 %3836, %v2432
        %v3838 = vpop.permute.xlu0 %3837
        %3840 = vset.pattern.permute.xlu0 3
        %3841 = vperm.xlu0 %3840, %v2438
        %v3842 = vpop.permute.xlu0 %3841
        %3844 = vset.pattern.permute.xlu0 3
        %3845 = vperm.xlu0 %3844, %v2444
        %v3846 = vpop.permute.xlu0 %3845
        %3848 = vset.pattern.permute.xlu0 3
        %3849 = vperm.xlu0 %3848, %v2450
        %v3850 = vpop.permute.xlu0 %3849
        %3852 = vset.pattern.permute.xlu0 3
        %3853 = vperm.xlu0 %3852, %v2456
        %v3854 = vpop.permute.xlu0 %3853
        %3856 = vset.pattern.permute.xlu0 3
        %3857 = vperm.xlu0 %3856, %v2462
        %v3858 = vpop.permute.xlu0 %3857
        %3860 = vset.pattern.permute.xlu0 3
        %3861 = vperm.xlu0 %3860, %v2468
        %v3862 = vpop.permute.xlu0 %3861
        %3864 = vset.pattern.permute.xlu0 3
        %3865 = vperm.xlu0 %3864, %v2474
        %v3866 = vpop.permute.xlu0 %3865
        %3868 = vset.pattern.permute.xlu0 3
        %3869 = vperm.xlu0 %3868, %v2480
        %v3870 = vpop.permute.xlu0 %3869
        %v3872 = vmul.f32 %v3810, %v2390
        %v3873 = vmul.f32 %v3814, %v2396
        %v3874 = vmul.f32 %v3818, %v2402
        %v3875 = vmul.f32 %v3822, %v2408
        %v3876 = vmul.f32 %v3826, %v2414
        %v3877 = vmul.f32 %v3830, %v2420
        %v3878 = vmul.f32 %v3834, %v2426
        %v3879 = vmul.f32 %v3838, %v2432
        %v3880 = vmul.f32 %v3842, %v2438
        %v3881 = vmul.f32 %v3846, %v2444
        %v3882 = vmul.f32 %v3850, %v2450
        %v3883 = vmul.f32 %v3854, %v2456
        %v3884 = vmul.f32 %v3858, %v2462
        %v3885 = vmul.f32 %v3862, %v2468
        %v3886 = vmul.f32 %v3866, %v2474
        %v3887 = vmul.f32 %v3870, %v2480
        %3888 = vset.pattern.permute.xlu0 3
        %3889 = vperm.xlu0 %3888, %v2566
        %v3890 = vpop.permute.xlu0 %3889
        %3892 = vset.pattern.permute.xlu0 3
        %3893 = vperm.xlu0 %3892, %v2572
        %v3894 = vpop.permute.xlu0 %3893
        %3896 = vset.pattern.permute.xlu0 3
        %3897 = vperm.xlu0 %3896, %v2578
        %v3898 = vpop.permute.xlu0 %3897
        %3900 = vset.pattern.permute.xlu0 3
        %3901 = vperm.xlu0 %3900, %v2584
        %v3902 = vpop.permute.xlu0 %3901
        %3904 = vset.pattern.permute.xlu0 3
        %3905 = vperm.xlu0 %3904, %v2590
        %v3906 = vpop.permute.xlu0 %3905
        %3908 = vset.pattern.permute.xlu0 3
        %3909 = vperm.xlu0 %3908, %v2596
        %v3910 = vpop.permute.xlu0 %3909
        %3912 = vset.pattern.permute.xlu0 3
        %3913 = vperm.xlu0 %3912, %v2602
        %v3914 = vpop.permute.xlu0 %3913
        %3916 = vset.pattern.permute.xlu0 3
        %3917 = vperm.xlu0 %3916, %v2608
        %v3918 = vpop.permute.xlu0 %3917
        %3920 = vset.pattern.permute.xlu0 3
        %3921 = vperm.xlu0 %3920, %v2614
        %v3922 = vpop.permute.xlu0 %3921
        %3924 = vset.pattern.permute.xlu0 3
        %3925 = vperm.xlu0 %3924, %v2620
        %v3926 = vpop.permute.xlu0 %3925
        %3928 = vset.pattern.permute.xlu0 3
        %3929 = vperm.xlu0 %3928, %v2626
        %v3930 = vpop.permute.xlu0 %3929
        %3932 = vset.pattern.permute.xlu0 3
        %3933 = vperm.xlu0 %3932, %v2632
        %v3934 = vpop.permute.xlu0 %3933
        %3936 = vset.pattern.permute.xlu0 3
        %3937 = vperm.xlu0 %3936, %v2638
        %v3938 = vpop.permute.xlu0 %3937
        %3940 = vset.pattern.permute.xlu0 3
        %3941 = vperm.xlu0 %3940, %v2644
        %v3942 = vpop.permute.xlu0 %3941
        %3944 = vset.pattern.permute.xlu0 3
        %3945 = vperm.xlu0 %3944, %v2650
        %v3946 = vpop.permute.xlu0 %3945
        %3948 = vset.pattern.permute.xlu0 3
        %3949 = vperm.xlu0 %3948, %v2656
        %v3950 = vpop.permute.xlu0 %3949
        %v3952 = vmul.f32 %v3890, %v2566
        %v3953 = vmul.f32 %v3894, %v2572
        %v3954 = vmul.f32 %v3898, %v2578
        %v3955 = vmul.f32 %v3902, %v2584
        %v3956 = vmul.f32 %v3906, %v2590
        %v3957 = vmul.f32 %v3910, %v2596
        %v3958 = vmul.f32 %v3914, %v2602
        %v3959 = vmul.f32 %v3918, %v2608
        %v3960 = vmul.f32 %v3922, %v2614
        %v3961 = vmul.f32 %v3926, %v2620
        %v3962 = vmul.f32 %v3930, %v2626
        %v3963 = vmul.f32 %v3934, %v2632
        %v3964 = vmul.f32 %v3938, %v2638
        %v3965 = vmul.f32 %v3942, %v2644
        %v3966 = vmul.f32 %v3946, %v2650
        %v3967 = vmul.f32 %v3950, %v2656
        %v3968 = vadd.f32 %v3872, %v3952
        %v3969 = vadd.f32 %v3873, %v3953
        %v3970 = vadd.f32 %v3874, %v3954
        %v3971 = vadd.f32 %v3875, %v3955
        %v3972 = vadd.f32 %v3876, %v3956
        %v3973 = vadd.f32 %v3877, %v3957
        %v3974 = vadd.f32 %v3878, %v3958
        %v3975 = vadd.f32 %v3879, %v3959
        %v3976 = vadd.f32 %v3880, %v3960
        %v3977 = vadd.f32 %v3881, %v3961
        %v3978 = vadd.f32 %v3882, %v3962
        %v3979 = vadd.f32 %v3883, %v3963
        %v3980 = vadd.f32 %v3884, %v3964
        %v3981 = vadd.f32 %v3885, %v3965
        %v3982 = vadd.f32 %v3886, %v3966
        %v3983 = vadd.f32 %v3887, %v3967
        %3984 = vset.pattern.permute.xlu0 3
        %3985 = vperm.xlu0 %3984, %v2742
        %v3986 = vpop.permute.xlu0 %3985
        %3988 = vset.pattern.permute.xlu0 3
        %3989 = vperm.xlu0 %3988, %v2748
        %v3990 = vpop.permute.xlu0 %3989
        %3992 = vset.pattern.permute.xlu0 3
        %3993 = vperm.xlu0 %3992, %v2754
        %v3994 = vpop.permute.xlu0 %3993
        %3996 = vset.pattern.permute.xlu0 3
        %3997 = vperm.xlu0 %3996, %v2760
        %v3998 = vpop.permute.xlu0 %3997
        %4000 = vset.pattern.permute.xlu0 3
        %4001 = vperm.xlu0 %4000, %v2766
        %v4002 = vpop.permute.xlu0 %4001
        %4004 = vset.pattern.permute.xlu0 3
        %4005 = vperm.xlu0 %4004, %v2772
        %v4006 = vpop.permute.xlu0 %4005
        %4008 = vset.pattern.permute.xlu0 3
        %4009 = vperm.xlu0 %4008, %v2778
        %v4010 = vpop.permute.xlu0 %4009
        %4012 = vset.pattern.permute.xlu0 3
        %4013 = vperm.xlu0 %4012, %v2784
        %v4014 = vpop.permute.xlu0 %4013
        %4016 = vset.pattern.permute.xlu0 3
        %4017 = vperm.xlu0 %4016, %v2790
        %v4018 = vpop.permute.xlu0 %4017
        %4020 = vset.pattern.permute.xlu0 3
        %4021 = vperm.xlu0 %4020, %v2796
        %v4022 = vpop.permute.xlu0 %4021
        %4024 = vset.pattern.permute.xlu0 3
        %4025 = vperm.xlu0 %4024, %v2802
        %v4026 = vpop.permute.xlu0 %4025
        %4028 = vset.pattern.permute.xlu0 3
        %4029 = vperm.xlu0 %4028, %v2808
        %v4030 = vpop.permute.xlu0 %4029
        %4032 = vset.pattern.permute.xlu0 3
        %4033 = vperm.xlu0 %4032, %v2814
        %v4034 = vpop.permute.xlu0 %4033
        %4036 = vset.pattern.permute.xlu0 3
        %4037 = vperm.xlu0 %4036, %v2820
        %v4038 = vpop.permute.xlu0 %4037
        %4040 = vset.pattern.permute.xlu0 3
        %4041 = vperm.xlu0 %4040, %v2826
        %v4042 = vpop.permute.xlu0 %4041
        %4044 = vset.pattern.permute.xlu0 3
        %4045 = vperm.xlu0 %4044, %v2832
        %v4046 = vpop.permute.xlu0 %4045
        %v4048 = vmul.f32 %v3986, %v2742
        %v4049 = vmul.f32 %v3990, %v2748
        %v4050 = vmul.f32 %v3994, %v2754
        %v4051 = vmul.f32 %v3998, %v2760
        %v4052 = vmul.f32 %v4002, %v2766
        %v4053 = vmul.f32 %v4006, %v2772
        %v4054 = vmul.f32 %v4010, %v2778
        %v4055 = vmul.f32 %v4014, %v2784
        %v4056 = vmul.f32 %v4018, %v2790
        %v4057 = vmul.f32 %v4022, %v2796
        %v4058 = vmul.f32 %v4026, %v2802
        %v4059 = vmul.f32 %v4030, %v2808
        %v4060 = vmul.f32 %v4034, %v2814
        %v4061 = vmul.f32 %v4038, %v2820
        %v4062 = vmul.f32 %v4042, %v2826
        %v4063 = vmul.f32 %v4046, %v2832
        %v4064 = vadd.f32 %v3968, %v4048
        %v4065 = vadd.f32 %v3969, %v4049
        %v4066 = vadd.f32 %v3970, %v4050
        %v4067 = vadd.f32 %v3971, %v4051
        %v4068 = vadd.f32 %v3972, %v4052
        %v4069 = vadd.f32 %v3973, %v4053
        %v4070 = vadd.f32 %v3974, %v4054
        %v4071 = vadd.f32 %v3975, %v4055
        %v4072 = vadd.f32 %v3976, %v4056
        %v4073 = vadd.f32 %v3977, %v4057
        %v4074 = vadd.f32 %v3978, %v4058
        %v4075 = vadd.f32 %v3979, %v4059
        %v4076 = vadd.f32 %v3980, %v4060
        %v4077 = vadd.f32 %v3981, %v4061
        %v4078 = vadd.f32 %v3982, %v4062
        %v4079 = vadd.f32 %v3983, %v4063
        %v4096 = vsel %vm3169, %v4065, %v4064
        %v4097 = vsel %vm3171, %v4066, %v4096
        %v4098 = vsel %vm3173, %v4067, %v4097
        %v4099 = vsel %vm3175, %v4068, %v4098
        %v4100 = vsel %vm3177, %v4069, %v4099
        %v4101 = vsel %vm3179, %v4070, %v4100
        %v4102 = vsel %vm3181, %v4071, %v4101
        %v4103 = vsel %vm3169, %v4073, %v4072
        %v4104 = vsel %vm3171, %v4074, %v4103
        %v4105 = vsel %vm3173, %v4075, %v4104
        %v4106 = vsel %vm3175, %v4076, %v4105
        %v4107 = vsel %vm3177, %v4077, %v4106
        %v4108 = vsel %vm3179, %v4078, %v4107
        %v4109 = vsel %vm3181, %v4079, %v4108
        %s4112 = scalar_lea.vmem %s218, 48 [#allocation2]
        %4113 = vst [vmem:[%s4112] sm:$0xff] %v4102
        %4114 = vst [vmem:[%s4112 + $0x8] sm:$0xff] %v4109
        %s4115 = sand.u32 %s137, 1
        %s4116 = scalar_lea.sflag [#allocation3], %s4115
        %s4117 = sand.u32 %s137, 1
        %s4118 = smul.addr %s4117, 64
        %s4119 = scalar_lea.vmem [#allocation2], %s4118
        // Predicated region
        $region41: #{tpu_custom_call.1} parent=39 // pred_check
          %p4120 = pneg %p147
        $region42: #{tpu_custom_call.1} parent=39 // pred_check_branch
          %4122 = sbr.rel (%p4120) target = $region44
        $region43: #{tpu_custom_call.1} parent=39 // pred_region
          #allocation5 [shape = 'u32[6]{0}', space=smem, size = 0x18, scoped, tag = 'DMA stride descriptor']
          %s4123 = smul.u32 2, %s19
          %s4125 = ssub.s32 1024, 1024
          %4126 = vsyncadd %s4116, %s4125
          %s4127 = smul.addr %s4123, 128
          %s4128 = scalar_lea.hbm %s5, %s4127
          %s4130 = sshll.u32 1, 14
          %s4131 = sxor.u32 4294967295, %s4130
          %s4134 = sshll.u32 7, 18
          %s4135 = sxor.u32 4294967295, %s4134
          %s4136 = sand.u32 0, %s4135
          %s4138 = sor.u32 %s4136, 0
          %s4139 = sshll.u32 %s4119, 4
          %s4140 = int_to_ptr.vmem [resolvable:$true] %s4139
          %4146 = sst [smem:[#allocation5]] 256
          %s4147 = scalar_lea.smem [#allocation5], 1
          %4148 = sst [smem:[%s4147]] 1024
          %s4149 = scalar_lea.smem [#allocation5], 2
          %4150 = sst [smem:[%s4149]] 2
          %s4151 = scalar_lea.smem [#allocation5], 3
          %4152 = sst [smem:[%s4151]] 128
          %s4153 = scalar_lea.smem [#allocation5], 4
          %4154 = sst [smem:[%s4153]] 128
          %s4155 = scalar_lea.smem [#allocation5], 5
          %4156 = sst [smem:[%s4155]] 8
          %4158 = dma.general %s4140, 1024, %s4128, %s4116, 131072, [#allocation5], %s4138, 0
        $region44: #{tpu_custom_call.1} parent=39 // pred_fallthru
          _
      $region40: #{tpu_custom_call.1} parent=5 // pred_fallthru
        _
      %p4159 = scmp.le.s32.totalorder 2, %s14
      // Predicated region
      $region45: #{tpu_custom_call.1} parent=5 // pred_check
        %p4160 = pneg %p4159
      $region46: #{tpu_custom_call.1} parent=5 // pred_check_branch
        %4162 = sbr.rel (%p4160) target = $region48
      $region47: #{tpu_custom_call.1} parent=5 // pred_region
        %s4163 = ssub.s32 %s14, 2
        // Predicated region
        $region49: #{tpu_custom_call.1} parent=47 // pred_check
          %p4164 = pneg %p153
        $region50: #{tpu_custom_call.1} parent=47 // pred_check_branch
          %4166 = sbr.rel (%p4164) target = $region52
        $region51: #{tpu_custom_call.1} parent=47 // pred_region
          %s4167 = sand.u32 %s138, 1
          %s4168 = scalar_lea.sflag [#allocation3], %s4167
          %s4169 = sand.u32 %s138, 1
          %s4170 = smul.addr %s4169, 64
          %s4171 = scalar_lea.vmem [#allocation2], %s4170
          %4172 = dma.done %s4168, 1024
        $region52: #{tpu_custom_call.1} parent=47 // pred_fallthru
          _
      $region48: #{tpu_custom_call.1} parent=5 // pred_fallthru
        _
    $region6: #{tpu_custom_call.1} parent=1 // loop_footer
      %s18 = sadd.s32 1, %s14
    $region7: #{tpu_custom_call.1} parent=1 // loop_footer_branch
      %13 = sbr.rel target = $region3
    $region8: #{tpu_custom_call.1} parent=1 // loop_exit
      _
    %4173 = vsyncpa [#allocation3], 1
    %s4174 = scalar_lea.sflag [#allocation3], 1
    %4175 = vsyncpa %s4174, 1

</llo_original>
